<compile_context>
chip_gen: v6e
topology: v6e:2x2x1
jax: 0.10.0
libtpu: 0.0.40
codegen_flags: <defaults>
</compile_context>

<pallas_src>
import functools
import math

import jax
import jax.numpy as jnp
from jax import lax
from jax.experimental import pallas as pl
from jax.experimental.pallas import tpu as pltpu


_ACTS = {
    "identity": lambda x: x,
    "relu": lambda x: jnp.maximum(x, 0.0),
    "silu": lambda x: x * jax.nn.sigmoid(x),
}


def _round_up(x, m):
    return ((x + m - 1) // m) * m


# ------------------------------------------------------------------
# Fused conv + folded-BN + activation kernel
# ------------------------------------------------------------------
def _conv_bn_act_kernel(x_ref, w_ref, s_ref, b_ref, o_ref, *,
                        kh, kw, stride, oh, ow, hph, act):
    """One grid step computes the full (oh*ow, tn) output tile of one image.

    x_ref : (1, stride*stride*hph, Wph, Cin) bf16 -- phase-decomposed padded
            image, resident across cout blocks.
    w_ref : (kh*kw, Cin, tn)                 bf16 -- all taps for this cout tile
    s_ref : (1, tn)                          f32  -- folded BN scale
    b_ref : (1, tn)                          f32  -- folded BN bias
    o_ref : (1, oh*ow, tn)                   out dtype
    """
    act_fn = _ACTS[act]
    cin = x_ref.shape[-1]
    tn = o_ref.shape[-1]

    acc = jnp.zeros((oh * ow, tn), jnp.float32)
    # Tap reduction stays inside the body: every tap is a STATIC unit-stride
    # window of the VMEM-resident phase slab -> MXU matmul, f32 accumulate.
    for ki in range(kh):
        for kj in range(kw):
            pidx = (ki % stride) * stride + (kj % stride)
            r0 = pidx * hph + ki // stride
            c0 = kj // stride
            patch = x_ref[0, r0:r0 + oh, c0:c0 + ow, :]
            acc = acc + jnp.dot(patch.reshape(oh * ow, cin),
                                w_ref[ki * kw + kj],
                                preferred_element_type=jnp.float32)

    y = acc * s_ref[...] + b_ref[...]          # f32 folded-BN epilogue
    o_ref[0] = act_fn(y).astype(o_ref.dtype)


def conv_bn_act(x_nhwc, w_hwio, scale, bias, *, stride=1, act="relu",
                out_dtype=jnp.float32):
    """act(conv2d(x, w, stride, pad=k//2) * scale + bias), scale/bias per Cout."""
    N, H, W, Cin = x_nhwc.shape
    kh, kw, _, Cout = w_hwio.shape
    pad_h, pad_w = kh // 2, kw // 2
    oh = (H + 2 * pad_h - kh) // stride + 1
    ow = (W + 2 * pad_w - kw) // stride + 1
    s = stride
    # Each stride-phase slab is (Hph, Wph); taps read windows entirely inside it.
    Hph = oh + (kh - 1) // s
    Wph = ow + (kw - 1) // s

    tn = 128 if Cout <= 128 else 256
    Cp = _round_up(Cout, tn)

    # bf16 MXU operands; BN/activation epilogue stays f32 (v5e has no bf16 VPU).
    xp = jnp.pad(x_nhwc.astype(jnp.bfloat16),
                 ((0, 0), (pad_h, pad_h), (pad_w, pad_w), (0, 0)))

    # Phase decomposition of the padded image (partition -> ~1x HBM traffic).
    phases = []
    for p in range(s):
        for q in range(s):
            phi = xp[:, p::s, q::s, :]
            phi = jnp.pad(
                phi,
                ((0, 0),
                 (0, max(0, Hph - phi.shape[1])),
                 (0, max(0, Wph - phi.shape[2])),
                 (0, 0)))
            phases.append(phi[:, :Hph, :Wph, :])
    xph = jnp.concatenate(phases, axis=1)      # (N, s*s*Hph, Wph, Cin)

    wp = jnp.pad(w_hwio.astype(jnp.bfloat16),
                 ((0, 0), (0, 0), (0, 0), (0, Cp - Cout)))
    wp = wp.reshape(kh * kw, Cin, Cp)
    sp = jnp.pad(scale.astype(jnp.float32), (0, Cp - Cout)).reshape(1, Cp)
    bp = jnp.pad(bias.astype(jnp.float32), (0, Cp - Cout)).reshape(1, Cp)

    grid = (N, Cp // tn)
    kernel = functools.partial(_conv_bn_act_kernel, kh=kh, kw=kw, stride=s,
                               oh=oh, ow=ow, hph=Hph, act=act)

    # TODO(synk): for very large images / Cin, add a spatial-row grid axis with
    # manual windowed DMA (P4) instead of keeping the whole phase slab resident.
    out = pl.pallas_call(
        kernel,
        out_shape=jax.ShapeDtypeStruct((N, oh * ow, Cp), out_dtype),
        grid=grid,
        in_specs=[
            # full phase slab of one batch element; block index is constant
            # across cb, so it is DMA'd once and stays resident in VMEM.
            pl.BlockSpec((1, s * s * Hph, Wph, Cin), lambda n, cb: (n, 0, 0, 0)),
            pl.BlockSpec((kh * kw, Cin, tn), lambda n, cb: (0, 0, cb)),
            pl.BlockSpec((1, tn), lambda n, cb: (0, cb)),
            pl.BlockSpec((1, tn), lambda n, cb: (0, cb)),
        ],
        out_specs=pl.BlockSpec((1, oh * ow, tn), lambda n, cb: (n, 0, cb)),
        compiler_params=pltpu.CompilerParams(
            dimension_semantics=("parallel", "parallel"),
            vmem_limit_bytes=48 * 1024 * 1024,
        ),
    )(xph, wp, sp, bp)

    return out[:, :, :Cout].reshape(N, oh, ow, Cout)


# ------------------------------------------------------------------
# ConvBnAct module wrapper (PyTorch-layout params, NCHW in/out)
# ------------------------------------------------------------------
def convbnact_forward(x_nchw, params, *, stride=1, act="relu"):
    w = jnp.transpose(params["conv_w"], (2, 3, 1, 0))          # OIHW -> HWIO
    inv = params["bn_gamma"] * lax.rsqrt(params["bn_var"] + params["bn_eps"])
    scale = inv
    bias = params["bn_beta"] - params["bn_mean"] * inv
    x = jnp.transpose(x_nchw, (0, 2, 3, 1)).astype(jnp.float32)  # NCHW -> NHWC
    y = conv_bn_act(x, w, scale, bias, stride=stride, act=act)
    return jnp.transpose(y, (0, 3, 1, 2))                        # -> NCHW


def _ref_conv_bn_act(x_nchw, params, *, stride=1):
    """Pure-JAX f32 reference (eval-mode BN + ReLU)."""
    w = params["conv_w"].astype(jnp.float32)
    k = w.shape[2]
    y = lax.conv_general_dilated(
        x_nchw.astype(jnp.float32), w,
        window_strides=(stride, stride),
        padding=[(k // 2, k // 2), (k // 2, k // 2)],
        dimension_numbers=("NCHW", "OIHW", "NCHW"))
    inv = params["bn_gamma"] * lax.rsqrt(params["bn_var"] + params["bn_eps"])
    y = (y - params["bn_mean"][None, :, None, None]) * inv[None, :, None, None] \
        + params["bn_beta"][None, :, None, None]
    return jnp.maximum(y, 0.0)


def init_convbnact(key, in_chs, out_chs, kernel_size):
    k1, k2, k3, k4, k5 = jax.random.split(key, 5)
    std = 1.0 / math.sqrt(kernel_size * kernel_size * in_chs)
    return {
        "conv_w": jax.random.normal(
            k1, (out_chs, in_chs, kernel_size, kernel_size), jnp.float32) * std,
        "bn_gamma": 1.0 + 0.1 * jax.random.normal(k2, (out_chs,), jnp.float32),
        "bn_beta": 0.1 * jax.random.normal(k3, (out_chs,), jnp.float32),
        "bn_mean": 0.1 * jax.random.normal(k4, (out_chs,), jnp.float32),
        "bn_var": jnp.abs(1.0 + 0.1 * jax.random.normal(k5, (out_chs,), jnp.float32)),
        "bn_eps": 1e-5,
    }


if __name__ == "__main__":
    key = jax.random.PRNGKey(0)
    kx, kp1, kp2, kp3 = jax.random.split(key, 4)

    x = jax.random.normal(kx, (2, 16, 16, 16), jnp.float32)   # NCHW

    configs = [
        # (in_chs, out_chs, kernel_size, stride)
        (16, 32, 3, 1),
        (16, 32, 3, 2),
        (16, 64, 1, 1),
    ]
    pkeys = [kp1, kp2, kp3]

    for (cin, cout, k, s), pk in zip(configs, pkeys):
        params = init_convbnact(pk, cin, cout, k)
        fwd = jax.jit(functools.partial(convbnact_forward, stride=s))
        out = jax.block_until_ready(fwd(x, params))
        ref = _ref_conv_bn_act(x, params, stride=s)
        assert out.shape == ref.shape, (out.shape, ref.shape)
        assert bool(jnp.all(jnp.isfinite(out)))
        err = float(jnp.max(jnp.abs(out - ref)))
        assert err < 5e-2, f"max abs err {err} for cfg {(cin, cout, k, s)}"

    print("KERNEL_OK")
</pallas_src>

<mosaic_0001>
module attributes {stable_mosaic.version = 11 : i64} {
  func.func @_conv_bn_act_kernel(%arg0: i32, %arg1: i32, %arg2: memref<1x18x18x16xbf16, #tpu.memory_space<vmem>>, %arg3: memref<9x16x128xbf16, #tpu.memory_space<vmem>>, %arg4: memref<1x128xf32, #tpu.memory_space<vmem>>, %arg5: memref<1x128xf32, #tpu.memory_space<vmem>>, %arg6: memref<1x256x128xf32, #tpu.memory_space<vmem>>) attributes {dimension_semantics = [#tpu.dimension_semantics<parallel>, #tpu.dimension_semantics<parallel>], iteration_bounds = array<i64: 2, 1>, scalar_prefetch = 0 : i64, scratch_operands = 0 : i64, tpu.core_type = #tpu.core_type<tc>, window_params = [{transform_indices = @transform_0, window_bounds = array<i64: 1, 18, 18, 16>}, {transform_indices = @transform_1, window_bounds = array<i64: 9, 16, 128>}, {transform_indices = @transform_2, window_bounds = array<i64: 1, 128>}, {transform_indices = @transform_3, window_bounds = array<i64: 1, 128>}, {transform_indices = @transform_4, window_bounds = array<i64: 1, 256, 128>}]} {
    %cst = arith.constant 0.000000e+00 : f32
    %0 = vector.broadcast %cst : f32 to vector<256x128xf32>
    %c0 = arith.constant 0 : index
    %c0_0 = arith.constant 0 : index
    %c0_1 = arith.constant 0 : index
    %c0_2 = arith.constant 0 : index
    %1 = vector.load %arg2[%c0, %c0_0, %c0_1, %c0_2] : memref<1x18x18x16xbf16, #tpu.memory_space<vmem>>, vector<1x16x16x16xbf16>
    %2 = vector.shape_cast %1 : vector<1x16x16x16xbf16> to vector<16x16x16xbf16>
    %3 = vector.shape_cast %2 : vector<16x16x16xbf16> to vector<256x16xbf16>
    %c0_3 = arith.constant 0 : index
    %c0_4 = arith.constant 0 : index
    %c0_5 = arith.constant 0 : index
    %4 = vector.load %arg3[%c0_3, %c0_4, %c0_5] : memref<9x16x128xbf16, #tpu.memory_space<vmem>>, vector<1x16x128xbf16>
    %5 = vector.shape_cast %4 : vector<1x16x128xbf16> to vector<16x128xbf16>
    %cst_6 = arith.constant dense<0.000000e+00> : vector<256x128xf32>
    %6 = tpu.matmul %3, %5, %cst_6 {dimension_numbers = #tpu.dot_dimension_numbers<[1], [0], [0], [1], [0, 0, 1, 1], [], []>} : vector<256x16xbf16>, vector<16x128xbf16>, vector<256x128xf32> -> vector<256x128xf32>
    %7 = arith.addf %0, %6 : vector<256x128xf32>
    %c0_7 = arith.constant 0 : index
    %c0_8 = arith.constant 0 : index
    %c1 = arith.constant 1 : index
    %c0_9 = arith.constant 0 : index
    %8 = vector.load %arg2[%c0_7, %c0_8, %c1, %c0_9] : memref<1x18x18x16xbf16, #tpu.memory_space<vmem>>, vector<1x16x16x16xbf16>
    %9 = vector.shape_cast %8 : vector<1x16x16x16xbf16> to vector<16x16x16xbf16>
    %10 = vector.shape_cast %9 : vector<16x16x16xbf16> to vector<256x16xbf16>
    %c1_10 = arith.constant 1 : index
    %c0_11 = arith.constant 0 : index
    %c0_12 = arith.constant 0 : index
    %11 = vector.load %arg3[%c1_10, %c0_11, %c0_12] : memref<9x16x128xbf16, #tpu.memory_space<vmem>>, vector<1x16x128xbf16>
    %12 = vector.shape_cast %11 : vector<1x16x128xbf16> to vector<16x128xbf16>
    %cst_13 = arith.constant dense<0.000000e+00> : vector<256x128xf32>
    %13 = tpu.matmul %10, %12, %cst_13 {dimension_numbers = #tpu.dot_dimension_numbers<[1], [0], [0], [1], [0, 0, 1, 1], [], []>} : vector<256x16xbf16>, vector<16x128xbf16>, vector<256x128xf32> -> vector<256x128xf32>
    %14 = arith.addf %7, %13 : vector<256x128xf32>
    %c0_14 = arith.constant 0 : index
    %c0_15 = arith.constant 0 : index
    %c2 = arith.constant 2 : index
    %c0_16 = arith.constant 0 : index
    %15 = vector.load %arg2[%c0_14, %c0_15, %c2, %c0_16] : memref<1x18x18x16xbf16, #tpu.memory_space<vmem>>, vector<1x16x16x16xbf16>
    %16 = vector.shape_cast %15 : vector<1x16x16x16xbf16> to vector<16x16x16xbf16>
    %17 = vector.shape_cast %16 : vector<16x16x16xbf16> to vector<256x16xbf16>
    %c2_17 = arith.constant 2 : index
    %c0_18 = arith.constant 0 : index
    %c0_19 = arith.constant 0 : index
    %18 = vector.load %arg3[%c2_17, %c0_18, %c0_19] : memref<9x16x128xbf16, #tpu.memory_space<vmem>>, vector<1x16x128xbf16>
    %19 = vector.shape_cast %18 : vector<1x16x128xbf16> to vector<16x128xbf16>
    %cst_20 = arith.constant dense<0.000000e+00> : vector<256x128xf32>
    %20 = tpu.matmul %17, %19, %cst_20 {dimension_numbers = #tpu.dot_dimension_numbers<[1], [0], [0], [1], [0, 0, 1, 1], [], []>} : vector<256x16xbf16>, vector<16x128xbf16>, vector<256x128xf32> -> vector<256x128xf32>
    %21 = arith.addf %14, %20 : vector<256x128xf32>
    %c0_21 = arith.constant 0 : index
    %c1_22 = arith.constant 1 : index
    %c0_23 = arith.constant 0 : index
    %c0_24 = arith.constant 0 : index
    %22 = vector.load %arg2[%c0_21, %c1_22, %c0_23, %c0_24] : memref<1x18x18x16xbf16, #tpu.memory_space<vmem>>, vector<1x16x16x16xbf16>
    %23 = vector.shape_cast %22 : vector<1x16x16x16xbf16> to vector<16x16x16xbf16>
    %24 = vector.shape_cast %23 : vector<16x16x16xbf16> to vector<256x16xbf16>
    %c3 = arith.constant 3 : index
    %c0_25 = arith.constant 0 : index
    %c0_26 = arith.constant 0 : index
    %25 = vector.load %arg3[%c3, %c0_25, %c0_26] : memref<9x16x128xbf16, #tpu.memory_space<vmem>>, vector<1x16x128xbf16>
    %26 = vector.shape_cast %25 : vector<1x16x128xbf16> to vector<16x128xbf16>
    %cst_27 = arith.constant dense<0.000000e+00> : vector<256x128xf32>
    %27 = tpu.matmul %24, %26, %cst_27 {dimension_numbers = #tpu.dot_dimension_numbers<[1], [0], [0], [1], [0, 0, 1, 1], [], []>} : vector<256x16xbf16>, vector<16x128xbf16>, vector<256x128xf32> -> vector<256x128xf32>
    %28 = arith.addf %21, %27 : vector<256x128xf32>
    %c0_28 = arith.constant 0 : index
    %c1_29 = arith.constant 1 : index
    %c1_30 = arith.constant 1 : index
    %c0_31 = arith.constant 0 : index
    %29 = vector.load %arg2[%c0_28, %c1_29, %c1_30, %c0_31] : memref<1x18x18x16xbf16, #tpu.memory_space<vmem>>, vector<1x16x16x16xbf16>
    %30 = vector.shape_cast %29 : vector<1x16x16x16xbf16> to vector<16x16x16xbf16>
    %31 = vector.shape_cast %30 : vector<16x16x16xbf16> to vector<256x16xbf16>
    %c4 = arith.constant 4 : index
    %c0_32 = arith.constant 0 : index
    %c0_33 = arith.constant 0 : index
    %32 = vector.load %arg3[%c4, %c0_32, %c0_33] : memref<9x16x128xbf16, #tpu.memory_space<vmem>>, vector<1x16x128xbf16>
    %33 = vector.shape_cast %32 : vector<1x16x128xbf16> to vector<16x128xbf16>
    %cst_34 = arith.constant dense<0.000000e+00> : vector<256x128xf32>
    %34 = tpu.matmul %31, %33, %cst_34 {dimension_numbers = #tpu.dot_dimension_numbers<[1], [0], [0], [1], [0, 0, 1, 1], [], []>} : vector<256x16xbf16>, vector<16x128xbf16>, vector<256x128xf32> -> vector<256x128xf32>
    %35 = arith.addf %28, %34 : vector<256x128xf32>
    %c0_35 = arith.constant 0 : index
    %c1_36 = arith.constant 1 : index
    %c2_37 = arith.constant 2 : index
    %c0_38 = arith.constant 0 : index
    %36 = vector.load %arg2[%c0_35, %c1_36, %c2_37, %c0_38] : memref<1x18x18x16xbf16, #tpu.memory_space<vmem>>, vector<1x16x16x16xbf16>
    %37 = vector.shape_cast %36 : vector<1x16x16x16xbf16> to vector<16x16x16xbf16>
    %38 = vector.shape_cast %37 : vector<16x16x16xbf16> to vector<256x16xbf16>
    %c5 = arith.constant 5 : index
    %c0_39 = arith.constant 0 : index
    %c0_40 = arith.constant 0 : index
    %39 = vector.load %arg3[%c5, %c0_39, %c0_40] : memref<9x16x128xbf16, #tpu.memory_space<vmem>>, vector<1x16x128xbf16>
    %40 = vector.shape_cast %39 : vector<1x16x128xbf16> to vector<16x128xbf16>
    %cst_41 = arith.constant dense<0.000000e+00> : vector<256x128xf32>
    %41 = tpu.matmul %38, %40, %cst_41 {dimension_numbers = #tpu.dot_dimension_numbers<[1], [0], [0], [1], [0, 0, 1, 1], [], []>} : vector<256x16xbf16>, vector<16x128xbf16>, vector<256x128xf32> -> vector<256x128xf32>
    %42 = arith.addf %35, %41 : vector<256x128xf32>
    %c0_42 = arith.constant 0 : index
    %c2_43 = arith.constant 2 : index
    %c0_44 = arith.constant 0 : index
    %c0_45 = arith.constant 0 : index
    %43 = vector.load %arg2[%c0_42, %c2_43, %c0_44, %c0_45] : memref<1x18x18x16xbf16, #tpu.memory_space<vmem>>, vector<1x16x16x16xbf16>
    %44 = vector.shape_cast %43 : vector<1x16x16x16xbf16> to vector<16x16x16xbf16>
    %45 = vector.shape_cast %44 : vector<16x16x16xbf16> to vector<256x16xbf16>
    %c6 = arith.constant 6 : index
    %c0_46 = arith.constant 0 : index
    %c0_47 = arith.constant 0 : index
    %46 = vector.load %arg3[%c6, %c0_46, %c0_47] : memref<9x16x128xbf16, #tpu.memory_space<vmem>>, vector<1x16x128xbf16>
    %47 = vector.shape_cast %46 : vector<1x16x128xbf16> to vector<16x128xbf16>
    %cst_48 = arith.constant dense<0.000000e+00> : vector<256x128xf32>
    %48 = tpu.matmul %45, %47, %cst_48 {dimension_numbers = #tpu.dot_dimension_numbers<[1], [0], [0], [1], [0, 0, 1, 1], [], []>} : vector<256x16xbf16>, vector<16x128xbf16>, vector<256x128xf32> -> vector<256x128xf32>
    %49 = arith.addf %42, %48 : vector<256x128xf32>
    %c0_49 = arith.constant 0 : index
    %c2_50 = arith.constant 2 : index
    %c1_51 = arith.constant 1 : index
    %c0_52 = arith.constant 0 : index
    %50 = vector.load %arg2[%c0_49, %c2_50, %c1_51, %c0_52] : memref<1x18x18x16xbf16, #tpu.memory_space<vmem>>, vector<1x16x16x16xbf16>
    %51 = vector.shape_cast %50 : vector<1x16x16x16xbf16> to vector<16x16x16xbf16>
    %52 = vector.shape_cast %51 : vector<16x16x16xbf16> to vector<256x16xbf16>
    %c7 = arith.constant 7 : index
    %c0_53 = arith.constant 0 : index
    %c0_54 = arith.constant 0 : index
    %53 = vector.load %arg3[%c7, %c0_53, %c0_54] : memref<9x16x128xbf16, #tpu.memory_space<vmem>>, vector<1x16x128xbf16>
    %54 = vector.shape_cast %53 : vector<1x16x128xbf16> to vector<16x128xbf16>
    %cst_55 = arith.constant dense<0.000000e+00> : vector<256x128xf32>
    %55 = tpu.matmul %52, %54, %cst_55 {dimension_numbers = #tpu.dot_dimension_numbers<[1], [0], [0], [1], [0, 0, 1, 1], [], []>} : vector<256x16xbf16>, vector<16x128xbf16>, vector<256x128xf32> -> vector<256x128xf32>
    %56 = arith.addf %49, %55 : vector<256x128xf32>
    %c0_56 = arith.constant 0 : index
    %c2_57 = arith.constant 2 : index
    %c2_58 = arith.constant 2 : index
    %c0_59 = arith.constant 0 : index
    %57 = vector.load %arg2[%c0_56, %c2_57, %c2_58, %c0_59] : memref<1x18x18x16xbf16, #tpu.memory_space<vmem>>, vector<1x16x16x16xbf16>
    %58 = vector.shape_cast %57 : vector<1x16x16x16xbf16> to vector<16x16x16xbf16>
    %59 = vector.shape_cast %58 : vector<16x16x16xbf16> to vector<256x16xbf16>
    %c8 = arith.constant 8 : index
    %c0_60 = arith.constant 0 : index
    %c0_61 = arith.constant 0 : index
    %60 = vector.load %arg3[%c8, %c0_60, %c0_61] : memref<9x16x128xbf16, #tpu.memory_space<vmem>>, vector<1x16x128xbf16>
    %61 = vector.shape_cast %60 : vector<1x16x128xbf16> to vector<16x128xbf16>
    %cst_62 = arith.constant dense<0.000000e+00> : vector<256x128xf32>
    %62 = tpu.matmul %59, %61, %cst_62 {dimension_numbers = #tpu.dot_dimension_numbers<[1], [0], [0], [1], [0, 0, 1, 1], [], []>} : vector<256x16xbf16>, vector<16x128xbf16>, vector<256x128xf32> -> vector<256x128xf32>
    %63 = arith.addf %56, %62 : vector<256x128xf32>
    %c0_63 = arith.constant 0 : index
    %c0_64 = arith.constant 0 : index
    %64 = vector.load %arg4[%c0_63, %c0_64] : memref<1x128xf32, #tpu.memory_space<vmem>>, vector<1x128xf32>
    %65 = vector.broadcast %64 : vector<1x128xf32> to vector<256x128xf32>
    %66 = arith.mulf %63, %65 : vector<256x128xf32>
    %c0_65 = arith.constant 0 : index
    %c0_66 = arith.constant 0 : index
    %67 = vector.load %arg5[%c0_65, %c0_66] : memref<1x128xf32, #tpu.memory_space<vmem>>, vector<1x128xf32>
    %68 = vector.broadcast %67 : vector<1x128xf32> to vector<256x128xf32>
    %69 = arith.addf %66, %68 : vector<256x128xf32>
    %cst_67 = arith.constant 0.000000e+00 : f32
    %70 = vector.broadcast %cst_67 : f32 to vector<256x128xf32>
    %71 = arith.maximumf %69, %70 : vector<256x128xf32>
    %c0_68 = arith.constant 0 : index
    %c0_69 = arith.constant 0 : index
    %c0_70 = arith.constant 0 : index
    %72 = vector.load %arg6[%c0_68, %c0_69, %c0_70] : memref<1x256x128xf32, #tpu.memory_space<vmem>>, vector<1x256x128xf32>
    %73 = vector.shape_cast %72 : vector<1x256x128xf32> to vector<256x128xf32>
    %74 = vector.shape_cast %71 : vector<256x128xf32> to vector<1x256x128xf32>
    tpu.vector_store %arg6[%c0_68, %c0_69, %c0_70], %74 {strides = array<i32>} : memref<1x256x128xf32, #tpu.memory_space<vmem>>, vector<1x256x128xf32>,
    return
  }
  func.func @transform_0(%arg0: i32, %arg1: i32) -> (i32, i32, i32, i32) {
    %c0_i32 = arith.constant 0 : i32
    %c0_i32_0 = arith.constant 0 : i32
    %c0_i32_1 = arith.constant 0 : i32
    %c0_i32_2 = arith.constant 0 : i32
    return %arg0, %c0_i32, %c0_i32_0, %c0_i32_1 : i32, i32, i32, i32
  }
  func.func @transform_1(%arg0: i32, %arg1: i32) -> (i32, i32, i32) {
    %c0_i32 = arith.constant 0 : i32
    %c0_i32_0 = arith.constant 0 : i32
    %c0_i32_1 = arith.constant 0 : i32
    return %c0_i32, %c0_i32_0, %arg1 : i32, i32, i32
  }
  func.func @transform_2(%arg0: i32, %arg1: i32) -> (i32, i32) {
    %c0_i32 = arith.constant 0 : i32
    %c0_i32_0 = arith.constant 0 : i32
    return %c0_i32, %arg1 : i32, i32
  }
  func.func @transform_3(%arg0: i32, %arg1: i32) -> (i32, i32) {
    %c0_i32 = arith.constant 0 : i32
    %c0_i32_0 = arith.constant 0 : i32
    return %c0_i32, %arg1 : i32, i32
  }
  func.func @transform_4(%arg0: i32, %arg1: i32) -> (i32, i32, i32) {
    %c0_i32 = arith.constant 0 : i32
    %c0_i32_0 = arith.constant 0 : i32
    return %arg0, %c0_i32, %arg1 : i32, i32, i32
  }
}

</mosaic_0001>

<llo_original>
// kernel: convbnact_forward.1
$region0: #{convbnact_forward.1}
  #allocation0 [shape = 'u32[]', space=smem, size = 0x4, offset = 0x4, fixed_abs, tag = 'smem constant byte address 0x4 - core index']
  #allocation1 [shape = 'u32[144,128]{1,0:T(1,128)}', space=vmem, size = 0x12000, scoped, tag = 'internal scratch']
  %s0 = inlined_call_operand.vmem [shape: bf16[2,18,18,16], index: 0, kind: input, shape index: {}]
  %s1 = inlined_call_operand.vmem [shape: bf16[9,16,128], index: 1, kind: input, shape index: {}]
  %s2 = inlined_call_operand.vmem [shape: f32[1,128], index: 2, kind: input, shape index: {}]
  %s3 = inlined_call_operand.vmem [shape: f32[1,128], index: 3, kind: input, shape index: {}]
  %s4 = inlined_call_operand.hbm [shape: f32[2,256,128], index: 4, kind: output, shape index: {}]
  %s5 = sld [smem:[#allocation0]]
  $region49: #{convbnact_forward.1} parent=0
    _
  %s7 = ssub.s32 1, %s5
  %s8 = scalar_select 0, %s7, %s5
  $region1: #{convbnact_forward.1} parent=0
    #allocation2 [shape = 'u8[262144]{0}', space=vmem, size = 0x40000, scoped, tag = 'output window, operand 0']
    #allocation3 [shape = 's32[2]{0}', space=sflag, size = 0x8, scoped, tag = 'scoped memory for convbnact_forward.1']
    %9 = vsyncpa [#allocation3], 0
    %s10 = scalar_lea.sflag [#allocation3], 1
    %11 = vsyncpa %s10, 0
    loop: start=0, step=1, limit=4
    $region2: #{convbnact_forward.1} parent=1 // loop_pre_header
      _
    $region3: #{convbnact_forward.1} parent=1 // loop_header
      %s13 = sphi 0, %s17
      %p14 = scmp.ge.s32.totalorder %s13, 4
      %s20 = sphi 0, %s32
      %s21 = sphi 0, %s28
      %s22 = sphi 0, %s20
      %s23 = sphi 0, %s21
      %s24 = sphi 0, %s22
      %s25 = sphi 0, %s23
      %s35 = sphi 0, %s37
      %s38 = sphi 0, %s35
      %s39 = sphi 0, %s38
      %s55 = sphi 0, %s39
      %s61 = sphi 0, %s63
      %s64 = sphi 0, %s61
      %s65 = sphi 0, %s64
      %s81 = sphi 0, %s65
      %s87 = sphi 0, %s89
      %s90 = sphi 0, %s87
      %s91 = sphi 0, %s90
      %s107 = sphi 0, %s91
      %s113 = sphi 0, %s115
      %s116 = sphi 0, %s113
      %s117 = sphi 0, %s116
      %s133 = sphi 0, %s117
      %s141 = sphi 0, %s143
      %s144 = sphi 0, %s141
      %s145 = sphi 0, %s144
      %s161 = sphi 0, %s145
    $region4: #{convbnact_forward.1} parent=1 // loop_header_branch
      %16 = sbr.rel (%p14) target = $region8
    $region5: #{convbnact_forward.1} parent=1 // loop_body
      %s18 = ssub.s32 %s13, 1
      %s19 = ssub.s32 %s13, 2
      %s26 = sadd.s32 1, %s21
      %p27 = scmp.ge.s32.totalorder %s26, 1
      %s28 = scalar_select %p27, 0, %s26
      %s29 = sadd.s32 1, %s20
      %s30 = scalar_select %p27, %s29, %s20
      %p31 = scmp.ge.s32.totalorder %s30, 2
      %s32 = scalar_select %p31, 0, %s30
      %s33 = ssub.s32 %s20, %s32
      %p34 = scmp.eq.s32.totalorder %s33, 0
      %s36 = sadd.s32 %s35, 1
      %s37 = scalar_select %p34, %s35, %s36
      %p40 = pneg %p34
      %p41 = scmp.eq.s32.totalorder %s13, 1
      %p42 = por %p40, %p41
      %p43 = scmp.ne.s32.totalorder %s35, %s38
      %p44 = scmp.eq.s32.totalorder %s13, 0
      %p45 = por %p43, %p44
      %p46 = scmp.ne.s32.totalorder %s35, %s38
      %p47 = scmp.eq.s32.totalorder %s18, 1
      %p48 = por %p46, %p47
      %p49 = scmp.ne.s32.totalorder %s38, %s39
      %p50 = scmp.eq.s32.totalorder %s18, 0
      %p51 = por %p49, %p50
      %p52 = scmp.ne.s32.totalorder %s38, %s39
      %p53 = scmp.eq.s32.totalorder %s19, 1
      %p54 = por %p52, %p53
      %p56 = scmp.ne.s32.totalorder %s39, %s55
      %p57 = scmp.eq.s32.totalorder %s19, 0
      %p58 = por %p56, %p57
      %s59 = ssub.s32 %s21, %s28
      %p60 = scmp.eq.s32.totalorder %s59, 0
      %s62 = sadd.s32 %s61, 1
      %s63 = scalar_select %p60, %s61, %s62
      %p66 = pneg %p60
      %p67 = scmp.eq.s32.totalorder %s13, 1
      %p68 = por %p66, %p67
      %p69 = scmp.ne.s32.totalorder %s61, %s64
      %p70 = scmp.eq.s32.totalorder %s13, 0
      %p71 = por %p69, %p70
      %p72 = scmp.ne.s32.totalorder %s61, %s64
      %p73 = scmp.eq.s32.totalorder %s18, 1
      %p74 = por %p72, %p73
      %p75 = scmp.ne.s32.totalorder %s64, %s65
      %p76 = scmp.eq.s32.totalorder %s18, 0
      %p77 = por %p75, %p76
      %p78 = scmp.ne.s32.totalorder %s64, %s65
      %p79 = scmp.eq.s32.totalorder %s19, 1
      %p80 = por %p78, %p79
      %p82 = scmp.ne.s32.totalorder %s65, %s81
      %p83 = scmp.eq.s32.totalorder %s19, 0
      %p84 = por %p82, %p83
      %s85 = ssub.s32 %s21, %s28
      %p86 = scmp.eq.s32.totalorder %s85, 0
      %s88 = sadd.s32 %s87, 1
      %s89 = scalar_select %p86, %s87, %s88
      %p92 = pneg %p86
      %p93 = scmp.eq.s32.totalorder %s13, 1
      %p94 = por %p92, %p93
      %p95 = scmp.ne.s32.totalorder %s87, %s90
      %p96 = scmp.eq.s32.totalorder %s13, 0
      %p97 = por %p95, %p96
      %p98 = scmp.ne.s32.totalorder %s87, %s90
      %p99 = scmp.eq.s32.totalorder %s18, 1
      %p100 = por %p98, %p99
      %p101 = scmp.ne.s32.totalorder %s90, %s91
      %p102 = scmp.eq.s32.totalorder %s18, 0
      %p103 = por %p101, %p102
      %p104 = scmp.ne.s32.totalorder %s90, %s91
      %p105 = scmp.eq.s32.totalorder %s19, 1
      %p106 = por %p104, %p105
      %p108 = scmp.ne.s32.totalorder %s91, %s107
      %p109 = scmp.eq.s32.totalorder %s19, 0
      %p110 = por %p108, %p109
      %s111 = ssub.s32 %s21, %s28
      %p112 = scmp.eq.s32.totalorder %s111, 0
      %s114 = sadd.s32 %s113, 1
      %s115 = scalar_select %p112, %s113, %s114
      %p118 = pneg %p112
      %p119 = scmp.eq.s32.totalorder %s13, 1
      %p120 = por %p118, %p119
      %p121 = scmp.ne.s32.totalorder %s113, %s116
      %p122 = scmp.eq.s32.totalorder %s13, 0
      %p123 = por %p121, %p122
      %p124 = scmp.ne.s32.totalorder %s113, %s116
      %p125 = scmp.eq.s32.totalorder %s18, 1
      %p126 = por %p124, %p125
      %p127 = scmp.ne.s32.totalorder %s116, %s117
      %p128 = scmp.eq.s32.totalorder %s18, 0
      %p129 = por %p127, %p128
      %p130 = scmp.ne.s32.totalorder %s116, %s117
      %p131 = scmp.eq.s32.totalorder %s19, 1
      %p132 = por %p130, %p131
      %p134 = scmp.ne.s32.totalorder %s117, %s133
      %p135 = scmp.eq.s32.totalorder %s19, 0
      %p136 = por %p134, %p135
      %s137 = ssub.s32 %s20, %s32
      %s138 = ssub.s32 %s21, %s28
      %s139 = sor.u32 %s137, %s138
      %p140 = scmp.eq.s32.totalorder %s139, 0
      %s142 = sadd.s32 %s141, 1
      %s143 = scalar_select %p140, %s141, %s142
      %p146 = pneg %p140
      %p147 = scmp.eq.s32.totalorder %s13, 1
      %p148 = por %p146, %p147
      %p149 = scmp.ne.s32.totalorder %s141, %s144
      %p150 = scmp.eq.s32.totalorder %s13, 0
      %p151 = por %p149, %p150
      %p152 = scmp.ne.s32.totalorder %s141, %s144
      %p153 = scmp.eq.s32.totalorder %s18, 1
      %p154 = por %p152, %p153
      %p155 = scmp.ne.s32.totalorder %s144, %s145
      %p156 = scmp.eq.s32.totalorder %s18, 0
      %p157 = por %p155, %p156
      %p158 = scmp.ne.s32.totalorder %s144, %s145
      %p159 = scmp.eq.s32.totalorder %s19, 1
      %p160 = por %p158, %p159
      %p162 = scmp.ne.s32.totalorder %s145, %s161
      %p163 = scmp.eq.s32.totalorder %s19, 0
      %p164 = por %p162, %p163
      %p165 = scmp.le.s32.totalorder 1, %s13
      %p166 = scmp.lt.s32.totalorder %s13, 3
      %p167 = pnand %p165, %p166
      %p168 = pneg %p167
      // Predicated region
      $region9: #{convbnact_forward.1} parent=5 // pred_check
        _
      $region10: #{convbnact_forward.1} parent=5 // pred_check_branch
        %170 = sbr.rel (%p167) target = $region12
      $region11: #{convbnact_forward.1} parent=5 // pred_region
        %s171 = ssub.s32 %s13, 1
        // Predicated region
        $region13: #{convbnact_forward.1} parent=11 // pred_check
          %p172 = pneg %p77
        $region14: #{convbnact_forward.1} parent=11 // pred_check_branch
          %174 = sbr.rel (%p172) target = $region16
        $region15: #{convbnact_forward.1} parent=11 // pred_region
          %p175 = scmp.lt.s32.totalorder %s23, 0
          %s176 = scalar_select %p175, %s23, 0
          %s177 = smul.addr %s176, 4
          %s178 = scalar_lea.vmem %s1, %s177
        $region16: #{convbnact_forward.1} parent=11 // pred_fallthru
          _
        // Predicated region
        $region17: #{convbnact_forward.1} parent=11 // pred_check
          %p179 = pneg %p103
        $region18: #{convbnact_forward.1} parent=11 // pred_check_branch
          %181 = sbr.rel (%p179) target = $region20
        $region19: #{convbnact_forward.1} parent=11 // pred_region
          %p182 = scmp.lt.s32.totalorder %s23, 0
          %s183 = scalar_select %p182, %s23, 0
          %s184 = scalar_lea.vmem %s2, %s183
        $region20: #{convbnact_forward.1} parent=11 // pred_fallthru
          _
        // Predicated region
        $region21: #{convbnact_forward.1} parent=11 // pred_check
          %p185 = pneg %p129
        $region22: #{convbnact_forward.1} parent=11 // pred_check_branch
          %187 = sbr.rel (%p185) target = $region24
        $region23: #{convbnact_forward.1} parent=11 // pred_region
          %p188 = scmp.lt.s32.totalorder %s23, 0
          %s189 = scalar_select %p188, %s23, 0
          %s190 = scalar_lea.vmem %s3, %s189
        $region24: #{convbnact_forward.1} parent=11 // pred_fallthru
          _
      $region12: #{convbnact_forward.1} parent=5 // pred_fallthru
        _
      %p191 = scmp.lt.s32.totalorder %s13, 2
      // Predicated region
      $region25: #{convbnact_forward.1} parent=5 // pred_check
        %p192 = pneg %p191
      $region26: #{convbnact_forward.1} parent=5 // pred_check_branch
        %194 = sbr.rel (%p192) target = $region28
      $region27: #{convbnact_forward.1} parent=5 // pred_region
        // Predicated region
        $region29: #{convbnact_forward.1} parent=27 // pred_check
          %p195 = pneg %p45
        $region30: #{convbnact_forward.1} parent=27 // pred_check_branch
          %197 = sbr.rel (%p195) target = $region32
        $region31: #{convbnact_forward.1} parent=27 // pred_region
          %p198 = scmp.lt.s32.totalorder %s20, 1
          %s199 = scalar_select %p198, %s20, 1
          %s200 = smul.addr %s199, 54
          %s201 = smul.addr %s200, 4
          %s202 = scalar_lea.vmem %s0, %s201
        $region32: #{convbnact_forward.1} parent=27 // pred_fallthru
          _
      $region28: #{convbnact_forward.1} parent=5 // pred_fallthru
        _
      %p203 = scmp.le.s32.totalorder 1, %s13
      %p204 = scmp.lt.s32.totalorder %s13, 3
      %p205 = pnand %p203, %p204
      %p206 = pneg %p205
      // Predicated region
      $region33: #{convbnact_forward.1} parent=5 // pred_check
        _
      $region34: #{convbnact_forward.1} parent=5 // pred_check_branch
        %208 = sbr.rel (%p205) target = $region36
      $region35: #{convbnact_forward.1} parent=5 // pred_region
        %s209 = ssub.s32 %s13, 1
        %p210 = scmp.lt.s32.totalorder %s22, 1
        %s211 = scalar_select %p210, %s22, 1
        %s212 = smul.addr %s211, 54
        %s213 = smul.addr %s212, 4
        %s214 = scalar_lea.vmem %s0, %s213
        %p215 = pneg %p51
        %p216 = pneg %p48
        %p217 = scmp.lt.s32.totalorder %s23, 0
        %s218 = scalar_select %p217, %s23, 0
        %s219 = smul.addr %s218, 4
        %s220 = scalar_lea.vmem %s1, %s219
        %p221 = pneg %p77
        %p222 = pneg %p74
        %p223 = scmp.lt.s32.totalorder %s23, 0
        %s224 = scalar_select %p223, %s23, 0
        %s225 = scalar_lea.vmem %s2, %s224
        %p226 = pneg %p103
        %p227 = pneg %p100
        %p228 = scmp.lt.s32.totalorder %s23, 0
        %s229 = scalar_select %p228, %s23, 0
        %s230 = scalar_lea.vmem %s3, %s229
        %p231 = pneg %p129
        %p232 = pneg %p126
        %p233 = pneg %p157
        %p234 = pneg %p154
        %s235 = sand.u32 %s144, 1
        %s236 = scalar_lea.sflag [#allocation3], %s235
        %s237 = sand.u32 %s144, 1
        %s238 = smul.addr %s237, 256
        %s239 = scalar_lea.vmem [#allocation2], %s238
        %p240 = scmp.lt.s32.totalorder %s22, 1
        %s241 = scalar_select %p240, %s22, 1
        %s242 = smul.addr %s241, 54
        %s243 = smul.addr %s242, 4
        %s244 = scalar_lea.vmem %s0, %s243
        %p245 = scmp.lt.s32.totalorder %s23, 0
        %s246 = scalar_select %p245, %s23, 0
        %s247 = smul.addr %s246, 4
        %s248 = scalar_lea.vmem %s1, %s247
        %p249 = scmp.lt.s32.totalorder %s23, 0
        %s250 = scalar_select %p249, %s23, 0
        %s251 = scalar_lea.vmem %s2, %s250
        %p252 = scmp.lt.s32.totalorder %s23, 0
        %s253 = scalar_select %p252, %s23, 0
        %s254 = scalar_lea.vmem %s3, %s253
        %v256 = vld [vmem:[%s244] sm:$0xf]
        %v257 = vld [vmem:[%s244 + $0x4] sm:$0xf]
        %v258 = vld [vmem:[%s244 + $0xc] sm:$0xf]
        %v259 = vld [vmem:[%s244 + $0x10] sm:$0xf]
        %v260 = vld [vmem:[%s244 + $0x18] sm:$0xf]
        %v261 = vld [vmem:[%s244 + $0x1c] sm:$0xf]
        %v262 = vld [vmem:[%s244 + $0x24] sm:$0xf]
        %v263 = vld [vmem:[%s244 + $0x28] sm:$0xf]
        %v264 = vld [vmem:[%s244 + $0x30] sm:$0xf]
        %v265 = vld [vmem:[%s244 + $0x34] sm:$0xf]
        %v266 = vld [vmem:[%s244 + $0x3c] sm:$0xf]
        %v267 = vld [vmem:[%s244 + $0x40] sm:$0xf]
        %v268 = vld [vmem:[%s244 + $0x48] sm:$0xf]
        %v269 = vld [vmem:[%s244 + $0x4c] sm:$0xf]
        %v270 = vld [vmem:[%s244 + $0x54] sm:$0xf]
        %v271 = vld [vmem:[%s244 + $0x58] sm:$0xf]
        %v272 = vld [vmem:[%s244 + $0x60] sm:$0xf]
        %v273 = vld [vmem:[%s244 + $0x64] sm:$0xf]
        %v274 = vld [vmem:[%s244 + $0x6c] sm:$0xf]
        %v275 = vld [vmem:[%s244 + $0x70] sm:$0xf]
        %v276 = vld [vmem:[%s244 + $0x78] sm:$0xf]
        %v277 = vld [vmem:[%s244 + $0x7c] sm:$0xf]
        %v278 = vld [vmem:[%s244 + $0x84] sm:$0xf]
        %v279 = vld [vmem:[%s244 + $0x88] sm:$0xf]
        %v280 = vld [vmem:[%s244 + $0x90] sm:$0xf]
        %v281 = vld [vmem:[%s244 + $0x94] sm:$0xf]
        %v282 = vld [vmem:[%s244 + $0x9c] sm:$0xf]
        %v283 = vld [vmem:[%s244 + $0xa0] sm:$0xf]
        %v284 = vld [vmem:[%s244 + $0xa8] sm:$0xf]
        %v285 = vld [vmem:[%s244 + $0xac] sm:$0xf]
        %v286 = vld [vmem:[%s244 + $0xb4] sm:$0xf]
        %v287 = vld [vmem:[%s244 + $0xb8] sm:$0xf]
        %v288 = vld [vmem:[%s248] sm:$0xf]
        %v289 = vld [vmem:[%s248 + $0x4] sm:$0xf]
        %v290 = vld [vmem:[%s244 + $0x8] sm:$0x1]
        %v291 = vld [vmem:[%s244 + $0x14] sm:$0x1]
        %v292 = vld [vmem:[%s244 + $0x20] sm:$0x1]
        %v293 = vld [vmem:[%s244 + $0x2c] sm:$0x1]
        %v294 = vld [vmem:[%s244 + $0x38] sm:$0x1]
        %v295 = vld [vmem:[%s244 + $0x44] sm:$0x1]
        %v296 = vld [vmem:[%s244 + $0x50] sm:$0x1]
        %v297 = vld [vmem:[%s244 + $0x5c] sm:$0x1]
        %v298 = vld [vmem:[%s244 + $0x68] sm:$0x1]
        %v299 = vld [vmem:[%s244 + $0x74] sm:$0x1]
        %v300 = vld [vmem:[%s244 + $0x80] sm:$0x1]
        %v301 = vld [vmem:[%s244 + $0x8c] sm:$0x1]
        %v302 = vld [vmem:[%s244 + $0x98] sm:$0x1]
        %v303 = vld [vmem:[%s244 + $0xa4] sm:$0x1]
        %v304 = vld [vmem:[%s244 + $0xb0] sm:$0x1]
        %v305 = vld [vmem:[%s244 + $0xbc] sm:$0x1]
        %vm306 = vsmask.f32 3328
        %vm307 = vsmask.f32 7440
        %vm308 = vmor %vm306, %vm307
        %v310 = vshrl.u32 %v256, 16
        %v312 = vrot.slane %v310, 4
        %v313 = vshll.u32 %v256, 16
        %v315 = vrot.slane %v313, 5
        %v316 = vor.u32 %v312, %v315
        %v317 = vrot.slane %v316, 4
        %v319 = vshll.u32 %v257, 16
        %v321 = vrot.slane %v319, 5
        %v322 = vsel %vm308, %v317, %v321
        %v323 = vshrl.u32 %v257, 16
        %v325 = vrot.slane %v323, 4
        %v326 = vor.u32 %v325, %v321
        %v327 = vrot.slane %v326, 4
        %v329 = vshll.u32 %v290, 16
        %v331 = vrot.slane %v329, 5
        %v332 = vsel %vm308, %v327, %v331
        %v334 = vshrl.u32 %v258, 16
        %v336 = vrot.slane %v334, 4
        %v337 = vshll.u32 %v258, 16
        %v339 = vrot.slane %v337, 5
        %v340 = vor.u32 %v336, %v339
        %v341 = vrot.slane %v340, 4
        %v343 = vshll.u32 %v259, 16
        %v345 = vrot.slane %v343, 5
        %v346 = vsel %vm308, %v341, %v345
        %v347 = vshrl.u32 %v259, 16
        %v349 = vrot.slane %v347, 4
        %v350 = vor.u32 %v349, %v345
        %v351 = vrot.slane %v350, 4
        %v353 = vshll.u32 %v291, 16
        %v355 = vrot.slane %v353, 5
        %v356 = vsel %vm308, %v351, %v355
        %v358 = vshrl.u32 %v260, 16
        %v360 = vrot.slane %v358, 4
        %v361 = vshll.u32 %v260, 16
        %v363 = vrot.slane %v361, 5
        %v364 = vor.u32 %v360, %v363
        %v365 = vrot.slane %v364, 4
        %v367 = vshll.u32 %v261, 16
        %v369 = vrot.slane %v367, 5
        %v370 = vsel %vm308, %v365, %v369
        %v371 = vshrl.u32 %v261, 16
        %v373 = vrot.slane %v371, 4
        %v374 = vor.u32 %v373, %v369
        %v375 = vrot.slane %v374, 4
        %v377 = vshll.u32 %v292, 16
        %v379 = vrot.slane %v377, 5
        %v380 = vsel %vm308, %v375, %v379
        %v382 = vshrl.u32 %v262, 16
        %v384 = vrot.slane %v382, 4
        %v385 = vshll.u32 %v262, 16
        %v387 = vrot.slane %v385, 5
        %v388 = vor.u32 %v384, %v387
        %v389 = vrot.slane %v388, 4
        %v391 = vshll.u32 %v263, 16
        %v393 = vrot.slane %v391, 5
        %v394 = vsel %vm308, %v389, %v393
        %v395 = vshrl.u32 %v263, 16
        %v397 = vrot.slane %v395, 4
        %v398 = vor.u32 %v397, %v393
        %v399 = vrot.slane %v398, 4
        %v401 = vshll.u32 %v293, 16
        %v403 = vrot.slane %v401, 5
        %v404 = vsel %vm308, %v399, %v403
        %v406 = vshrl.u32 %v264, 16
        %v408 = vrot.slane %v406, 4
        %v409 = vshll.u32 %v264, 16
        %v411 = vrot.slane %v409, 5
        %v412 = vor.u32 %v408, %v411
        %v413 = vrot.slane %v412, 4
        %v415 = vshll.u32 %v265, 16
        %v417 = vrot.slane %v415, 5
        %v418 = vsel %vm308, %v413, %v417
        %v419 = vshrl.u32 %v265, 16
        %v421 = vrot.slane %v419, 4
        %v422 = vor.u32 %v421, %v417
        %v423 = vrot.slane %v422, 4
        %v425 = vshll.u32 %v294, 16
        %v427 = vrot.slane %v425, 5
        %v428 = vsel %vm308, %v423, %v427
        %v430 = vshrl.u32 %v266, 16
        %v432 = vrot.slane %v430, 4
        %v433 = vshll.u32 %v266, 16
        %v435 = vrot.slane %v433, 5
        %v436 = vor.u32 %v432, %v435
        %v437 = vrot.slane %v436, 4
        %v439 = vshll.u32 %v267, 16
        %v441 = vrot.slane %v439, 5
        %v442 = vsel %vm308, %v437, %v441
        %v443 = vshrl.u32 %v267, 16
        %v445 = vrot.slane %v443, 4
        %v446 = vor.u32 %v445, %v441
        %v447 = vrot.slane %v446, 4
        %v449 = vshll.u32 %v295, 16
        %v451 = vrot.slane %v449, 5
        %v452 = vsel %vm308, %v447, %v451
        %v454 = vshrl.u32 %v268, 16
        %v456 = vrot.slane %v454, 4
        %v457 = vshll.u32 %v268, 16
        %v459 = vrot.slane %v457, 5
        %v460 = vor.u32 %v456, %v459
        %v461 = vrot.slane %v460, 4
        %v463 = vshll.u32 %v269, 16
        %v465 = vrot.slane %v463, 5
        %v466 = vsel %vm308, %v461, %v465
        %v467 = vshrl.u32 %v269, 16
        %v469 = vrot.slane %v467, 4
        %v470 = vor.u32 %v469, %v465
        %v471 = vrot.slane %v470, 4
        %v473 = vshll.u32 %v296, 16
        %v475 = vrot.slane %v473, 5
        %v476 = vsel %vm308, %v471, %v475
        %v478 = vshrl.u32 %v270, 16
        %v480 = vrot.slane %v478, 4
        %v481 = vshll.u32 %v270, 16
        %v483 = vrot.slane %v481, 5
        %v484 = vor.u32 %v480, %v483
        %v485 = vrot.slane %v484, 4
        %v487 = vshll.u32 %v271, 16
        %v489 = vrot.slane %v487, 5
        %v490 = vsel %vm308, %v485, %v489
        %v491 = vshrl.u32 %v271, 16
        %v493 = vrot.slane %v491, 4
        %v494 = vor.u32 %v493, %v489
        %v495 = vrot.slane %v494, 4
        %v497 = vshll.u32 %v297, 16
        %v499 = vrot.slane %v497, 5
        %v500 = vsel %vm308, %v495, %v499
        %v502 = vshrl.u32 %v272, 16
        %v504 = vrot.slane %v502, 4
        %v505 = vshll.u32 %v272, 16
        %v507 = vrot.slane %v505, 5
        %v508 = vor.u32 %v504, %v507
        %v509 = vrot.slane %v508, 4
        %v511 = vshll.u32 %v273, 16
        %v513 = vrot.slane %v511, 5
        %v514 = vsel %vm308, %v509, %v513
        %v515 = vshrl.u32 %v273, 16
        %v517 = vrot.slane %v515, 4
        %v518 = vor.u32 %v517, %v513
        %v519 = vrot.slane %v518, 4
        %v521 = vshll.u32 %v298, 16
        %v523 = vrot.slane %v521, 5
        %v524 = vsel %vm308, %v519, %v523
        %v526 = vshrl.u32 %v274, 16
        %v528 = vrot.slane %v526, 4
        %v529 = vshll.u32 %v274, 16
        %v531 = vrot.slane %v529, 5
        %v532 = vor.u32 %v528, %v531
        %v533 = vrot.slane %v532, 4
        %v535 = vshll.u32 %v275, 16
        %v537 = vrot.slane %v535, 5
        %v538 = vsel %vm308, %v533, %v537
        %v539 = vshrl.u32 %v275, 16
        %v541 = vrot.slane %v539, 4
        %v542 = vor.u32 %v541, %v537
        %v543 = vrot.slane %v542, 4
        %v545 = vshll.u32 %v299, 16
        %v547 = vrot.slane %v545, 5
        %v548 = vsel %vm308, %v543, %v547
        %v550 = vshrl.u32 %v276, 16
        %v552 = vrot.slane %v550, 4
        %v553 = vshll.u32 %v276, 16
        %v555 = vrot.slane %v553, 5
        %v556 = vor.u32 %v552, %v555
        %v557 = vrot.slane %v556, 4
        %v559 = vshll.u32 %v277, 16
        %v561 = vrot.slane %v559, 5
        %v562 = vsel %vm308, %v557, %v561
        %v563 = vshrl.u32 %v277, 16
        %v565 = vrot.slane %v563, 4
        %v566 = vor.u32 %v565, %v561
        %v567 = vrot.slane %v566, 4
        %v569 = vshll.u32 %v300, 16
        %v571 = vrot.slane %v569, 5
        %v572 = vsel %vm308, %v567, %v571
        %v574 = vshrl.u32 %v278, 16
        %v576 = vrot.slane %v574, 4
        %v577 = vshll.u32 %v278, 16
        %v579 = vrot.slane %v577, 5
        %v580 = vor.u32 %v576, %v579
        %v581 = vrot.slane %v580, 4
        %v583 = vshll.u32 %v279, 16
        %v585 = vrot.slane %v583, 5
        %v586 = vsel %vm308, %v581, %v585
        %v587 = vshrl.u32 %v279, 16
        %v589 = vrot.slane %v587, 4
        %v590 = vor.u32 %v589, %v585
        %v591 = vrot.slane %v590, 4
        %v593 = vshll.u32 %v301, 16
        %v595 = vrot.slane %v593, 5
        %v596 = vsel %vm308, %v591, %v595
        %v598 = vshrl.u32 %v280, 16
        %v600 = vrot.slane %v598, 4
        %v601 = vshll.u32 %v280, 16
        %v603 = vrot.slane %v601, 5
        %v604 = vor.u32 %v600, %v603
        %v605 = vrot.slane %v604, 4
        %v607 = vshll.u32 %v281, 16
        %v609 = vrot.slane %v607, 5
        %v610 = vsel %vm308, %v605, %v609
        %v611 = vshrl.u32 %v281, 16
        %v613 = vrot.slane %v611, 4
        %v614 = vor.u32 %v613, %v609
        %v615 = vrot.slane %v614, 4
        %v617 = vshll.u32 %v302, 16
        %v619 = vrot.slane %v617, 5
        %v620 = vsel %vm308, %v615, %v619
        %v622 = vshrl.u32 %v282, 16
        %v624 = vrot.slane %v622, 4
        %v625 = vshll.u32 %v282, 16
        %v627 = vrot.slane %v625, 5
        %v628 = vor.u32 %v624, %v627
        %v629 = vrot.slane %v628, 4
        %v631 = vshll.u32 %v283, 16
        %v633 = vrot.slane %v631, 5
        %v634 = vsel %vm308, %v629, %v633
        %v635 = vshrl.u32 %v283, 16
        %v637 = vrot.slane %v635, 4
        %v638 = vor.u32 %v637, %v633
        %v639 = vrot.slane %v638, 4
        %v641 = vshll.u32 %v303, 16
        %v643 = vrot.slane %v641, 5
        %v644 = vsel %vm308, %v639, %v643
        %v646 = vshrl.u32 %v284, 16
        %v648 = vrot.slane %v646, 4
        %v649 = vshll.u32 %v284, 16
        %v651 = vrot.slane %v649, 5
        %v652 = vor.u32 %v648, %v651
        %v653 = vrot.slane %v652, 4
        %v655 = vshll.u32 %v285, 16
        %v657 = vrot.slane %v655, 5
        %v658 = vsel %vm308, %v653, %v657
        %v659 = vshrl.u32 %v285, 16
        %v661 = vrot.slane %v659, 4
        %v662 = vor.u32 %v661, %v657
        %v663 = vrot.slane %v662, 4
        %v665 = vshll.u32 %v304, 16
        %v667 = vrot.slane %v665, 5
        %v668 = vsel %vm308, %v663, %v667
        %v670 = vshrl.u32 %v286, 16
        %v672 = vrot.slane %v670, 4
        %v673 = vshll.u32 %v286, 16
        %v675 = vrot.slane %v673, 5
        %v676 = vor.u32 %v672, %v675
        %v677 = vrot.slane %v676, 4
        %v679 = vshll.u32 %v287, 16
        %v681 = vrot.slane %v679, 5
        %v682 = vsel %vm308, %v677, %v681
        %v683 = vshrl.u32 %v287, 16
        %v685 = vrot.slane %v683, 4
        %v686 = vor.u32 %v685, %v681
        %v687 = vrot.slane %v686, 4
        %v689 = vshll.u32 %v305, 16
        %v691 = vrot.slane %v689, 5
        %v692 = vsel %vm308, %v687, %v691
        %s693 = scalar_lea.vmem %s248, 8
        %v694 = vld [vmem:[%s693] sm:$0xf]
        %v695 = vld [vmem:[%s693 + $0x4] sm:$0xf]
        %v696 = vunpack.c.l.b16 %v322
        %v697 = vunpack.c.l.b16 %v332
        %v698 = vunpack.c.l.b16 %v346
        %v699 = vunpack.c.l.b16 %v356
        %v700 = vunpack.c.l.b16 %v370
        %v701 = vunpack.c.l.b16 %v380
        %v702 = vunpack.c.l.b16 %v394
        %v703 = vunpack.c.l.b16 %v404
        %v704 = vunpack.c.l.b16 %v418
        %v705 = vunpack.c.l.b16 %v428
        %v706 = vunpack.c.l.b16 %v442
        %v707 = vunpack.c.l.b16 %v452
        %v708 = vunpack.c.l.b16 %v466
        %v709 = vunpack.c.l.b16 %v476
        %v710 = vunpack.c.l.b16 %v490
        %v711 = vunpack.c.l.b16 %v500
        %v712 = vunpack.c.l.b16 %v514
        %v713 = vunpack.c.l.b16 %v524
        %v714 = vunpack.c.l.b16 %v538
        %v715 = vunpack.c.l.b16 %v548
        %v716 = vunpack.c.l.b16 %v562
        %v717 = vunpack.c.l.b16 %v572
        %v718 = vunpack.c.l.b16 %v586
        %v719 = vunpack.c.l.b16 %v596
        %v720 = vunpack.c.l.b16 %v610
        %v721 = vunpack.c.l.b16 %v620
        %v722 = vunpack.c.l.b16 %v634
        %v723 = vunpack.c.l.b16 %v644
        %v724 = vunpack.c.l.b16 %v658
        %v725 = vunpack.c.l.b16 %v668
        %v726 = vunpack.c.l.b16 %v682
        %v727 = vunpack.c.l.b16 %v692
        %v728 = vpack.c.b16 %v697, %v696
        %v729 = vpack.c.b16 %v699, %v698
        %v730 = vpack.c.b16 %v701, %v700
        %v731 = vpack.c.b16 %v703, %v702
        %v732 = vpack.c.b16 %v705, %v704
        %v733 = vpack.c.b16 %v707, %v706
        %v734 = vpack.c.b16 %v709, %v708
        %v735 = vpack.c.b16 %v711, %v710
        %v736 = vpack.c.b16 %v713, %v712
        %v737 = vpack.c.b16 %v715, %v714
        %v738 = vpack.c.b16 %v717, %v716
        %v739 = vpack.c.b16 %v719, %v718
        %v740 = vpack.c.b16 %v721, %v720
        %v741 = vpack.c.b16 %v723, %v722
        %v742 = vpack.c.b16 %v725, %v724
        %v743 = vpack.c.b16 %v727, %v726
        %v746 = vunpack.c.l.b16 %v694
        %v747 = vunpack.c.l.b16 %v695
        %v748 = vpack.c.b16 %v747, %v746
        %vm750 = vcmask 130048
        %v752 = vsel %vm750, %v728, 0
        %v755 = vsel %vm750, %v729, 0
        %v758 = vsel %vm750, %v730, 0
        %v761 = vsel %vm750, %v731, 0
        %v764 = vsel %vm750, %v732, 0
        %v767 = vsel %vm750, %v733, 0
        %v770 = vsel %vm750, %v734, 0
        %v773 = vsel %vm750, %v735, 0
        %v776 = vsel %vm750, %v736, 0
        %v779 = vsel %vm750, %v737, 0
        %v782 = vsel %vm750, %v738, 0
        %v785 = vsel %vm750, %v739, 0
        %v788 = vsel %vm750, %v740, 0
        %v791 = vsel %vm750, %v741, 0
        %v794 = vsel %vm750, %v742, 0
        %v797 = vsel %vm750, %v743, 0
        %799 = vmatprep.subr.bf16.mxu0 0
        %800 = vmatpush1.bf16.msra.mxu0 0
        %801 = vmatprep.subr.bf16.mxu0 0
        %802 = vmatpush1.bf16.msra.mxu0 0
        %803 = vmatprep.subr.bf16.mxu0 0
        %804 = vmatpush1.bf16.msra.mxu0 0
        %805 = vmatprep.subr.bf16.mxu0 0
        %806 = vmatpush1.bf16.msra.mxu0 0
        %807 = vmatprep.subr.bf16.mxu0 0
        %808 = vmatpush1.bf16.msra.mxu0 0
        %809 = vmatprep.subr.bf16.mxu0 0
        %810 = vmatpush1.bf16.msra.mxu0 0
        %811 = vmatprep.subr.bf16.mxu0 0
        %812 = vmatpush1.bf16.msra.mxu0 0
        %813 = vmatprep.subr.bf16.mxu0 0
        %814 = vmatpush1.bf16.msra.mxu0 %v748
        %815 = vmatprep.subr.bf16.mxu0 0
        %816 = vmatpush2.bf16.msra.mxu0 0
        %817 = vmatprep.subr.bf16.mxu0 0
        %818 = vmatpush2.bf16.msra.mxu0 0
        %819 = vmatprep.subr.bf16.mxu0 0
        %820 = vmatpush2.bf16.msra.mxu0 0
        %821 = vmatprep.subr.bf16.mxu0 0
        %822 = vmatpush2.bf16.msra.mxu0 0
        %823 = vmatprep.subr.bf16.mxu0 0
        %824 = vmatpush2.bf16.msra.mxu0 0
        %825 = vmatprep.subr.bf16.mxu0 0
        %826 = vmatpush2.bf16.msra.mxu0 0
        %827 = vmatprep.subr.bf16.mxu0 0
        %828 = vmatpush2.bf16.msra.mxu0 0
        %829 = vmatprep.subr.bf16.mxu0 0
        %830 = vmatpush2.bf16.msra.mxu0 0
        %831 = vmatprep.mubr.bf16.mxu0 0
        %832 = vmatmul.mubr.bf16.gmra.mxu0 %v752
        %v833 = vpop.f32.mrf.mxu0
        %v834 = vadd.f32 0.0, %v833
        %v835 = vpop.f32.mrf.mxu0
        %v836 = vpop.f32.mrf.mxu0
        %v837 = vadd.f32 0.0, %v836
        %v838 = vpop.f32.mrf.mxu0
        %839 = vmatprep.mubr.bf16.mxu0 0
        %840 = vmatmul.mubr.bf16.gmra.mxu0 %v755
        %v841 = vpop.f32.mrf.mxu0
        %v842 = vadd.f32 0.0, %v841
        %v843 = vpop.f32.mrf.mxu0
        %v844 = vpop.f32.mrf.mxu0
        %v845 = vadd.f32 0.0, %v844
        %v846 = vpop.f32.mrf.mxu0
        %847 = vmatprep.mubr.bf16.mxu0 0
        %848 = vmatmul.mubr.bf16.gmra.mxu0 %v758
        %v849 = vpop.f32.mrf.mxu0
        %v850 = vadd.f32 0.0, %v849
        %v851 = vpop.f32.mrf.mxu0
        %v852 = vpop.f32.mrf.mxu0
        %v853 = vadd.f32 0.0, %v852
        %v854 = vpop.f32.mrf.mxu0
        %855 = vmatprep.mubr.bf16.mxu0 0
        %856 = vmatmul.mubr.bf16.gmra.mxu0 %v761
        %v857 = vpop.f32.mrf.mxu0
        %v858 = vadd.f32 0.0, %v857
        %v859 = vpop.f32.mrf.mxu0
        %v860 = vpop.f32.mrf.mxu0
        %v861 = vadd.f32 0.0, %v860
        %v862 = vpop.f32.mrf.mxu0
        %863 = vmatprep.mubr.bf16.mxu0 0
        %864 = vmatmul.mubr.bf16.gmra.mxu0 %v764
        %v865 = vpop.f32.mrf.mxu0
        %v866 = vadd.f32 0.0, %v865
        %v867 = vpop.f32.mrf.mxu0
        %v868 = vpop.f32.mrf.mxu0
        %v869 = vadd.f32 0.0, %v868
        %v870 = vpop.f32.mrf.mxu0
        %871 = vmatprep.mubr.bf16.mxu0 0
        %872 = vmatmul.mubr.bf16.gmra.mxu0 %v767
        %v873 = vpop.f32.mrf.mxu0
        %v874 = vadd.f32 0.0, %v873
        %v875 = vpop.f32.mrf.mxu0
        %v876 = vpop.f32.mrf.mxu0
        %v877 = vadd.f32 0.0, %v876
        %v878 = vpop.f32.mrf.mxu0
        %879 = vmatprep.mubr.bf16.mxu0 0
        %880 = vmatmul.mubr.bf16.gmra.mxu0 %v770
        %v881 = vpop.f32.mrf.mxu0
        %v882 = vadd.f32 0.0, %v881
        %v883 = vpop.f32.mrf.mxu0
        %v884 = vpop.f32.mrf.mxu0
        %v885 = vadd.f32 0.0, %v884
        %v886 = vpop.f32.mrf.mxu0
        %887 = vmatprep.mubr.bf16.mxu0 0
        %888 = vmatmul.mubr.bf16.gmra.mxu0 %v773
        %v889 = vpop.f32.mrf.mxu0
        %v890 = vadd.f32 0.0, %v889
        %v891 = vpop.f32.mrf.mxu0
        %v892 = vpop.f32.mrf.mxu0
        %v893 = vadd.f32 0.0, %v892
        %v894 = vpop.f32.mrf.mxu0
        %895 = vmatprep.mubr.bf16.mxu0 0
        %896 = vmatmul.mubr.bf16.gmra.mxu0 %v776
        %v897 = vpop.f32.mrf.mxu0
        %v898 = vadd.f32 0.0, %v897
        %v899 = vpop.f32.mrf.mxu0
        %v900 = vpop.f32.mrf.mxu0
        %v901 = vadd.f32 0.0, %v900
        %v902 = vpop.f32.mrf.mxu0
        %903 = vmatprep.mubr.bf16.mxu0 0
        %904 = vmatmul.mubr.bf16.gmra.mxu0 %v779
        %v905 = vpop.f32.mrf.mxu0
        %v906 = vadd.f32 0.0, %v905
        %v907 = vpop.f32.mrf.mxu0
        %v908 = vpop.f32.mrf.mxu0
        %v909 = vadd.f32 0.0, %v908
        %v910 = vpop.f32.mrf.mxu0
        %911 = vmatprep.mubr.bf16.mxu0 0
        %912 = vmatmul.mubr.bf16.gmra.mxu0 %v782
        %v913 = vpop.f32.mrf.mxu0
        %v914 = vadd.f32 0.0, %v913
        %v915 = vpop.f32.mrf.mxu0
        %v916 = vpop.f32.mrf.mxu0
        %v917 = vadd.f32 0.0, %v916
        %v918 = vpop.f32.mrf.mxu0
        %919 = vmatprep.mubr.bf16.mxu0 0
        %920 = vmatmul.mubr.bf16.gmra.mxu0 %v785
        %v921 = vpop.f32.mrf.mxu0
        %v922 = vadd.f32 0.0, %v921
        %v923 = vpop.f32.mrf.mxu0
        %v924 = vpop.f32.mrf.mxu0
        %v925 = vadd.f32 0.0, %v924
        %v926 = vpop.f32.mrf.mxu0
        %927 = vmatprep.mubr.bf16.mxu0 0
        %928 = vmatmul.mubr.bf16.gmra.mxu0 %v788
        %v929 = vpop.f32.mrf.mxu0
        %v930 = vadd.f32 0.0, %v929
        %v931 = vpop.f32.mrf.mxu0
        %v932 = vpop.f32.mrf.mxu0
        %v933 = vadd.f32 0.0, %v932
        %v934 = vpop.f32.mrf.mxu0
        %935 = vmatprep.mubr.bf16.mxu0 0
        %936 = vmatmul.mubr.bf16.gmra.mxu0 %v791
        %v937 = vpop.f32.mrf.mxu0
        %v938 = vadd.f32 0.0, %v937
        %v939 = vpop.f32.mrf.mxu0
        %v940 = vpop.f32.mrf.mxu0
        %v941 = vadd.f32 0.0, %v940
        %v942 = vpop.f32.mrf.mxu0
        %943 = vmatprep.mubr.bf16.mxu0 0
        %944 = vmatmul.mubr.bf16.gmra.mxu0 %v794
        %v945 = vpop.f32.mrf.mxu0
        %v946 = vadd.f32 0.0, %v945
        %v947 = vpop.f32.mrf.mxu0
        %v948 = vpop.f32.mrf.mxu0
        %v949 = vadd.f32 0.0, %v948
        %v950 = vpop.f32.mrf.mxu0
        %951 = vmatprep.mubr.bf16.mxu0 0
        %952 = vmatmul.mubr.bf16.gmra.mxu0 %v797
        %v953 = vpop.f32.mrf.mxu0
        %v954 = vadd.f32 0.0, %v953
        %v955 = vpop.f32.mrf.mxu0
        %v956 = vpop.f32.mrf.mxu0
        %v957 = vadd.f32 0.0, %v956
        %v958 = vpop.f32.mrf.mxu0
        %959 = vdwg.mxu0
        %v992 = vunpack.c.l.b16 %v256
        %v993 = vunpack.c.l.b16 %v257
        %v994 = vunpack.c.l.b16 %v258
        %v995 = vunpack.c.l.b16 %v259
        %v996 = vunpack.c.l.b16 %v260
        %v997 = vunpack.c.l.b16 %v261
        %v998 = vunpack.c.l.b16 %v262
        %v999 = vunpack.c.l.b16 %v263
        %v1000 = vunpack.c.l.b16 %v264
        %v1001 = vunpack.c.l.b16 %v265
        %v1002 = vunpack.c.l.b16 %v266
        %v1003 = vunpack.c.l.b16 %v267
        %v1004 = vunpack.c.l.b16 %v268
        %v1005 = vunpack.c.l.b16 %v269
        %v1006 = vunpack.c.l.b16 %v270
        %v1007 = vunpack.c.l.b16 %v271
        %v1008 = vunpack.c.l.b16 %v272
        %v1009 = vunpack.c.l.b16 %v273
        %v1010 = vunpack.c.l.b16 %v274
        %v1011 = vunpack.c.l.b16 %v275
        %v1012 = vunpack.c.l.b16 %v276
        %v1013 = vunpack.c.l.b16 %v277
        %v1014 = vunpack.c.l.b16 %v278
        %v1015 = vunpack.c.l.b16 %v279
        %v1016 = vunpack.c.l.b16 %v280
        %v1017 = vunpack.c.l.b16 %v281
        %v1018 = vunpack.c.l.b16 %v282
        %v1019 = vunpack.c.l.b16 %v283
        %v1020 = vunpack.c.l.b16 %v284
        %v1021 = vunpack.c.l.b16 %v285
        %v1022 = vunpack.c.l.b16 %v286
        %v1023 = vunpack.c.l.b16 %v287
        %v1024 = vpack.c.b16 %v993, %v992
        %v1025 = vpack.c.b16 %v995, %v994
        %v1026 = vpack.c.b16 %v997, %v996
        %v1027 = vpack.c.b16 %v999, %v998
        %v1028 = vpack.c.b16 %v1001, %v1000
        %v1029 = vpack.c.b16 %v1003, %v1002
        %v1030 = vpack.c.b16 %v1005, %v1004
        %v1031 = vpack.c.b16 %v1007, %v1006
        %v1032 = vpack.c.b16 %v1009, %v1008
        %v1033 = vpack.c.b16 %v1011, %v1010
        %v1034 = vpack.c.b16 %v1013, %v1012
        %v1035 = vpack.c.b16 %v1015, %v1014
        %v1036 = vpack.c.b16 %v1017, %v1016
        %v1037 = vpack.c.b16 %v1019, %v1018
        %v1038 = vpack.c.b16 %v1021, %v1020
        %v1039 = vpack.c.b16 %v1023, %v1022
        %v1042 = vunpack.c.l.b16 %v288
        %v1043 = vunpack.c.l.b16 %v289
        %v1044 = vpack.c.b16 %v1043, %v1042
        %v1047 = vsel %vm750, %v1024, 0
        %v1050 = vsel %vm750, %v1025, 0
        %v1053 = vsel %vm750, %v1026, 0
        %v1056 = vsel %vm750, %v1027, 0
        %v1059 = vsel %vm750, %v1028, 0
        %v1062 = vsel %vm750, %v1029, 0
        %v1065 = vsel %vm750, %v1030, 0
        %v1068 = vsel %vm750, %v1031, 0
        %v1071 = vsel %vm750, %v1032, 0
        %v1074 = vsel %vm750, %v1033, 0
        %v1077 = vsel %vm750, %v1034, 0
        %v1080 = vsel %vm750, %v1035, 0
        %v1083 = vsel %vm750, %v1036, 0
        %v1086 = vsel %vm750, %v1037, 0
        %v1089 = vsel %vm750, %v1038, 0
        %v1092 = vsel %vm750, %v1039, 0
        %1094 = vmatprep.subr.bf16.mxu0 0
        %1095 = vmatpush1.bf16.msra.mxu0 0
        %1096 = vmatprep.subr.bf16.mxu0 0
        %1097 = vmatpush1.bf16.msra.mxu0 0
        %1098 = vmatprep.subr.bf16.mxu0 0
        %1099 = vmatpush1.bf16.msra.mxu0 0
        %1100 = vmatprep.subr.bf16.mxu0 0
        %1101 = vmatpush1.bf16.msra.mxu0 0
        %1102 = vmatprep.subr.bf16.mxu0 0
        %1103 = vmatpush1.bf16.msra.mxu0 0
        %1104 = vmatprep.subr.bf16.mxu0 0
        %1105 = vmatpush1.bf16.msra.mxu0 0
        %1106 = vmatprep.subr.bf16.mxu0 0
        %1107 = vmatpush1.bf16.msra.mxu0 0
        %1108 = vmatprep.subr.bf16.mxu0 0
        %1109 = vmatpush1.bf16.msra.mxu0 %v1044
        %1110 = vmatprep.subr.bf16.mxu0 0
        %1111 = vmatpush2.bf16.msra.mxu0 0
        %1112 = vmatprep.subr.bf16.mxu0 0
        %1113 = vmatpush2.bf16.msra.mxu0 0
        %1114 = vmatprep.subr.bf16.mxu0 0
        %1115 = vmatpush2.bf16.msra.mxu0 0
        %1116 = vmatprep.subr.bf16.mxu0 0
        %1117 = vmatpush2.bf16.msra.mxu0 0
        %1118 = vmatprep.subr.bf16.mxu0 0
        %1119 = vmatpush2.bf16.msra.mxu0 0
        %1120 = vmatprep.subr.bf16.mxu0 0
        %1121 = vmatpush2.bf16.msra.mxu0 0
        %1122 = vmatprep.subr.bf16.mxu0 0
        %1123 = vmatpush2.bf16.msra.mxu0 0
        %1124 = vmatprep.subr.bf16.mxu0 0
        %1125 = vmatpush2.bf16.msra.mxu0 0
        %1126 = vmatprep.mubr.bf16.mxu0 0
        %1127 = vmatmul.mubr.bf16.gmra.mxu0 %v1047
        %v1128 = vpop.f32.mrf.mxu0
        %v1129 = vadd.f32 %v834, %v1128
        %v1130 = vpop.f32.mrf.mxu0
        %v1131 = vpop.f32.mrf.mxu0
        %v1132 = vadd.f32 %v837, %v1131
        %v1133 = vpop.f32.mrf.mxu0
        %1134 = vmatprep.mubr.bf16.mxu0 0
        %1135 = vmatmul.mubr.bf16.gmra.mxu0 %v1050
        %v1136 = vpop.f32.mrf.mxu0
        %v1137 = vadd.f32 %v842, %v1136
        %v1138 = vpop.f32.mrf.mxu0
        %v1139 = vpop.f32.mrf.mxu0
        %v1140 = vadd.f32 %v845, %v1139
        %v1141 = vpop.f32.mrf.mxu0
        %1142 = vmatprep.mubr.bf16.mxu0 0
        %1143 = vmatmul.mubr.bf16.gmra.mxu0 %v1053
        %v1144 = vpop.f32.mrf.mxu0
        %v1145 = vadd.f32 %v850, %v1144
        %v1146 = vpop.f32.mrf.mxu0
        %v1147 = vpop.f32.mrf.mxu0
        %v1148 = vadd.f32 %v853, %v1147
        %v1149 = vpop.f32.mrf.mxu0
        %1150 = vmatprep.mubr.bf16.mxu0 0
        %1151 = vmatmul.mubr.bf16.gmra.mxu0 %v1056
        %v1152 = vpop.f32.mrf.mxu0
        %v1153 = vadd.f32 %v858, %v1152
        %v1154 = vpop.f32.mrf.mxu0
        %v1155 = vpop.f32.mrf.mxu0
        %v1156 = vadd.f32 %v861, %v1155
        %v1157 = vpop.f32.mrf.mxu0
        %1158 = vmatprep.mubr.bf16.mxu0 0
        %1159 = vmatmul.mubr.bf16.gmra.mxu0 %v1059
        %v1160 = vpop.f32.mrf.mxu0
        %v1161 = vadd.f32 %v866, %v1160
        %v1162 = vpop.f32.mrf.mxu0
        %v1163 = vpop.f32.mrf.mxu0
        %v1164 = vadd.f32 %v869, %v1163
        %v1165 = vpop.f32.mrf.mxu0
        %1166 = vmatprep.mubr.bf16.mxu0 0
        %1167 = vmatmul.mubr.bf16.gmra.mxu0 %v1062
        %v1168 = vpop.f32.mrf.mxu0
        %v1169 = vadd.f32 %v874, %v1168
        %v1170 = vpop.f32.mrf.mxu0
        %v1171 = vpop.f32.mrf.mxu0
        %v1172 = vadd.f32 %v877, %v1171
        %v1173 = vpop.f32.mrf.mxu0
        %1174 = vmatprep.mubr.bf16.mxu0 0
        %1175 = vmatmul.mubr.bf16.gmra.mxu0 %v1065
        %v1176 = vpop.f32.mrf.mxu0
        %v1177 = vadd.f32 %v882, %v1176
        %v1178 = vpop.f32.mrf.mxu0
        %v1179 = vpop.f32.mrf.mxu0
        %v1180 = vadd.f32 %v885, %v1179
        %v1181 = vpop.f32.mrf.mxu0
        %1182 = vmatprep.mubr.bf16.mxu0 0
        %1183 = vmatmul.mubr.bf16.gmra.mxu0 %v1068
        %v1184 = vpop.f32.mrf.mxu0
        %v1185 = vadd.f32 %v890, %v1184
        %v1186 = vpop.f32.mrf.mxu0
        %v1187 = vpop.f32.mrf.mxu0
        %v1188 = vadd.f32 %v893, %v1187
        %v1189 = vpop.f32.mrf.mxu0
        %1190 = vmatprep.mubr.bf16.mxu0 0
        %1191 = vmatmul.mubr.bf16.gmra.mxu0 %v1071
        %v1192 = vpop.f32.mrf.mxu0
        %v1193 = vadd.f32 %v898, %v1192
        %v1194 = vpop.f32.mrf.mxu0
        %v1195 = vpop.f32.mrf.mxu0
        %v1196 = vadd.f32 %v901, %v1195
        %v1197 = vpop.f32.mrf.mxu0
        %1198 = vmatprep.mubr.bf16.mxu0 0
        %1199 = vmatmul.mubr.bf16.gmra.mxu0 %v1074
        %v1200 = vpop.f32.mrf.mxu0
        %v1201 = vadd.f32 %v906, %v1200
        %v1202 = vpop.f32.mrf.mxu0
        %v1203 = vpop.f32.mrf.mxu0
        %v1204 = vadd.f32 %v909, %v1203
        %v1205 = vpop.f32.mrf.mxu0
        %1206 = vmatprep.mubr.bf16.mxu0 0
        %1207 = vmatmul.mubr.bf16.gmra.mxu0 %v1077
        %v1208 = vpop.f32.mrf.mxu0
        %v1209 = vadd.f32 %v914, %v1208
        %v1210 = vpop.f32.mrf.mxu0
        %v1211 = vpop.f32.mrf.mxu0
        %v1212 = vadd.f32 %v917, %v1211
        %v1213 = vpop.f32.mrf.mxu0
        %1214 = vmatprep.mubr.bf16.mxu0 0
        %1215 = vmatmul.mubr.bf16.gmra.mxu0 %v1080
        %v1216 = vpop.f32.mrf.mxu0
        %v1217 = vadd.f32 %v922, %v1216
        %v1218 = vpop.f32.mrf.mxu0
        %v1219 = vpop.f32.mrf.mxu0
        %v1220 = vadd.f32 %v925, %v1219
        %v1221 = vpop.f32.mrf.mxu0
        %1222 = vmatprep.mubr.bf16.mxu0 0
        %1223 = vmatmul.mubr.bf16.gmra.mxu0 %v1083
        %v1224 = vpop.f32.mrf.mxu0
        %v1225 = vadd.f32 %v930, %v1224
        %v1226 = vpop.f32.mrf.mxu0
        %v1227 = vpop.f32.mrf.mxu0
        %v1228 = vadd.f32 %v933, %v1227
        %v1229 = vpop.f32.mrf.mxu0
        %1230 = vmatprep.mubr.bf16.mxu0 0
        %1231 = vmatmul.mubr.bf16.gmra.mxu0 %v1086
        %v1232 = vpop.f32.mrf.mxu0
        %v1233 = vadd.f32 %v938, %v1232
        %v1234 = vpop.f32.mrf.mxu0
        %v1235 = vpop.f32.mrf.mxu0
        %v1236 = vadd.f32 %v941, %v1235
        %v1237 = vpop.f32.mrf.mxu0
        %1238 = vmatprep.mubr.bf16.mxu0 0
        %1239 = vmatmul.mubr.bf16.gmra.mxu0 %v1089
        %v1240 = vpop.f32.mrf.mxu0
        %v1241 = vadd.f32 %v946, %v1240
        %v1242 = vpop.f32.mrf.mxu0
        %v1243 = vpop.f32.mrf.mxu0
        %v1244 = vadd.f32 %v949, %v1243
        %v1245 = vpop.f32.mrf.mxu0
        %1246 = vmatprep.mubr.bf16.mxu0 0
        %1247 = vmatmul.mubr.bf16.gmra.mxu0 %v1092
        %v1248 = vpop.f32.mrf.mxu0
        %v1249 = vadd.f32 %v954, %v1248
        %v1250 = vpop.f32.mrf.mxu0
        %v1251 = vpop.f32.mrf.mxu0
        %v1252 = vadd.f32 %v957, %v1251
        %v1253 = vpop.f32.mrf.mxu0
        %1254 = vdwg.mxu0
        %v1255 = vld [vmem:[%s244] sm:$0xe]
        %v1256 = vld [vmem:[%s244 + $0xc] sm:$0xe]
        %v1257 = vld [vmem:[%s244 + $0x18] sm:$0xe]
        %v1258 = vld [vmem:[%s244 + $0x24] sm:$0xe]
        %v1259 = vld [vmem:[%s244 + $0x30] sm:$0xe]
        %v1260 = vld [vmem:[%s244 + $0x3c] sm:$0xe]
        %v1261 = vld [vmem:[%s244 + $0x48] sm:$0xe]
        %v1262 = vld [vmem:[%s244 + $0x54] sm:$0xe]
        %v1263 = vld [vmem:[%s244 + $0x60] sm:$0xe]
        %v1264 = vld [vmem:[%s244 + $0x6c] sm:$0xe]
        %v1265 = vld [vmem:[%s244 + $0x78] sm:$0xe]
        %v1266 = vld [vmem:[%s244 + $0x84] sm:$0xe]
        %v1267 = vld [vmem:[%s244 + $0x90] sm:$0xe]
        %v1268 = vld [vmem:[%s244 + $0x9c] sm:$0xe]
        %v1269 = vld [vmem:[%s244 + $0xa8] sm:$0xe]
        %v1270 = vld [vmem:[%s244 + $0xb4] sm:$0xe]
        %vm1303 = vcmask 1042432
        %vm1304 = vcmask 1046532
        %vm1305 = vmor %vm1303, %vm1304
        %v1306 = vrot.slane %v1255, 5
        %v1307 = vrot.slane %v1306, 4
        %v1308 = vrot.slane %v257, 5
        %v1309 = vsel %vm1305, %v1307, %v1308
        %v1310 = vrot.slane %v1308, 4
        %v1311 = vrot.slane %v290, 5
        %v1312 = vsel %vm1305, %v1310, %v1311
        %v1313 = vrot.slane %v1256, 5
        %v1314 = vrot.slane %v1313, 4
        %v1315 = vrot.slane %v259, 5
        %v1316 = vsel %vm1305, %v1314, %v1315
        %v1317 = vrot.slane %v1315, 4
        %v1318 = vrot.slane %v291, 5
        %v1319 = vsel %vm1305, %v1317, %v1318
        %v1320 = vrot.slane %v1257, 5
        %v1321 = vrot.slane %v1320, 4
        %v1322 = vrot.slane %v261, 5
        %v1323 = vsel %vm1305, %v1321, %v1322
        %v1324 = vrot.slane %v1322, 4
        %v1325 = vrot.slane %v292, 5
        %v1326 = vsel %vm1305, %v1324, %v1325
        %v1327 = vrot.slane %v1258, 5
        %v1328 = vrot.slane %v1327, 4
        %v1329 = vrot.slane %v263, 5
        %v1330 = vsel %vm1305, %v1328, %v1329
        %v1331 = vrot.slane %v1329, 4
        %v1332 = vrot.slane %v293, 5
        %v1333 = vsel %vm1305, %v1331, %v1332
        %v1334 = vrot.slane %v1259, 5
        %v1335 = vrot.slane %v1334, 4
        %v1336 = vrot.slane %v265, 5
        %v1337 = vsel %vm1305, %v1335, %v1336
        %v1338 = vrot.slane %v1336, 4
        %v1339 = vrot.slane %v294, 5
        %v1340 = vsel %vm1305, %v1338, %v1339
        %v1341 = vrot.slane %v1260, 5
        %v1342 = vrot.slane %v1341, 4
        %v1343 = vrot.slane %v267, 5
        %v1344 = vsel %vm1305, %v1342, %v1343
        %v1345 = vrot.slane %v1343, 4
        %v1346 = vrot.slane %v295, 5
        %v1347 = vsel %vm1305, %v1345, %v1346
        %v1348 = vrot.slane %v1261, 5
        %v1349 = vrot.slane %v1348, 4
        %v1350 = vrot.slane %v269, 5
        %v1351 = vsel %vm1305, %v1349, %v1350
        %v1352 = vrot.slane %v1350, 4
        %v1353 = vrot.slane %v296, 5
        %v1354 = vsel %vm1305, %v1352, %v1353
        %v1355 = vrot.slane %v1262, 5
        %v1356 = vrot.slane %v1355, 4
        %v1357 = vrot.slane %v271, 5
        %v1358 = vsel %vm1305, %v1356, %v1357
        %v1359 = vrot.slane %v1357, 4
        %v1360 = vrot.slane %v297, 5
        %v1361 = vsel %vm1305, %v1359, %v1360
        %v1362 = vrot.slane %v1263, 5
        %v1363 = vrot.slane %v1362, 4
        %v1364 = vrot.slane %v273, 5
        %v1365 = vsel %vm1305, %v1363, %v1364
        %v1366 = vrot.slane %v1364, 4
        %v1367 = vrot.slane %v298, 5
        %v1368 = vsel %vm1305, %v1366, %v1367
        %v1369 = vrot.slane %v1264, 5
        %v1370 = vrot.slane %v1369, 4
        %v1371 = vrot.slane %v275, 5
        %v1372 = vsel %vm1305, %v1370, %v1371
        %v1373 = vrot.slane %v1371, 4
        %v1374 = vrot.slane %v299, 5
        %v1375 = vsel %vm1305, %v1373, %v1374
        %v1376 = vrot.slane %v1265, 5
        %v1377 = vrot.slane %v1376, 4
        %v1378 = vrot.slane %v277, 5
        %v1379 = vsel %vm1305, %v1377, %v1378
        %v1380 = vrot.slane %v1378, 4
        %v1381 = vrot.slane %v300, 5
        %v1382 = vsel %vm1305, %v1380, %v1381
        %v1383 = vrot.slane %v1266, 5
        %v1384 = vrot.slane %v1383, 4
        %v1385 = vrot.slane %v279, 5
        %v1386 = vsel %vm1305, %v1384, %v1385
        %v1387 = vrot.slane %v1385, 4
        %v1388 = vrot.slane %v301, 5
        %v1389 = vsel %vm1305, %v1387, %v1388
        %v1390 = vrot.slane %v1267, 5
        %v1391 = vrot.slane %v1390, 4
        %v1392 = vrot.slane %v281, 5
        %v1393 = vsel %vm1305, %v1391, %v1392
        %v1394 = vrot.slane %v1392, 4
        %v1395 = vrot.slane %v302, 5
        %v1396 = vsel %vm1305, %v1394, %v1395
        %v1397 = vrot.slane %v1268, 5
        %v1398 = vrot.slane %v1397, 4
        %v1399 = vrot.slane %v283, 5
        %v1400 = vsel %vm1305, %v1398, %v1399
        %v1401 = vrot.slane %v1399, 4
        %v1402 = vrot.slane %v303, 5
        %v1403 = vsel %vm1305, %v1401, %v1402
        %v1404 = vrot.slane %v1269, 5
        %v1405 = vrot.slane %v1404, 4
        %v1406 = vrot.slane %v285, 5
        %v1407 = vsel %vm1305, %v1405, %v1406
        %v1408 = vrot.slane %v1406, 4
        %v1409 = vrot.slane %v304, 5
        %v1410 = vsel %vm1305, %v1408, %v1409
        %v1411 = vrot.slane %v1270, 5
        %v1412 = vrot.slane %v1411, 4
        %v1413 = vrot.slane %v287, 5
        %v1414 = vsel %vm1305, %v1412, %v1413
        %v1415 = vrot.slane %v1413, 4
        %v1416 = vrot.slane %v305, 5
        %v1417 = vsel %vm1305, %v1415, %v1416
        %s1418 = scalar_lea.vmem %s248, 16
        %v1419 = vld [vmem:[%s1418] sm:$0xf]
        %v1420 = vld [vmem:[%s1418 + $0x4] sm:$0xf]
        %v1421 = vunpack.c.l.b16 %v1309
        %v1422 = vunpack.c.l.b16 %v1312
        %v1423 = vunpack.c.l.b16 %v1316
        %v1424 = vunpack.c.l.b16 %v1319
        %v1425 = vunpack.c.l.b16 %v1323
        %v1426 = vunpack.c.l.b16 %v1326
        %v1427 = vunpack.c.l.b16 %v1330
        %v1428 = vunpack.c.l.b16 %v1333
        %v1429 = vunpack.c.l.b16 %v1337
        %v1430 = vunpack.c.l.b16 %v1340
        %v1431 = vunpack.c.l.b16 %v1344
        %v1432 = vunpack.c.l.b16 %v1347
        %v1433 = vunpack.c.l.b16 %v1351
        %v1434 = vunpack.c.l.b16 %v1354
        %v1435 = vunpack.c.l.b16 %v1358
        %v1436 = vunpack.c.l.b16 %v1361
        %v1437 = vunpack.c.l.b16 %v1365
        %v1438 = vunpack.c.l.b16 %v1368
        %v1439 = vunpack.c.l.b16 %v1372
        %v1440 = vunpack.c.l.b16 %v1375
        %v1441 = vunpack.c.l.b16 %v1379
        %v1442 = vunpack.c.l.b16 %v1382
        %v1443 = vunpack.c.l.b16 %v1386
        %v1444 = vunpack.c.l.b16 %v1389
        %v1445 = vunpack.c.l.b16 %v1393
        %v1446 = vunpack.c.l.b16 %v1396
        %v1447 = vunpack.c.l.b16 %v1400
        %v1448 = vunpack.c.l.b16 %v1403
        %v1449 = vunpack.c.l.b16 %v1407
        %v1450 = vunpack.c.l.b16 %v1410
        %v1451 = vunpack.c.l.b16 %v1414
        %v1452 = vunpack.c.l.b16 %v1417
        %v1453 = vpack.c.b16 %v1422, %v1421
        %v1454 = vpack.c.b16 %v1424, %v1423
        %v1455 = vpack.c.b16 %v1426, %v1425
        %v1456 = vpack.c.b16 %v1428, %v1427
        %v1457 = vpack.c.b16 %v1430, %v1429
        %v1458 = vpack.c.b16 %v1432, %v1431
        %v1459 = vpack.c.b16 %v1434, %v1433
        %v1460 = vpack.c.b16 %v1436, %v1435
        %v1461 = vpack.c.b16 %v1438, %v1437
        %v1462 = vpack.c.b16 %v1440, %v1439
        %v1463 = vpack.c.b16 %v1442, %v1441
        %v1464 = vpack.c.b16 %v1444, %v1443
        %v1465 = vpack.c.b16 %v1446, %v1445
        %v1466 = vpack.c.b16 %v1448, %v1447
        %v1467 = vpack.c.b16 %v1450, %v1449
        %v1468 = vpack.c.b16 %v1452, %v1451
        %v1471 = vunpack.c.l.b16 %v1419
        %v1472 = vunpack.c.l.b16 %v1420
        %v1473 = vpack.c.b16 %v1472, %v1471
        %v1476 = vsel %vm750, %v1453, 0
        %v1479 = vsel %vm750, %v1454, 0
        %v1482 = vsel %vm750, %v1455, 0
        %v1485 = vsel %vm750, %v1456, 0
        %v1488 = vsel %vm750, %v1457, 0
        %v1491 = vsel %vm750, %v1458, 0
        %v1494 = vsel %vm750, %v1459, 0
        %v1497 = vsel %vm750, %v1460, 0
        %v1500 = vsel %vm750, %v1461, 0
        %v1503 = vsel %vm750, %v1462, 0
        %v1506 = vsel %vm750, %v1463, 0
        %v1509 = vsel %vm750, %v1464, 0
        %v1512 = vsel %vm750, %v1465, 0
        %v1515 = vsel %vm750, %v1466, 0
        %v1518 = vsel %vm750, %v1467, 0
        %v1521 = vsel %vm750, %v1468, 0
        %1523 = vmatprep.subr.bf16.mxu0 0
        %1524 = vmatpush1.bf16.msra.mxu0 0
        %1525 = vmatprep.subr.bf16.mxu0 0
        %1526 = vmatpush1.bf16.msra.mxu0 0
        %1527 = vmatprep.subr.bf16.mxu0 0
        %1528 = vmatpush1.bf16.msra.mxu0 0
        %1529 = vmatprep.subr.bf16.mxu0 0
        %1530 = vmatpush1.bf16.msra.mxu0 0
        %1531 = vmatprep.subr.bf16.mxu0 0
        %1532 = vmatpush1.bf16.msra.mxu0 0
        %1533 = vmatprep.subr.bf16.mxu0 0
        %1534 = vmatpush1.bf16.msra.mxu0 0
        %1535 = vmatprep.subr.bf16.mxu0 0
        %1536 = vmatpush1.bf16.msra.mxu0 0
        %1537 = vmatprep.subr.bf16.mxu0 0
        %1538 = vmatpush1.bf16.msra.mxu0 %v1473
        %1539 = vmatprep.subr.bf16.mxu0 0
        %1540 = vmatpush2.bf16.msra.mxu0 0
        %1541 = vmatprep.subr.bf16.mxu0 0
        %1542 = vmatpush2.bf16.msra.mxu0 0
        %1543 = vmatprep.subr.bf16.mxu0 0
        %1544 = vmatpush2.bf16.msra.mxu0 0
        %1545 = vmatprep.subr.bf16.mxu0 0
        %1546 = vmatpush2.bf16.msra.mxu0 0
        %1547 = vmatprep.subr.bf16.mxu0 0
        %1548 = vmatpush2.bf16.msra.mxu0 0
        %1549 = vmatprep.subr.bf16.mxu0 0
        %1550 = vmatpush2.bf16.msra.mxu0 0
        %1551 = vmatprep.subr.bf16.mxu0 0
        %1552 = vmatpush2.bf16.msra.mxu0 0
        %1553 = vmatprep.subr.bf16.mxu0 0
        %1554 = vmatpush2.bf16.msra.mxu0 0
        %1555 = vmatprep.mubr.bf16.mxu0 0
        %1556 = vmatmul.mubr.bf16.gmra.mxu0 %v1476
        %v1557 = vpop.f32.mrf.mxu0
        %v1558 = vadd.f32 0.0, %v1557
        %v1559 = vpop.f32.mrf.mxu0
        %v1560 = vpop.f32.mrf.mxu0
        %v1561 = vadd.f32 0.0, %v1560
        %v1562 = vpop.f32.mrf.mxu0
        %1563 = vmatprep.mubr.bf16.mxu0 0
        %1564 = vmatmul.mubr.bf16.gmra.mxu0 %v1479
        %v1565 = vpop.f32.mrf.mxu0
        %v1566 = vadd.f32 0.0, %v1565
        %v1567 = vpop.f32.mrf.mxu0
        %v1568 = vpop.f32.mrf.mxu0
        %v1569 = vadd.f32 0.0, %v1568
        %v1570 = vpop.f32.mrf.mxu0
        %1571 = vmatprep.mubr.bf16.mxu0 0
        %1572 = vmatmul.mubr.bf16.gmra.mxu0 %v1482
        %v1573 = vpop.f32.mrf.mxu0
        %v1574 = vadd.f32 0.0, %v1573
        %v1575 = vpop.f32.mrf.mxu0
        %v1576 = vpop.f32.mrf.mxu0
        %v1577 = vadd.f32 0.0, %v1576
        %v1578 = vpop.f32.mrf.mxu0
        %1579 = vmatprep.mubr.bf16.mxu0 0
        %1580 = vmatmul.mubr.bf16.gmra.mxu0 %v1485
        %v1581 = vpop.f32.mrf.mxu0
        %v1582 = vadd.f32 0.0, %v1581
        %v1583 = vpop.f32.mrf.mxu0
        %v1584 = vpop.f32.mrf.mxu0
        %v1585 = vadd.f32 0.0, %v1584
        %v1586 = vpop.f32.mrf.mxu0
        %1587 = vmatprep.mubr.bf16.mxu0 0
        %1588 = vmatmul.mubr.bf16.gmra.mxu0 %v1488
        %v1589 = vpop.f32.mrf.mxu0
        %v1590 = vadd.f32 0.0, %v1589
        %v1591 = vpop.f32.mrf.mxu0
        %v1592 = vpop.f32.mrf.mxu0
        %v1593 = vadd.f32 0.0, %v1592
        %v1594 = vpop.f32.mrf.mxu0
        %1595 = vmatprep.mubr.bf16.mxu0 0
        %1596 = vmatmul.mubr.bf16.gmra.mxu0 %v1491
        %v1597 = vpop.f32.mrf.mxu0
        %v1598 = vadd.f32 0.0, %v1597
        %v1599 = vpop.f32.mrf.mxu0
        %v1600 = vpop.f32.mrf.mxu0
        %v1601 = vadd.f32 0.0, %v1600
        %v1602 = vpop.f32.mrf.mxu0
        %1603 = vmatprep.mubr.bf16.mxu0 0
        %1604 = vmatmul.mubr.bf16.gmra.mxu0 %v1494
        %v1605 = vpop.f32.mrf.mxu0
        %v1606 = vadd.f32 0.0, %v1605
        %v1607 = vpop.f32.mrf.mxu0
        %v1608 = vpop.f32.mrf.mxu0
        %v1609 = vadd.f32 0.0, %v1608
        %v1610 = vpop.f32.mrf.mxu0
        %1611 = vmatprep.mubr.bf16.mxu0 0
        %1612 = vmatmul.mubr.bf16.gmra.mxu0 %v1497
        %v1613 = vpop.f32.mrf.mxu0
        %v1614 = vadd.f32 0.0, %v1613
        %v1615 = vpop.f32.mrf.mxu0
        %v1616 = vpop.f32.mrf.mxu0
        %v1617 = vadd.f32 0.0, %v1616
        %v1618 = vpop.f32.mrf.mxu0
        %1619 = vmatprep.mubr.bf16.mxu0 0
        %1620 = vmatmul.mubr.bf16.gmra.mxu0 %v1500
        %v1621 = vpop.f32.mrf.mxu0
        %v1622 = vadd.f32 0.0, %v1621
        %v1623 = vpop.f32.mrf.mxu0
        %v1624 = vpop.f32.mrf.mxu0
        %v1625 = vadd.f32 0.0, %v1624
        %v1626 = vpop.f32.mrf.mxu0
        %1627 = vmatprep.mubr.bf16.mxu0 0
        %1628 = vmatmul.mubr.bf16.gmra.mxu0 %v1503
        %v1629 = vpop.f32.mrf.mxu0
        %v1630 = vadd.f32 0.0, %v1629
        %v1631 = vpop.f32.mrf.mxu0
        %v1632 = vpop.f32.mrf.mxu0
        %v1633 = vadd.f32 0.0, %v1632
        %v1634 = vpop.f32.mrf.mxu0
        %1635 = vmatprep.mubr.bf16.mxu0 0
        %1636 = vmatmul.mubr.bf16.gmra.mxu0 %v1506
        %v1637 = vpop.f32.mrf.mxu0
        %v1638 = vadd.f32 0.0, %v1637
        %v1639 = vpop.f32.mrf.mxu0
        %v1640 = vpop.f32.mrf.mxu0
        %v1641 = vadd.f32 0.0, %v1640
        %v1642 = vpop.f32.mrf.mxu0
        %1643 = vmatprep.mubr.bf16.mxu0 0
        %1644 = vmatmul.mubr.bf16.gmra.mxu0 %v1509
        %v1645 = vpop.f32.mrf.mxu0
        %v1646 = vadd.f32 0.0, %v1645
        %v1647 = vpop.f32.mrf.mxu0
        %v1648 = vpop.f32.mrf.mxu0
        %v1649 = vadd.f32 0.0, %v1648
        %v1650 = vpop.f32.mrf.mxu0
        %1651 = vmatprep.mubr.bf16.mxu0 0
        %1652 = vmatmul.mubr.bf16.gmra.mxu0 %v1512
        %v1653 = vpop.f32.mrf.mxu0
        %v1654 = vadd.f32 0.0, %v1653
        %v1655 = vpop.f32.mrf.mxu0
        %v1656 = vpop.f32.mrf.mxu0
        %v1657 = vadd.f32 0.0, %v1656
        %v1658 = vpop.f32.mrf.mxu0
        %1659 = vmatprep.mubr.bf16.mxu0 0
        %1660 = vmatmul.mubr.bf16.gmra.mxu0 %v1515
        %v1661 = vpop.f32.mrf.mxu0
        %v1662 = vadd.f32 0.0, %v1661
        %v1663 = vpop.f32.mrf.mxu0
        %v1664 = vpop.f32.mrf.mxu0
        %v1665 = vadd.f32 0.0, %v1664
        %v1666 = vpop.f32.mrf.mxu0
        %1667 = vmatprep.mubr.bf16.mxu0 0
        %1668 = vmatmul.mubr.bf16.gmra.mxu0 %v1518
        %v1669 = vpop.f32.mrf.mxu0
        %v1670 = vadd.f32 0.0, %v1669
        %v1671 = vpop.f32.mrf.mxu0
        %v1672 = vpop.f32.mrf.mxu0
        %v1673 = vadd.f32 0.0, %v1672
        %v1674 = vpop.f32.mrf.mxu0
        %1675 = vmatprep.mubr.bf16.mxu0 0
        %1676 = vmatmul.mubr.bf16.gmra.mxu0 %v1521
        %v1677 = vpop.f32.mrf.mxu0
        %v1678 = vadd.f32 0.0, %v1677
        %v1679 = vpop.f32.mrf.mxu0
        %v1680 = vpop.f32.mrf.mxu0
        %v1681 = vadd.f32 0.0, %v1680
        %v1682 = vpop.f32.mrf.mxu0
        %1683 = vdwg.mxu0
        %v1684 = vadd.f32 %v1129, %v1558
        %v1685 = vadd.f32 %v1132, %v1561
        %v1686 = vadd.f32 %v1137, %v1566
        %v1687 = vadd.f32 %v1140, %v1569
        %v1688 = vadd.f32 %v1145, %v1574
        %v1689 = vadd.f32 %v1148, %v1577
        %v1690 = vadd.f32 %v1153, %v1582
        %v1691 = vadd.f32 %v1156, %v1585
        %v1692 = vadd.f32 %v1161, %v1590
        %v1693 = vadd.f32 %v1164, %v1593
        %v1694 = vadd.f32 %v1169, %v1598
        %v1695 = vadd.f32 %v1172, %v1601
        %v1696 = vadd.f32 %v1177, %v1606
        %v1697 = vadd.f32 %v1180, %v1609
        %v1698 = vadd.f32 %v1185, %v1614
        %v1699 = vadd.f32 %v1188, %v1617
        %v1700 = vadd.f32 %v1193, %v1622
        %v1701 = vadd.f32 %v1196, %v1625
        %v1702 = vadd.f32 %v1201, %v1630
        %v1703 = vadd.f32 %v1204, %v1633
        %v1704 = vadd.f32 %v1209, %v1638
        %v1705 = vadd.f32 %v1212, %v1641
        %v1706 = vadd.f32 %v1217, %v1646
        %v1707 = vadd.f32 %v1220, %v1649
        %v1708 = vadd.f32 %v1225, %v1654
        %v1709 = vadd.f32 %v1228, %v1657
        %v1710 = vadd.f32 %v1233, %v1662
        %v1711 = vadd.f32 %v1236, %v1665
        %v1712 = vadd.f32 %v1241, %v1670
        %v1713 = vadd.f32 %v1244, %v1673
        %v1714 = vadd.f32 %v1249, %v1678
        %v1715 = vadd.f32 %v1252, %v1681
        %s1716 = scalar_lea.vmem %s244, 12
        %v1717 = vld [vmem:[%s1716] sm:$0xf]
        %v1718 = vld [vmem:[%s1716 + $0x4] sm:$0xf]
        %v1719 = vld [vmem:[%s1716 + $0xc] sm:$0xf]
        %v1720 = vld [vmem:[%s1716 + $0x10] sm:$0xf]
        %v1721 = vld [vmem:[%s1716 + $0x18] sm:$0xf]
        %v1722 = vld [vmem:[%s1716 + $0x1c] sm:$0xf]
        %v1723 = vld [vmem:[%s1716 + $0x24] sm:$0xf]
        %v1724 = vld [vmem:[%s1716 + $0x28] sm:$0xf]
        %v1725 = vld [vmem:[%s1716 + $0x30] sm:$0xf]
        %v1726 = vld [vmem:[%s1716 + $0x34] sm:$0xf]
        %v1727 = vld [vmem:[%s1716 + $0x3c] sm:$0xf]
        %v1728 = vld [vmem:[%s1716 + $0x40] sm:$0xf]
        %v1729 = vld [vmem:[%s1716 + $0x48] sm:$0xf]
        %v1730 = vld [vmem:[%s1716 + $0x4c] sm:$0xf]
        %v1731 = vld [vmem:[%s1716 + $0x54] sm:$0xf]
        %v1732 = vld [vmem:[%s1716 + $0x58] sm:$0xf]
        %v1733 = vld [vmem:[%s1716 + $0x60] sm:$0xf]
        %v1734 = vld [vmem:[%s1716 + $0x64] sm:$0xf]
        %v1735 = vld [vmem:[%s1716 + $0x6c] sm:$0xf]
        %v1736 = vld [vmem:[%s1716 + $0x70] sm:$0xf]
        %v1737 = vld [vmem:[%s1716 + $0x78] sm:$0xf]
        %v1738 = vld [vmem:[%s1716 + $0x7c] sm:$0xf]
        %v1739 = vld [vmem:[%s1716 + $0x84] sm:$0xf]
        %v1740 = vld [vmem:[%s1716 + $0x88] sm:$0xf]
        %v1741 = vld [vmem:[%s1716 + $0x90] sm:$0xf]
        %v1742 = vld [vmem:[%s1716 + $0x94] sm:$0xf]
        %v1743 = vld [vmem:[%s1716 + $0x9c] sm:$0xf]
        %v1744 = vld [vmem:[%s1716 + $0xa0] sm:$0xf]
        %v1745 = vld [vmem:[%s1716 + $0xa8] sm:$0xf]
        %v1746 = vld [vmem:[%s1716 + $0xac] sm:$0xf]
        %v1747 = vld [vmem:[%s1716 + $0xb4] sm:$0xf]
        %v1748 = vld [vmem:[%s1716 + $0xb8] sm:$0xf]
        %s1749 = scalar_lea.vmem %s248, 24
        %v1750 = vld [vmem:[%s1749] sm:$0xf]
        %v1751 = vld [vmem:[%s1749 + $0x4] sm:$0xf]
        %v1784 = vunpack.c.l.b16 %v1717
        %v1785 = vunpack.c.l.b16 %v1718
        %v1786 = vunpack.c.l.b16 %v1719
        %v1787 = vunpack.c.l.b16 %v1720
        %v1788 = vunpack.c.l.b16 %v1721
        %v1789 = vunpack.c.l.b16 %v1722
        %v1790 = vunpack.c.l.b16 %v1723
        %v1791 = vunpack.c.l.b16 %v1724
        %v1792 = vunpack.c.l.b16 %v1725
        %v1793 = vunpack.c.l.b16 %v1726
        %v1794 = vunpack.c.l.b16 %v1727
        %v1795 = vunpack.c.l.b16 %v1728
        %v1796 = vunpack.c.l.b16 %v1729
        %v1797 = vunpack.c.l.b16 %v1730
        %v1798 = vunpack.c.l.b16 %v1731
        %v1799 = vunpack.c.l.b16 %v1732
        %v1800 = vunpack.c.l.b16 %v1733
        %v1801 = vunpack.c.l.b16 %v1734
        %v1802 = vunpack.c.l.b16 %v1735
        %v1803 = vunpack.c.l.b16 %v1736
        %v1804 = vunpack.c.l.b16 %v1737
        %v1805 = vunpack.c.l.b16 %v1738
        %v1806 = vunpack.c.l.b16 %v1739
        %v1807 = vunpack.c.l.b16 %v1740
        %v1808 = vunpack.c.l.b16 %v1741
        %v1809 = vunpack.c.l.b16 %v1742
        %v1810 = vunpack.c.l.b16 %v1743
        %v1811 = vunpack.c.l.b16 %v1744
        %v1812 = vunpack.c.l.b16 %v1745
        %v1813 = vunpack.c.l.b16 %v1746
        %v1814 = vunpack.c.l.b16 %v1747
        %v1815 = vunpack.c.l.b16 %v1748
        %v1816 = vpack.c.b16 %v1785, %v1784
        %v1817 = vpack.c.b16 %v1787, %v1786
        %v1818 = vpack.c.b16 %v1789, %v1788
        %v1819 = vpack.c.b16 %v1791, %v1790
        %v1820 = vpack.c.b16 %v1793, %v1792
        %v1821 = vpack.c.b16 %v1795, %v1794
        %v1822 = vpack.c.b16 %v1797, %v1796
        %v1823 = vpack.c.b16 %v1799, %v1798
        %v1824 = vpack.c.b16 %v1801, %v1800
        %v1825 = vpack.c.b16 %v1803, %v1802
        %v1826 = vpack.c.b16 %v1805, %v1804
        %v1827 = vpack.c.b16 %v1807, %v1806
        %v1828 = vpack.c.b16 %v1809, %v1808
        %v1829 = vpack.c.b16 %v1811, %v1810
        %v1830 = vpack.c.b16 %v1813, %v1812
        %v1831 = vpack.c.b16 %v1815, %v1814
        %v1834 = vunpack.c.l.b16 %v1750
        %v1835 = vunpack.c.l.b16 %v1751
        %v1836 = vpack.c.b16 %v1835, %v1834
        %v1839 = vsel %vm750, %v1816, 0
        %v1842 = vsel %vm750, %v1817, 0
        %v1845 = vsel %vm750, %v1818, 0
        %v1848 = vsel %vm750, %v1819, 0
        %v1851 = vsel %vm750, %v1820, 0
        %v1854 = vsel %vm750, %v1821, 0
        %v1857 = vsel %vm750, %v1822, 0
        %v1860 = vsel %vm750, %v1823, 0
        %v1863 = vsel %vm750, %v1824, 0
        %v1866 = vsel %vm750, %v1825, 0
        %v1869 = vsel %vm750, %v1826, 0
        %v1872 = vsel %vm750, %v1827, 0
        %v1875 = vsel %vm750, %v1828, 0
        %v1878 = vsel %vm750, %v1829, 0
        %v1881 = vsel %vm750, %v1830, 0
        %v1884 = vsel %vm750, %v1831, 0
        %1886 = vmatprep.subr.bf16.mxu0 0
        %1887 = vmatpush1.bf16.msra.mxu0 0
        %1888 = vmatprep.subr.bf16.mxu0 0
        %1889 = vmatpush1.bf16.msra.mxu0 0
        %1890 = vmatprep.subr.bf16.mxu0 0
        %1891 = vmatpush1.bf16.msra.mxu0 0
        %1892 = vmatprep.subr.bf16.mxu0 0
        %1893 = vmatpush1.bf16.msra.mxu0 0
        %1894 = vmatprep.subr.bf16.mxu0 0
        %1895 = vmatpush1.bf16.msra.mxu0 0
        %1896 = vmatprep.subr.bf16.mxu0 0
        %1897 = vmatpush1.bf16.msra.mxu0 0
        %1898 = vmatprep.subr.bf16.mxu0 0
        %1899 = vmatpush1.bf16.msra.mxu0 0
        %1900 = vmatprep.subr.bf16.mxu0 0
        %1901 = vmatpush1.bf16.msra.mxu0 %v1836
        %1902 = vmatprep.subr.bf16.mxu0 0
        %1903 = vmatpush2.bf16.msra.mxu0 0
        %1904 = vmatprep.subr.bf16.mxu0 0
        %1905 = vmatpush2.bf16.msra.mxu0 0
        %1906 = vmatprep.subr.bf16.mxu0 0
        %1907 = vmatpush2.bf16.msra.mxu0 0
        %1908 = vmatprep.subr.bf16.mxu0 0
        %1909 = vmatpush2.bf16.msra.mxu0 0
        %1910 = vmatprep.subr.bf16.mxu0 0
        %1911 = vmatpush2.bf16.msra.mxu0 0
        %1912 = vmatprep.subr.bf16.mxu0 0
        %1913 = vmatpush2.bf16.msra.mxu0 0
        %1914 = vmatprep.subr.bf16.mxu0 0
        %1915 = vmatpush2.bf16.msra.mxu0 0
        %1916 = vmatprep.subr.bf16.mxu0 0
        %1917 = vmatpush2.bf16.msra.mxu0 0
        %1918 = vmatprep.mubr.bf16.mxu0 0
        %1919 = vmatmul.mubr.bf16.gmra.mxu0 %v1839
        %v1920 = vpop.f32.mrf.mxu0
        %v1921 = vadd.f32 0.0, %v1920
        %v1922 = vpop.f32.mrf.mxu0
        %v1923 = vpop.f32.mrf.mxu0
        %v1924 = vadd.f32 0.0, %v1923
        %v1925 = vpop.f32.mrf.mxu0
        %1926 = vmatprep.mubr.bf16.mxu0 0
        %1927 = vmatmul.mubr.bf16.gmra.mxu0 %v1842
        %v1928 = vpop.f32.mrf.mxu0
        %v1929 = vadd.f32 0.0, %v1928
        %v1930 = vpop.f32.mrf.mxu0
        %v1931 = vpop.f32.mrf.mxu0
        %v1932 = vadd.f32 0.0, %v1931
        %v1933 = vpop.f32.mrf.mxu0
        %1934 = vmatprep.mubr.bf16.mxu0 0
        %1935 = vmatmul.mubr.bf16.gmra.mxu0 %v1845
        %v1936 = vpop.f32.mrf.mxu0
        %v1937 = vadd.f32 0.0, %v1936
        %v1938 = vpop.f32.mrf.mxu0
        %v1939 = vpop.f32.mrf.mxu0
        %v1940 = vadd.f32 0.0, %v1939
        %v1941 = vpop.f32.mrf.mxu0
        %1942 = vmatprep.mubr.bf16.mxu0 0
        %1943 = vmatmul.mubr.bf16.gmra.mxu0 %v1848
        %v1944 = vpop.f32.mrf.mxu0
        %v1945 = vadd.f32 0.0, %v1944
        %v1946 = vpop.f32.mrf.mxu0
        %v1947 = vpop.f32.mrf.mxu0
        %v1948 = vadd.f32 0.0, %v1947
        %v1949 = vpop.f32.mrf.mxu0
        %1950 = vmatprep.mubr.bf16.mxu0 0
        %1951 = vmatmul.mubr.bf16.gmra.mxu0 %v1851
        %v1952 = vpop.f32.mrf.mxu0
        %v1953 = vadd.f32 0.0, %v1952
        %v1954 = vpop.f32.mrf.mxu0
        %v1955 = vpop.f32.mrf.mxu0
        %v1956 = vadd.f32 0.0, %v1955
        %v1957 = vpop.f32.mrf.mxu0
        %1958 = vmatprep.mubr.bf16.mxu0 0
        %1959 = vmatmul.mubr.bf16.gmra.mxu0 %v1854
        %v1960 = vpop.f32.mrf.mxu0
        %v1961 = vadd.f32 0.0, %v1960
        %v1962 = vpop.f32.mrf.mxu0
        %v1963 = vpop.f32.mrf.mxu0
        %v1964 = vadd.f32 0.0, %v1963
        %v1965 = vpop.f32.mrf.mxu0
        %1966 = vmatprep.mubr.bf16.mxu0 0
        %1967 = vmatmul.mubr.bf16.gmra.mxu0 %v1857
        %v1968 = vpop.f32.mrf.mxu0
        %v1969 = vadd.f32 0.0, %v1968
        %v1970 = vpop.f32.mrf.mxu0
        %v1971 = vpop.f32.mrf.mxu0
        %v1972 = vadd.f32 0.0, %v1971
        %v1973 = vpop.f32.mrf.mxu0
        %1974 = vmatprep.mubr.bf16.mxu0 0
        %1975 = vmatmul.mubr.bf16.gmra.mxu0 %v1860
        %v1976 = vpop.f32.mrf.mxu0
        %v1977 = vadd.f32 0.0, %v1976
        %v1978 = vpop.f32.mrf.mxu0
        %v1979 = vpop.f32.mrf.mxu0
        %v1980 = vadd.f32 0.0, %v1979
        %v1981 = vpop.f32.mrf.mxu0
        %1982 = vmatprep.mubr.bf16.mxu0 0
        %1983 = vmatmul.mubr.bf16.gmra.mxu0 %v1863
        %v1984 = vpop.f32.mrf.mxu0
        %v1985 = vadd.f32 0.0, %v1984
        %v1986 = vpop.f32.mrf.mxu0
        %v1987 = vpop.f32.mrf.mxu0
        %v1988 = vadd.f32 0.0, %v1987
        %v1989 = vpop.f32.mrf.mxu0
        %1990 = vmatprep.mubr.bf16.mxu0 0
        %1991 = vmatmul.mubr.bf16.gmra.mxu0 %v1866
        %v1992 = vpop.f32.mrf.mxu0
        %v1993 = vadd.f32 0.0, %v1992
        %v1994 = vpop.f32.mrf.mxu0
        %v1995 = vpop.f32.mrf.mxu0
        %v1996 = vadd.f32 0.0, %v1995
        %v1997 = vpop.f32.mrf.mxu0
        %1998 = vmatprep.mubr.bf16.mxu0 0
        %1999 = vmatmul.mubr.bf16.gmra.mxu0 %v1869
        %v2000 = vpop.f32.mrf.mxu0
        %v2001 = vadd.f32 0.0, %v2000
        %v2002 = vpop.f32.mrf.mxu0
        %v2003 = vpop.f32.mrf.mxu0
        %v2004 = vadd.f32 0.0, %v2003
        %v2005 = vpop.f32.mrf.mxu0
        %2006 = vmatprep.mubr.bf16.mxu0 0
        %2007 = vmatmul.mubr.bf16.gmra.mxu0 %v1872
        %v2008 = vpop.f32.mrf.mxu0
        %v2009 = vadd.f32 0.0, %v2008
        %v2010 = vpop.f32.mrf.mxu0
        %v2011 = vpop.f32.mrf.mxu0
        %v2012 = vadd.f32 0.0, %v2011
        %v2013 = vpop.f32.mrf.mxu0
        %2014 = vmatprep.mubr.bf16.mxu0 0
        %2015 = vmatmul.mubr.bf16.gmra.mxu0 %v1875
        %v2016 = vpop.f32.mrf.mxu0
        %v2017 = vadd.f32 0.0, %v2016
        %v2018 = vpop.f32.mrf.mxu0
        %v2019 = vpop.f32.mrf.mxu0
        %v2020 = vadd.f32 0.0, %v2019
        %v2021 = vpop.f32.mrf.mxu0
        %2022 = vmatprep.mubr.bf16.mxu0 0
        %2023 = vmatmul.mubr.bf16.gmra.mxu0 %v1878
        %v2024 = vpop.f32.mrf.mxu0
        %v2025 = vadd.f32 0.0, %v2024
        %v2026 = vpop.f32.mrf.mxu0
        %v2027 = vpop.f32.mrf.mxu0
        %v2028 = vadd.f32 0.0, %v2027
        %v2029 = vpop.f32.mrf.mxu0
        %2030 = vmatprep.mubr.bf16.mxu0 0
        %2031 = vmatmul.mubr.bf16.gmra.mxu0 %v1881
        %v2032 = vpop.f32.mrf.mxu0
        %v2033 = vadd.f32 0.0, %v2032
        %v2034 = vpop.f32.mrf.mxu0
        %v2035 = vpop.f32.mrf.mxu0
        %v2036 = vadd.f32 0.0, %v2035
        %v2037 = vpop.f32.mrf.mxu0
        %2038 = vmatprep.mubr.bf16.mxu0 0
        %2039 = vmatmul.mubr.bf16.gmra.mxu0 %v1884
        %v2040 = vpop.f32.mrf.mxu0
        %v2041 = vadd.f32 0.0, %v2040
        %v2042 = vpop.f32.mrf.mxu0
        %v2043 = vpop.f32.mrf.mxu0
        %v2044 = vadd.f32 0.0, %v2043
        %v2045 = vpop.f32.mrf.mxu0
        %2046 = vdwg.mxu0
        %v2047 = vadd.f32 %v1684, %v1921
        %v2048 = vadd.f32 %v1685, %v1924
        %v2049 = vadd.f32 %v1686, %v1929
        %v2050 = vadd.f32 %v1687, %v1932
        %v2051 = vadd.f32 %v1688, %v1937
        %v2052 = vadd.f32 %v1689, %v1940
        %v2053 = vadd.f32 %v1690, %v1945
        %v2054 = vadd.f32 %v1691, %v1948
        %v2055 = vadd.f32 %v1692, %v1953
        %v2056 = vadd.f32 %v1693, %v1956
        %v2057 = vadd.f32 %v1694, %v1961
        %v2058 = vadd.f32 %v1695, %v1964
        %v2059 = vadd.f32 %v1696, %v1969
        %v2060 = vadd.f32 %v1697, %v1972
        %v2061 = vadd.f32 %v1698, %v1977
        %v2062 = vadd.f32 %v1699, %v1980
        %v2063 = vadd.f32 %v1700, %v1985
        %v2064 = vadd.f32 %v1701, %v1988
        %v2065 = vadd.f32 %v1702, %v1993
        %v2066 = vadd.f32 %v1703, %v1996
        %v2067 = vadd.f32 %v1704, %v2001
        %v2068 = vadd.f32 %v1705, %v2004
        %v2069 = vadd.f32 %v1706, %v2009
        %v2070 = vadd.f32 %v1707, %v2012
        %v2071 = vadd.f32 %v1708, %v2017
        %v2072 = vadd.f32 %v1709, %v2020
        %v2073 = vadd.f32 %v1710, %v2025
        %v2074 = vadd.f32 %v1711, %v2028
        %v2075 = vadd.f32 %v1712, %v2033
        %v2076 = vadd.f32 %v1713, %v2036
        %v2077 = vadd.f32 %v1714, %v2041
        %v2078 = vadd.f32 %v1715, %v2044
        %v2079 = vld [vmem:[%s1716] sm:$0xf]
        %v2080 = vld [vmem:[%s1716 + $0x4] sm:$0xf]
        %v2081 = vld [vmem:[%s1716 + $0x8] sm:$0x1]
        %v2082 = vld [vmem:[%s1716 + $0xc] sm:$0xf]
        %v2083 = vld [vmem:[%s1716 + $0x10] sm:$0xf]
        %v2084 = vld [vmem:[%s1716 + $0x14] sm:$0x1]
        %v2085 = vld [vmem:[%s1716 + $0x18] sm:$0xf]
        %v2086 = vld [vmem:[%s1716 + $0x1c] sm:$0xf]
        %v2087 = vld [vmem:[%s1716 + $0x20] sm:$0x1]
        %v2088 = vld [vmem:[%s1716 + $0x24] sm:$0xf]
        %v2089 = vld [vmem:[%s1716 + $0x28] sm:$0xf]
        %v2090 = vld [vmem:[%s1716 + $0x2c] sm:$0x1]
        %v2091 = vld [vmem:[%s1716 + $0x30] sm:$0xf]
        %v2092 = vld [vmem:[%s1716 + $0x34] sm:$0xf]
        %v2093 = vld [vmem:[%s1716 + $0x38] sm:$0x1]
        %v2094 = vld [vmem:[%s1716 + $0x3c] sm:$0xf]
        %v2095 = vld [vmem:[%s1716 + $0x40] sm:$0xf]
        %v2096 = vld [vmem:[%s1716 + $0x44] sm:$0x1]
        %v2097 = vld [vmem:[%s1716 + $0x48] sm:$0xf]
        %v2098 = vld [vmem:[%s1716 + $0x4c] sm:$0xf]
        %v2099 = vld [vmem:[%s1716 + $0x50] sm:$0x1]
        %v2100 = vld [vmem:[%s1716 + $0x54] sm:$0xf]
        %v2101 = vld [vmem:[%s1716 + $0x58] sm:$0xf]
        %v2102 = vld [vmem:[%s1716 + $0x5c] sm:$0x1]
        %v2103 = vld [vmem:[%s1716 + $0x60] sm:$0xf]
        %v2104 = vld [vmem:[%s1716 + $0x64] sm:$0xf]
        %v2105 = vld [vmem:[%s1716 + $0x68] sm:$0x1]
        %v2106 = vld [vmem:[%s1716 + $0x6c] sm:$0xf]
        %v2107 = vld [vmem:[%s1716 + $0x70] sm:$0xf]
        %v2108 = vld [vmem:[%s1716 + $0x74] sm:$0x1]
        %v2109 = vld [vmem:[%s1716 + $0x78] sm:$0xf]
        %v2110 = vld [vmem:[%s1716 + $0x7c] sm:$0xf]
        %v2111 = vld [vmem:[%s1716 + $0x80] sm:$0x1]
        %v2112 = vld [vmem:[%s1716 + $0x84] sm:$0xf]
        %v2113 = vld [vmem:[%s1716 + $0x88] sm:$0xf]
        %v2114 = vld [vmem:[%s1716 + $0x8c] sm:$0x1]
        %v2115 = vld [vmem:[%s1716 + $0x90] sm:$0xf]
        %v2116 = vld [vmem:[%s1716 + $0x94] sm:$0xf]
        %v2117 = vld [vmem:[%s1716 + $0x98] sm:$0x1]
        %v2118 = vld [vmem:[%s1716 + $0x9c] sm:$0xf]
        %v2119 = vld [vmem:[%s1716 + $0xa0] sm:$0xf]
        %v2120 = vld [vmem:[%s1716 + $0xa4] sm:$0x1]
        %v2121 = vld [vmem:[%s1716 + $0xa8] sm:$0xf]
        %v2122 = vld [vmem:[%s1716 + $0xac] sm:$0xf]
        %v2123 = vld [vmem:[%s1716 + $0xb0] sm:$0x1]
        %v2124 = vld [vmem:[%s1716 + $0xb4] sm:$0xf]
        %v2125 = vld [vmem:[%s1716 + $0xb8] sm:$0xf]
        %v2126 = vld [vmem:[%s1716 + $0xbc] sm:$0x1]
        %v2128 = vshrl.u32 %v2079, 16
        %v2130 = vrot.slane %v2128, 4
        %v2131 = vshll.u32 %v2079, 16
        %v2133 = vrot.slane %v2131, 5
        %v2134 = vor.u32 %v2130, %v2133
        %v2135 = vrot.slane %v2134, 4
        %v2137 = vshll.u32 %v2080, 16
        %v2139 = vrot.slane %v2137, 5
        %v2140 = vsel %vm308, %v2135, %v2139
        %v2141 = vshrl.u32 %v2080, 16
        %v2143 = vrot.slane %v2141, 4
        %v2144 = vor.u32 %v2143, %v2139
        %v2145 = vrot.slane %v2144, 4
        %v2147 = vshll.u32 %v2081, 16
        %v2149 = vrot.slane %v2147, 5
        %v2150 = vsel %vm308, %v2145, %v2149
        %v2152 = vshrl.u32 %v2082, 16
        %v2154 = vrot.slane %v2152, 4
        %v2155 = vshll.u32 %v2082, 16
        %v2157 = vrot.slane %v2155, 5
        %v2158 = vor.u32 %v2154, %v2157
        %v2159 = vrot.slane %v2158, 4
        %v2161 = vshll.u32 %v2083, 16
        %v2163 = vrot.slane %v2161, 5
        %v2164 = vsel %vm308, %v2159, %v2163
        %v2165 = vshrl.u32 %v2083, 16
        %v2167 = vrot.slane %v2165, 4
        %v2168 = vor.u32 %v2167, %v2163
        %v2169 = vrot.slane %v2168, 4
        %v2171 = vshll.u32 %v2084, 16
        %v2173 = vrot.slane %v2171, 5
        %v2174 = vsel %vm308, %v2169, %v2173
        %v2176 = vshrl.u32 %v2085, 16
        %v2178 = vrot.slane %v2176, 4
        %v2179 = vshll.u32 %v2085, 16
        %v2181 = vrot.slane %v2179, 5
        %v2182 = vor.u32 %v2178, %v2181
        %v2183 = vrot.slane %v2182, 4
        %v2185 = vshll.u32 %v2086, 16
        %v2187 = vrot.slane %v2185, 5
        %v2188 = vsel %vm308, %v2183, %v2187
        %v2189 = vshrl.u32 %v2086, 16
        %v2191 = vrot.slane %v2189, 4
        %v2192 = vor.u32 %v2191, %v2187
        %v2193 = vrot.slane %v2192, 4
        %v2195 = vshll.u32 %v2087, 16
        %v2197 = vrot.slane %v2195, 5
        %v2198 = vsel %vm308, %v2193, %v2197
        %v2200 = vshrl.u32 %v2088, 16
        %v2202 = vrot.slane %v2200, 4
        %v2203 = vshll.u32 %v2088, 16
        %v2205 = vrot.slane %v2203, 5
        %v2206 = vor.u32 %v2202, %v2205
        %v2207 = vrot.slane %v2206, 4
        %v2209 = vshll.u32 %v2089, 16
        %v2211 = vrot.slane %v2209, 5
        %v2212 = vsel %vm308, %v2207, %v2211
        %v2213 = vshrl.u32 %v2089, 16
        %v2215 = vrot.slane %v2213, 4
        %v2216 = vor.u32 %v2215, %v2211
        %v2217 = vrot.slane %v2216, 4
        %v2219 = vshll.u32 %v2090, 16
        %v2221 = vrot.slane %v2219, 5
        %v2222 = vsel %vm308, %v2217, %v2221
        %v2224 = vshrl.u32 %v2091, 16
        %v2226 = vrot.slane %v2224, 4
        %v2227 = vshll.u32 %v2091, 16
        %v2229 = vrot.slane %v2227, 5
        %v2230 = vor.u32 %v2226, %v2229
        %v2231 = vrot.slane %v2230, 4
        %v2233 = vshll.u32 %v2092, 16
        %v2235 = vrot.slane %v2233, 5
        %v2236 = vsel %vm308, %v2231, %v2235
        %v2237 = vshrl.u32 %v2092, 16
        %v2239 = vrot.slane %v2237, 4
        %v2240 = vor.u32 %v2239, %v2235
        %v2241 = vrot.slane %v2240, 4
        %v2243 = vshll.u32 %v2093, 16
        %v2245 = vrot.slane %v2243, 5
        %v2246 = vsel %vm308, %v2241, %v2245
        %v2248 = vshrl.u32 %v2094, 16
        %v2250 = vrot.slane %v2248, 4
        %v2251 = vshll.u32 %v2094, 16
        %v2253 = vrot.slane %v2251, 5
        %v2254 = vor.u32 %v2250, %v2253
        %v2255 = vrot.slane %v2254, 4
        %v2257 = vshll.u32 %v2095, 16
        %v2259 = vrot.slane %v2257, 5
        %v2260 = vsel %vm308, %v2255, %v2259
        %v2261 = vshrl.u32 %v2095, 16
        %v2263 = vrot.slane %v2261, 4
        %v2264 = vor.u32 %v2263, %v2259
        %v2265 = vrot.slane %v2264, 4
        %v2267 = vshll.u32 %v2096, 16
        %v2269 = vrot.slane %v2267, 5
        %v2270 = vsel %vm308, %v2265, %v2269
        %v2272 = vshrl.u32 %v2097, 16
        %v2274 = vrot.slane %v2272, 4
        %v2275 = vshll.u32 %v2097, 16
        %v2277 = vrot.slane %v2275, 5
        %v2278 = vor.u32 %v2274, %v2277
        %v2279 = vrot.slane %v2278, 4
        %v2281 = vshll.u32 %v2098, 16
        %v2283 = vrot.slane %v2281, 5
        %v2284 = vsel %vm308, %v2279, %v2283
        %v2285 = vshrl.u32 %v2098, 16
        %v2287 = vrot.slane %v2285, 4
        %v2288 = vor.u32 %v2287, %v2283
        %v2289 = vrot.slane %v2288, 4
        %v2291 = vshll.u32 %v2099, 16
        %v2293 = vrot.slane %v2291, 5
        %v2294 = vsel %vm308, %v2289, %v2293
        %v2296 = vshrl.u32 %v2100, 16
        %v2298 = vrot.slane %v2296, 4
        %v2299 = vshll.u32 %v2100, 16
        %v2301 = vrot.slane %v2299, 5
        %v2302 = vor.u32 %v2298, %v2301
        %v2303 = vrot.slane %v2302, 4
        %v2305 = vshll.u32 %v2101, 16
        %v2307 = vrot.slane %v2305, 5
        %v2308 = vsel %vm308, %v2303, %v2307
        %v2309 = vshrl.u32 %v2101, 16
        %v2311 = vrot.slane %v2309, 4
        %v2312 = vor.u32 %v2311, %v2307
        %v2313 = vrot.slane %v2312, 4
        %v2315 = vshll.u32 %v2102, 16
        %v2317 = vrot.slane %v2315, 5
        %v2318 = vsel %vm308, %v2313, %v2317
        %v2320 = vshrl.u32 %v2103, 16
        %v2322 = vrot.slane %v2320, 4
        %v2323 = vshll.u32 %v2103, 16
        %v2325 = vrot.slane %v2323, 5
        %v2326 = vor.u32 %v2322, %v2325
        %v2327 = vrot.slane %v2326, 4
        %v2329 = vshll.u32 %v2104, 16
        %v2331 = vrot.slane %v2329, 5
        %v2332 = vsel %vm308, %v2327, %v2331
        %v2333 = vshrl.u32 %v2104, 16
        %v2335 = vrot.slane %v2333, 4
        %v2336 = vor.u32 %v2335, %v2331
        %v2337 = vrot.slane %v2336, 4
        %v2339 = vshll.u32 %v2105, 16
        %v2341 = vrot.slane %v2339, 5
        %v2342 = vsel %vm308, %v2337, %v2341
        %v2344 = vshrl.u32 %v2106, 16
        %v2346 = vrot.slane %v2344, 4
        %v2347 = vshll.u32 %v2106, 16
        %v2349 = vrot.slane %v2347, 5
        %v2350 = vor.u32 %v2346, %v2349
        %v2351 = vrot.slane %v2350, 4
        %v2353 = vshll.u32 %v2107, 16
        %v2355 = vrot.slane %v2353, 5
        %v2356 = vsel %vm308, %v2351, %v2355
        %v2357 = vshrl.u32 %v2107, 16
        %v2359 = vrot.slane %v2357, 4
        %v2360 = vor.u32 %v2359, %v2355
        %v2361 = vrot.slane %v2360, 4
        %v2363 = vshll.u32 %v2108, 16
        %v2365 = vrot.slane %v2363, 5
        %v2366 = vsel %vm308, %v2361, %v2365
        %v2368 = vshrl.u32 %v2109, 16
        %v2370 = vrot.slane %v2368, 4
        %v2371 = vshll.u32 %v2109, 16
        %v2373 = vrot.slane %v2371, 5
        %v2374 = vor.u32 %v2370, %v2373
        %v2375 = vrot.slane %v2374, 4
        %v2377 = vshll.u32 %v2110, 16
        %v2379 = vrot.slane %v2377, 5
        %v2380 = vsel %vm308, %v2375, %v2379
        %v2381 = vshrl.u32 %v2110, 16
        %v2383 = vrot.slane %v2381, 4
        %v2384 = vor.u32 %v2383, %v2379
        %v2385 = vrot.slane %v2384, 4
        %v2387 = vshll.u32 %v2111, 16
        %v2389 = vrot.slane %v2387, 5
        %v2390 = vsel %vm308, %v2385, %v2389
        %v2392 = vshrl.u32 %v2112, 16
        %v2394 = vrot.slane %v2392, 4
        %v2395 = vshll.u32 %v2112, 16
        %v2397 = vrot.slane %v2395, 5
        %v2398 = vor.u32 %v2394, %v2397
        %v2399 = vrot.slane %v2398, 4
        %v2401 = vshll.u32 %v2113, 16
        %v2403 = vrot.slane %v2401, 5
        %v2404 = vsel %vm308, %v2399, %v2403
        %v2405 = vshrl.u32 %v2113, 16
        %v2407 = vrot.slane %v2405, 4
        %v2408 = vor.u32 %v2407, %v2403
        %v2409 = vrot.slane %v2408, 4
        %v2411 = vshll.u32 %v2114, 16
        %v2413 = vrot.slane %v2411, 5
        %v2414 = vsel %vm308, %v2409, %v2413
        %v2416 = vshrl.u32 %v2115, 16
        %v2418 = vrot.slane %v2416, 4
        %v2419 = vshll.u32 %v2115, 16
        %v2421 = vrot.slane %v2419, 5
        %v2422 = vor.u32 %v2418, %v2421
        %v2423 = vrot.slane %v2422, 4
        %v2425 = vshll.u32 %v2116, 16
        %v2427 = vrot.slane %v2425, 5
        %v2428 = vsel %vm308, %v2423, %v2427
        %v2429 = vshrl.u32 %v2116, 16
        %v2431 = vrot.slane %v2429, 4
        %v2432 = vor.u32 %v2431, %v2427
        %v2433 = vrot.slane %v2432, 4
        %v2435 = vshll.u32 %v2117, 16
        %v2437 = vrot.slane %v2435, 5
        %v2438 = vsel %vm308, %v2433, %v2437
        %v2440 = vshrl.u32 %v2118, 16
        %v2442 = vrot.slane %v2440, 4
        %v2443 = vshll.u32 %v2118, 16
        %v2445 = vrot.slane %v2443, 5
        %v2446 = vor.u32 %v2442, %v2445
        %v2447 = vrot.slane %v2446, 4
        %v2449 = vshll.u32 %v2119, 16
        %v2451 = vrot.slane %v2449, 5
        %v2452 = vsel %vm308, %v2447, %v2451
        %v2453 = vshrl.u32 %v2119, 16
        %v2455 = vrot.slane %v2453, 4
        %v2456 = vor.u32 %v2455, %v2451
        %v2457 = vrot.slane %v2456, 4
        %v2459 = vshll.u32 %v2120, 16
        %v2461 = vrot.slane %v2459, 5
        %v2462 = vsel %vm308, %v2457, %v2461
        %v2464 = vshrl.u32 %v2121, 16
        %v2466 = vrot.slane %v2464, 4
        %v2467 = vshll.u32 %v2121, 16
        %v2469 = vrot.slane %v2467, 5
        %v2470 = vor.u32 %v2466, %v2469
        %v2471 = vrot.slane %v2470, 4
        %v2473 = vshll.u32 %v2122, 16
        %v2475 = vrot.slane %v2473, 5
        %v2476 = vsel %vm308, %v2471, %v2475
        %v2477 = vshrl.u32 %v2122, 16
        %v2479 = vrot.slane %v2477, 4
        %v2480 = vor.u32 %v2479, %v2475
        %v2481 = vrot.slane %v2480, 4
        %v2483 = vshll.u32 %v2123, 16
        %v2485 = vrot.slane %v2483, 5
        %v2486 = vsel %vm308, %v2481, %v2485
        %v2488 = vshrl.u32 %v2124, 16
        %v2490 = vrot.slane %v2488, 4
        %v2491 = vshll.u32 %v2124, 16
        %v2493 = vrot.slane %v2491, 5
        %v2494 = vor.u32 %v2490, %v2493
        %v2495 = vrot.slane %v2494, 4
        %v2497 = vshll.u32 %v2125, 16
        %v2499 = vrot.slane %v2497, 5
        %v2500 = vsel %vm308, %v2495, %v2499
        %v2501 = vshrl.u32 %v2125, 16
        %v2503 = vrot.slane %v2501, 4
        %v2504 = vor.u32 %v2503, %v2499
        %v2505 = vrot.slane %v2504, 4
        %v2507 = vshll.u32 %v2126, 16
        %v2509 = vrot.slane %v2507, 5
        %v2510 = vsel %vm308, %v2505, %v2509
        %s2511 = scalar_lea.vmem %s248, 32
        %v2512 = vld [vmem:[%s2511] sm:$0xf]
        %v2513 = vld [vmem:[%s2511 + $0x4] sm:$0xf]
        %v2514 = vunpack.c.l.b16 %v2140
        %v2515 = vunpack.c.l.b16 %v2150
        %v2516 = vunpack.c.l.b16 %v2164
        %v2517 = vunpack.c.l.b16 %v2174
        %v2518 = vunpack.c.l.b16 %v2188
        %v2519 = vunpack.c.l.b16 %v2198
        %v2520 = vunpack.c.l.b16 %v2212
        %v2521 = vunpack.c.l.b16 %v2222
        %v2522 = vunpack.c.l.b16 %v2236
        %v2523 = vunpack.c.l.b16 %v2246
        %v2524 = vunpack.c.l.b16 %v2260
        %v2525 = vunpack.c.l.b16 %v2270
        %v2526 = vunpack.c.l.b16 %v2284
        %v2527 = vunpack.c.l.b16 %v2294
        %v2528 = vunpack.c.l.b16 %v2308
        %v2529 = vunpack.c.l.b16 %v2318
        %v2530 = vunpack.c.l.b16 %v2332
        %v2531 = vunpack.c.l.b16 %v2342
        %v2532 = vunpack.c.l.b16 %v2356
        %v2533 = vunpack.c.l.b16 %v2366
        %v2534 = vunpack.c.l.b16 %v2380
        %v2535 = vunpack.c.l.b16 %v2390
        %v2536 = vunpack.c.l.b16 %v2404
        %v2537 = vunpack.c.l.b16 %v2414
        %v2538 = vunpack.c.l.b16 %v2428
        %v2539 = vunpack.c.l.b16 %v2438
        %v2540 = vunpack.c.l.b16 %v2452
        %v2541 = vunpack.c.l.b16 %v2462
        %v2542 = vunpack.c.l.b16 %v2476
        %v2543 = vunpack.c.l.b16 %v2486
        %v2544 = vunpack.c.l.b16 %v2500
        %v2545 = vunpack.c.l.b16 %v2510
        %v2546 = vpack.c.b16 %v2515, %v2514
        %v2547 = vpack.c.b16 %v2517, %v2516
        %v2548 = vpack.c.b16 %v2519, %v2518
        %v2549 = vpack.c.b16 %v2521, %v2520
        %v2550 = vpack.c.b16 %v2523, %v2522
        %v2551 = vpack.c.b16 %v2525, %v2524
        %v2552 = vpack.c.b16 %v2527, %v2526
        %v2553 = vpack.c.b16 %v2529, %v2528
        %v2554 = vpack.c.b16 %v2531, %v2530
        %v2555 = vpack.c.b16 %v2533, %v2532
        %v2556 = vpack.c.b16 %v2535, %v2534
        %v2557 = vpack.c.b16 %v2537, %v2536
        %v2558 = vpack.c.b16 %v2539, %v2538
        %v2559 = vpack.c.b16 %v2541, %v2540
        %v2560 = vpack.c.b16 %v2543, %v2542
        %v2561 = vpack.c.b16 %v2545, %v2544
        %v2564 = vunpack.c.l.b16 %v2512
        %v2565 = vunpack.c.l.b16 %v2513
        %v2566 = vpack.c.b16 %v2565, %v2564
        %v2569 = vsel %vm750, %v2546, 0
        %v2572 = vsel %vm750, %v2547, 0
        %v2575 = vsel %vm750, %v2548, 0
        %v2578 = vsel %vm750, %v2549, 0
        %v2581 = vsel %vm750, %v2550, 0
        %v2584 = vsel %vm750, %v2551, 0
        %v2587 = vsel %vm750, %v2552, 0
        %v2590 = vsel %vm750, %v2553, 0
        %v2593 = vsel %vm750, %v2554, 0
        %v2596 = vsel %vm750, %v2555, 0
        %v2599 = vsel %vm750, %v2556, 0
        %v2602 = vsel %vm750, %v2557, 0
        %v2605 = vsel %vm750, %v2558, 0
        %v2608 = vsel %vm750, %v2559, 0
        %v2611 = vsel %vm750, %v2560, 0
        %v2614 = vsel %vm750, %v2561, 0
        %2616 = vmatprep.subr.bf16.mxu0 0
        %2617 = vmatpush1.bf16.msra.mxu0 0
        %2618 = vmatprep.subr.bf16.mxu0 0
        %2619 = vmatpush1.bf16.msra.mxu0 0
        %2620 = vmatprep.subr.bf16.mxu0 0
        %2621 = vmatpush1.bf16.msra.mxu0 0
        %2622 = vmatprep.subr.bf16.mxu0 0
        %2623 = vmatpush1.bf16.msra.mxu0 0
        %2624 = vmatprep.subr.bf16.mxu0 0
        %2625 = vmatpush1.bf16.msra.mxu0 0
        %2626 = vmatprep.subr.bf16.mxu0 0
        %2627 = vmatpush1.bf16.msra.mxu0 0
        %2628 = vmatprep.subr.bf16.mxu0 0
        %2629 = vmatpush1.bf16.msra.mxu0 0
        %2630 = vmatprep.subr.bf16.mxu0 0
        %2631 = vmatpush1.bf16.msra.mxu0 %v2566
        %2632 = vmatprep.subr.bf16.mxu0 0
        %2633 = vmatpush2.bf16.msra.mxu0 0
        %2634 = vmatprep.subr.bf16.mxu0 0
        %2635 = vmatpush2.bf16.msra.mxu0 0
        %2636 = vmatprep.subr.bf16.mxu0 0
        %2637 = vmatpush2.bf16.msra.mxu0 0
        %2638 = vmatprep.subr.bf16.mxu0 0
        %2639 = vmatpush2.bf16.msra.mxu0 0
        %2640 = vmatprep.subr.bf16.mxu0 0
        %2641 = vmatpush2.bf16.msra.mxu0 0
        %2642 = vmatprep.subr.bf16.mxu0 0
        %2643 = vmatpush2.bf16.msra.mxu0 0
        %2644 = vmatprep.subr.bf16.mxu0 0
        %2645 = vmatpush2.bf16.msra.mxu0 0
        %2646 = vmatprep.subr.bf16.mxu0 0
        %2647 = vmatpush2.bf16.msra.mxu0 0
        %2648 = vmatprep.mubr.bf16.mxu0 0
        %2649 = vmatmul.mubr.bf16.gmra.mxu0 %v2569
        %v2650 = vpop.f32.mrf.mxu0
        %v2651 = vadd.f32 0.0, %v2650
        %v2652 = vpop.f32.mrf.mxu0
        %v2653 = vpop.f32.mrf.mxu0
        %v2654 = vadd.f32 0.0, %v2653
        %v2655 = vpop.f32.mrf.mxu0
        %2656 = vmatprep.mubr.bf16.mxu0 0
        %2657 = vmatmul.mubr.bf16.gmra.mxu0 %v2572
        %v2658 = vpop.f32.mrf.mxu0
        %v2659 = vadd.f32 0.0, %v2658
        %v2660 = vpop.f32.mrf.mxu0
        %v2661 = vpop.f32.mrf.mxu0
        %v2662 = vadd.f32 0.0, %v2661
        %v2663 = vpop.f32.mrf.mxu0
        %2664 = vmatprep.mubr.bf16.mxu0 0
        %2665 = vmatmul.mubr.bf16.gmra.mxu0 %v2575
        %v2666 = vpop.f32.mrf.mxu0
        %v2667 = vadd.f32 0.0, %v2666
        %v2668 = vpop.f32.mrf.mxu0
        %v2669 = vpop.f32.mrf.mxu0
        %v2670 = vadd.f32 0.0, %v2669
        %v2671 = vpop.f32.mrf.mxu0
        %2672 = vmatprep.mubr.bf16.mxu0 0
        %2673 = vmatmul.mubr.bf16.gmra.mxu0 %v2578
        %v2674 = vpop.f32.mrf.mxu0
        %v2675 = vadd.f32 0.0, %v2674
        %v2676 = vpop.f32.mrf.mxu0
        %v2677 = vpop.f32.mrf.mxu0
        %v2678 = vadd.f32 0.0, %v2677
        %v2679 = vpop.f32.mrf.mxu0
        %2680 = vmatprep.mubr.bf16.mxu0 0
        %2681 = vmatmul.mubr.bf16.gmra.mxu0 %v2581
        %v2682 = vpop.f32.mrf.mxu0
        %v2683 = vadd.f32 0.0, %v2682
        %v2684 = vpop.f32.mrf.mxu0
        %v2685 = vpop.f32.mrf.mxu0
        %v2686 = vadd.f32 0.0, %v2685
        %v2687 = vpop.f32.mrf.mxu0
        %2688 = vmatprep.mubr.bf16.mxu0 0
        %2689 = vmatmul.mubr.bf16.gmra.mxu0 %v2584
        %v2690 = vpop.f32.mrf.mxu0
        %v2691 = vadd.f32 0.0, %v2690
        %v2692 = vpop.f32.mrf.mxu0
        %v2693 = vpop.f32.mrf.mxu0
        %v2694 = vadd.f32 0.0, %v2693
        %v2695 = vpop.f32.mrf.mxu0
        %2696 = vmatprep.mubr.bf16.mxu0 0
        %2697 = vmatmul.mubr.bf16.gmra.mxu0 %v2587
        %v2698 = vpop.f32.mrf.mxu0
        %v2699 = vadd.f32 0.0, %v2698
        %v2700 = vpop.f32.mrf.mxu0
        %v2701 = vpop.f32.mrf.mxu0
        %v2702 = vadd.f32 0.0, %v2701
        %v2703 = vpop.f32.mrf.mxu0
        %2704 = vmatprep.mubr.bf16.mxu0 0
        %2705 = vmatmul.mubr.bf16.gmra.mxu0 %v2590
        %v2706 = vpop.f32.mrf.mxu0
        %v2707 = vadd.f32 0.0, %v2706
        %v2708 = vpop.f32.mrf.mxu0
        %v2709 = vpop.f32.mrf.mxu0
        %v2710 = vadd.f32 0.0, %v2709
        %v2711 = vpop.f32.mrf.mxu0
        %2712 = vmatprep.mubr.bf16.mxu0 0
        %2713 = vmatmul.mubr.bf16.gmra.mxu0 %v2593
        %v2714 = vpop.f32.mrf.mxu0
        %v2715 = vadd.f32 0.0, %v2714
        %v2716 = vpop.f32.mrf.mxu0
        %v2717 = vpop.f32.mrf.mxu0
        %v2718 = vadd.f32 0.0, %v2717
        %v2719 = vpop.f32.mrf.mxu0
        %2720 = vmatprep.mubr.bf16.mxu0 0
        %2721 = vmatmul.mubr.bf16.gmra.mxu0 %v2596
        %v2722 = vpop.f32.mrf.mxu0
        %v2723 = vadd.f32 0.0, %v2722
        %v2724 = vpop.f32.mrf.mxu0
        %v2725 = vpop.f32.mrf.mxu0
        %v2726 = vadd.f32 0.0, %v2725
        %v2727 = vpop.f32.mrf.mxu0
        %2728 = vmatprep.mubr.bf16.mxu0 0
        %2729 = vmatmul.mubr.bf16.gmra.mxu0 %v2599
        %v2730 = vpop.f32.mrf.mxu0
        %v2731 = vadd.f32 0.0, %v2730
        %v2732 = vpop.f32.mrf.mxu0
        %v2733 = vpop.f32.mrf.mxu0
        %v2734 = vadd.f32 0.0, %v2733
        %v2735 = vpop.f32.mrf.mxu0
        %2736 = vmatprep.mubr.bf16.mxu0 0
        %2737 = vmatmul.mubr.bf16.gmra.mxu0 %v2602
        %v2738 = vpop.f32.mrf.mxu0
        %v2739 = vadd.f32 0.0, %v2738
        %v2740 = vpop.f32.mrf.mxu0
        %v2741 = vpop.f32.mrf.mxu0
        %v2742 = vadd.f32 0.0, %v2741
        %v2743 = vpop.f32.mrf.mxu0
        %2744 = vmatprep.mubr.bf16.mxu0 0
        %2745 = vmatmul.mubr.bf16.gmra.mxu0 %v2605
        %v2746 = vpop.f32.mrf.mxu0
        %v2747 = vadd.f32 0.0, %v2746
        %v2748 = vpop.f32.mrf.mxu0
        %v2749 = vpop.f32.mrf.mxu0
        %v2750 = vadd.f32 0.0, %v2749
        %v2751 = vpop.f32.mrf.mxu0
        %2752 = vmatprep.mubr.bf16.mxu0 0
        %2753 = vmatmul.mubr.bf16.gmra.mxu0 %v2608
        %v2754 = vpop.f32.mrf.mxu0
        %v2755 = vadd.f32 0.0, %v2754
        %v2756 = vpop.f32.mrf.mxu0
        %v2757 = vpop.f32.mrf.mxu0
        %v2758 = vadd.f32 0.0, %v2757
        %v2759 = vpop.f32.mrf.mxu0
        %2760 = vmatprep.mubr.bf16.mxu0 0
        %2761 = vmatmul.mubr.bf16.gmra.mxu0 %v2611
        %v2762 = vpop.f32.mrf.mxu0
        %v2763 = vadd.f32 0.0, %v2762
        %v2764 = vpop.f32.mrf.mxu0
        %v2765 = vpop.f32.mrf.mxu0
        %v2766 = vadd.f32 0.0, %v2765
        %v2767 = vpop.f32.mrf.mxu0
        %2768 = vmatprep.mubr.bf16.mxu0 0
        %2769 = vmatmul.mubr.bf16.gmra.mxu0 %v2614
        %v2770 = vpop.f32.mrf.mxu0
        %v2771 = vadd.f32 0.0, %v2770
        %v2772 = vpop.f32.mrf.mxu0
        %v2773 = vpop.f32.mrf.mxu0
        %v2774 = vadd.f32 0.0, %v2773
        %v2775 = vpop.f32.mrf.mxu0
        %2776 = vdwg.mxu0
        %v2777 = vadd.f32 %v2047, %v2651
        %v2778 = vadd.f32 %v2048, %v2654
        %v2779 = vadd.f32 %v2049, %v2659
        %v2780 = vadd.f32 %v2050, %v2662
        %v2781 = vadd.f32 %v2051, %v2667
        %v2782 = vadd.f32 %v2052, %v2670
        %v2783 = vadd.f32 %v2053, %v2675
        %v2784 = vadd.f32 %v2054, %v2678
        %v2785 = vadd.f32 %v2055, %v2683
        %v2786 = vadd.f32 %v2056, %v2686
        %v2787 = vadd.f32 %v2057, %v2691
        %v2788 = vadd.f32 %v2058, %v2694
        %v2789 = vadd.f32 %v2059, %v2699
        %v2790 = vadd.f32 %v2060, %v2702
        %v2791 = vadd.f32 %v2061, %v2707
        %v2792 = vadd.f32 %v2062, %v2710
        %v2793 = vadd.f32 %v2063, %v2715
        %v2794 = vadd.f32 %v2064, %v2718
        %v2795 = vadd.f32 %v2065, %v2723
        %v2796 = vadd.f32 %v2066, %v2726
        %v2797 = vadd.f32 %v2067, %v2731
        %v2798 = vadd.f32 %v2068, %v2734
        %v2799 = vadd.f32 %v2069, %v2739
        %v2800 = vadd.f32 %v2070, %v2742
        %v2801 = vadd.f32 %v2071, %v2747
        %v2802 = vadd.f32 %v2072, %v2750
        %v2803 = vadd.f32 %v2073, %v2755
        %v2804 = vadd.f32 %v2074, %v2758
        %v2805 = vadd.f32 %v2075, %v2763
        %v2806 = vadd.f32 %v2076, %v2766
        %v2807 = vadd.f32 %v2077, %v2771
        %v2808 = vadd.f32 %v2078, %v2774
        %v2809 = vld [vmem:[%s1716] sm:$0xe]
        %v2810 = vld [vmem:[%s1716 + $0xc] sm:$0xe]
        %v2811 = vld [vmem:[%s1716 + $0x18] sm:$0xe]
        %v2812 = vld [vmem:[%s1716 + $0x24] sm:$0xe]
        %v2813 = vld [vmem:[%s1716 + $0x30] sm:$0xe]
        %v2814 = vld [vmem:[%s1716 + $0x3c] sm:$0xe]
        %v2815 = vld [vmem:[%s1716 + $0x48] sm:$0xe]
        %v2816 = vld [vmem:[%s1716 + $0x54] sm:$0xe]
        %v2817 = vld [vmem:[%s1716 + $0x60] sm:$0xe]
        %v2818 = vld [vmem:[%s1716 + $0x6c] sm:$0xe]
        %v2819 = vld [vmem:[%s1716 + $0x78] sm:$0xe]
        %v2820 = vld [vmem:[%s1716 + $0x84] sm:$0xe]
        %v2821 = vld [vmem:[%s1716 + $0x90] sm:$0xe]
        %v2822 = vld [vmem:[%s1716 + $0x9c] sm:$0xe]
        %v2823 = vld [vmem:[%s1716 + $0xa8] sm:$0xe]
        %v2824 = vld [vmem:[%s1716 + $0xb4] sm:$0xe]
        %v2873 = vrot.slane %v2809, 5
        %v2874 = vrot.slane %v2873, 4
        %v2875 = vrot.slane %v2080, 5
        %v2876 = vsel %vm1305, %v2874, %v2875
        %v2877 = vrot.slane %v2875, 4
        %v2878 = vrot.slane %v2081, 5
        %v2879 = vsel %vm1305, %v2877, %v2878
        %v2880 = vrot.slane %v2810, 5
        %v2881 = vrot.slane %v2880, 4
        %v2882 = vrot.slane %v2083, 5
        %v2883 = vsel %vm1305, %v2881, %v2882
        %v2884 = vrot.slane %v2882, 4
        %v2885 = vrot.slane %v2084, 5
        %v2886 = vsel %vm1305, %v2884, %v2885
        %v2887 = vrot.slane %v2811, 5
        %v2888 = vrot.slane %v2887, 4
        %v2889 = vrot.slane %v2086, 5
        %v2890 = vsel %vm1305, %v2888, %v2889
        %v2891 = vrot.slane %v2889, 4
        %v2892 = vrot.slane %v2087, 5
        %v2893 = vsel %vm1305, %v2891, %v2892
        %v2894 = vrot.slane %v2812, 5
        %v2895 = vrot.slane %v2894, 4
        %v2896 = vrot.slane %v2089, 5
        %v2897 = vsel %vm1305, %v2895, %v2896
        %v2898 = vrot.slane %v2896, 4
        %v2899 = vrot.slane %v2090, 5
        %v2900 = vsel %vm1305, %v2898, %v2899
        %v2901 = vrot.slane %v2813, 5
        %v2902 = vrot.slane %v2901, 4
        %v2903 = vrot.slane %v2092, 5
        %v2904 = vsel %vm1305, %v2902, %v2903
        %v2905 = vrot.slane %v2903, 4
        %v2906 = vrot.slane %v2093, 5
        %v2907 = vsel %vm1305, %v2905, %v2906
        %v2908 = vrot.slane %v2814, 5
        %v2909 = vrot.slane %v2908, 4
        %v2910 = vrot.slane %v2095, 5
        %v2911 = vsel %vm1305, %v2909, %v2910
        %v2912 = vrot.slane %v2910, 4
        %v2913 = vrot.slane %v2096, 5
        %v2914 = vsel %vm1305, %v2912, %v2913
        %v2915 = vrot.slane %v2815, 5
        %v2916 = vrot.slane %v2915, 4
        %v2917 = vrot.slane %v2098, 5
        %v2918 = vsel %vm1305, %v2916, %v2917
        %v2919 = vrot.slane %v2917, 4
        %v2920 = vrot.slane %v2099, 5
        %v2921 = vsel %vm1305, %v2919, %v2920
        %v2922 = vrot.slane %v2816, 5
        %v2923 = vrot.slane %v2922, 4
        %v2924 = vrot.slane %v2101, 5
        %v2925 = vsel %vm1305, %v2923, %v2924
        %v2926 = vrot.slane %v2924, 4
        %v2927 = vrot.slane %v2102, 5
        %v2928 = vsel %vm1305, %v2926, %v2927
        %v2929 = vrot.slane %v2817, 5
        %v2930 = vrot.slane %v2929, 4
        %v2931 = vrot.slane %v2104, 5
        %v2932 = vsel %vm1305, %v2930, %v2931
        %v2933 = vrot.slane %v2931, 4
        %v2934 = vrot.slane %v2105, 5
        %v2935 = vsel %vm1305, %v2933, %v2934
        %v2936 = vrot.slane %v2818, 5
        %v2937 = vrot.slane %v2936, 4
        %v2938 = vrot.slane %v2107, 5
        %v2939 = vsel %vm1305, %v2937, %v2938
        %v2940 = vrot.slane %v2938, 4
        %v2941 = vrot.slane %v2108, 5
        %v2942 = vsel %vm1305, %v2940, %v2941
        %v2943 = vrot.slane %v2819, 5
        %v2944 = vrot.slane %v2943, 4
        %v2945 = vrot.slane %v2110, 5
        %v2946 = vsel %vm1305, %v2944, %v2945
        %v2947 = vrot.slane %v2945, 4
        %v2948 = vrot.slane %v2111, 5
        %v2949 = vsel %vm1305, %v2947, %v2948
        %v2950 = vrot.slane %v2820, 5
        %v2951 = vrot.slane %v2950, 4
        %v2952 = vrot.slane %v2113, 5
        %v2953 = vsel %vm1305, %v2951, %v2952
        %v2954 = vrot.slane %v2952, 4
        %v2955 = vrot.slane %v2114, 5
        %v2956 = vsel %vm1305, %v2954, %v2955
        %v2957 = vrot.slane %v2821, 5
        %v2958 = vrot.slane %v2957, 4
        %v2959 = vrot.slane %v2116, 5
        %v2960 = vsel %vm1305, %v2958, %v2959
        %v2961 = vrot.slane %v2959, 4
        %v2962 = vrot.slane %v2117, 5
        %v2963 = vsel %vm1305, %v2961, %v2962
        %v2964 = vrot.slane %v2822, 5
        %v2965 = vrot.slane %v2964, 4
        %v2966 = vrot.slane %v2119, 5
        %v2967 = vsel %vm1305, %v2965, %v2966
        %v2968 = vrot.slane %v2966, 4
        %v2969 = vrot.slane %v2120, 5
        %v2970 = vsel %vm1305, %v2968, %v2969
        %v2971 = vrot.slane %v2823, 5
        %v2972 = vrot.slane %v2971, 4
        %v2973 = vrot.slane %v2122, 5
        %v2974 = vsel %vm1305, %v2972, %v2973
        %v2975 = vrot.slane %v2973, 4
        %v2976 = vrot.slane %v2123, 5
        %v2977 = vsel %vm1305, %v2975, %v2976
        %v2978 = vrot.slane %v2824, 5
        %v2979 = vrot.slane %v2978, 4
        %v2980 = vrot.slane %v2125, 5
        %v2981 = vsel %vm1305, %v2979, %v2980
        %v2982 = vrot.slane %v2980, 4
        %v2983 = vrot.slane %v2126, 5
        %v2984 = vsel %vm1305, %v2982, %v2983
        %s2985 = scalar_lea.vmem %s248, 40
        %v2986 = vld [vmem:[%s2985] sm:$0xf]
        %v2987 = vld [vmem:[%s2985 + $0x4] sm:$0xf]
        %v2988 = vunpack.c.l.b16 %v2876
        %v2989 = vunpack.c.l.b16 %v2879
        %v2990 = vunpack.c.l.b16 %v2883
        %v2991 = vunpack.c.l.b16 %v2886
        %v2992 = vunpack.c.l.b16 %v2890
        %v2993 = vunpack.c.l.b16 %v2893
        %v2994 = vunpack.c.l.b16 %v2897
        %v2995 = vunpack.c.l.b16 %v2900
        %v2996 = vunpack.c.l.b16 %v2904
        %v2997 = vunpack.c.l.b16 %v2907
        %v2998 = vunpack.c.l.b16 %v2911
        %v2999 = vunpack.c.l.b16 %v2914
        %v3000 = vunpack.c.l.b16 %v2918
        %v3001 = vunpack.c.l.b16 %v2921
        %v3002 = vunpack.c.l.b16 %v2925
        %v3003 = vunpack.c.l.b16 %v2928
        %v3004 = vunpack.c.l.b16 %v2932
        %v3005 = vunpack.c.l.b16 %v2935
        %v3006 = vunpack.c.l.b16 %v2939
        %v3007 = vunpack.c.l.b16 %v2942
        %v3008 = vunpack.c.l.b16 %v2946
        %v3009 = vunpack.c.l.b16 %v2949
        %v3010 = vunpack.c.l.b16 %v2953
        %v3011 = vunpack.c.l.b16 %v2956
        %v3012 = vunpack.c.l.b16 %v2960
        %v3013 = vunpack.c.l.b16 %v2963
        %v3014 = vunpack.c.l.b16 %v2967
        %v3015 = vunpack.c.l.b16 %v2970
        %v3016 = vunpack.c.l.b16 %v2974
        %v3017 = vunpack.c.l.b16 %v2977
        %v3018 = vunpack.c.l.b16 %v2981
        %v3019 = vunpack.c.l.b16 %v2984
        %v3020 = vpack.c.b16 %v2989, %v2988
        %v3021 = vpack.c.b16 %v2991, %v2990
        %v3022 = vpack.c.b16 %v2993, %v2992
        %v3023 = vpack.c.b16 %v2995, %v2994
        %v3024 = vpack.c.b16 %v2997, %v2996
        %v3025 = vpack.c.b16 %v2999, %v2998
        %v3026 = vpack.c.b16 %v3001, %v3000
        %v3027 = vpack.c.b16 %v3003, %v3002
        %v3028 = vpack.c.b16 %v3005, %v3004
        %v3029 = vpack.c.b16 %v3007, %v3006
        %v3030 = vpack.c.b16 %v3009, %v3008
        %v3031 = vpack.c.b16 %v3011, %v3010
        %v3032 = vpack.c.b16 %v3013, %v3012
        %v3033 = vpack.c.b16 %v3015, %v3014
        %v3034 = vpack.c.b16 %v3017, %v3016
        %v3035 = vpack.c.b16 %v3019, %v3018
        %v3038 = vunpack.c.l.b16 %v2986
        %v3039 = vunpack.c.l.b16 %v2987
        %v3040 = vpack.c.b16 %v3039, %v3038
        %v3043 = vsel %vm750, %v3020, 0
        %v3046 = vsel %vm750, %v3021, 0
        %v3049 = vsel %vm750, %v3022, 0
        %v3052 = vsel %vm750, %v3023, 0
        %v3055 = vsel %vm750, %v3024, 0
        %v3058 = vsel %vm750, %v3025, 0
        %v3061 = vsel %vm750, %v3026, 0
        %v3064 = vsel %vm750, %v3027, 0
        %v3067 = vsel %vm750, %v3028, 0
        %v3070 = vsel %vm750, %v3029, 0
        %v3073 = vsel %vm750, %v3030, 0
        %v3076 = vsel %vm750, %v3031, 0
        %v3079 = vsel %vm750, %v3032, 0
        %v3082 = vsel %vm750, %v3033, 0
        %v3085 = vsel %vm750, %v3034, 0
        %v3088 = vsel %vm750, %v3035, 0
        %3090 = vmatprep.subr.bf16.mxu0 0
        %3091 = vmatpush1.bf16.msra.mxu0 0
        %3092 = vmatprep.subr.bf16.mxu0 0
        %3093 = vmatpush1.bf16.msra.mxu0 0
        %3094 = vmatprep.subr.bf16.mxu0 0
        %3095 = vmatpush1.bf16.msra.mxu0 0
        %3096 = vmatprep.subr.bf16.mxu0 0
        %3097 = vmatpush1.bf16.msra.mxu0 0
        %3098 = vmatprep.subr.bf16.mxu0 0
        %3099 = vmatpush1.bf16.msra.mxu0 0
        %3100 = vmatprep.subr.bf16.mxu0 0
        %3101 = vmatpush1.bf16.msra.mxu0 0
        %3102 = vmatprep.subr.bf16.mxu0 0
        %3103 = vmatpush1.bf16.msra.mxu0 0
        %3104 = vmatprep.subr.bf16.mxu0 0
        %3105 = vmatpush1.bf16.msra.mxu0 %v3040
        %3106 = vmatprep.subr.bf16.mxu0 0
        %3107 = vmatpush2.bf16.msra.mxu0 0
        %3108 = vmatprep.subr.bf16.mxu0 0
        %3109 = vmatpush2.bf16.msra.mxu0 0
        %3110 = vmatprep.subr.bf16.mxu0 0
        %3111 = vmatpush2.bf16.msra.mxu0 0
        %3112 = vmatprep.subr.bf16.mxu0 0
        %3113 = vmatpush2.bf16.msra.mxu0 0
        %3114 = vmatprep.subr.bf16.mxu0 0
        %3115 = vmatpush2.bf16.msra.mxu0 0
        %3116 = vmatprep.subr.bf16.mxu0 0
        %3117 = vmatpush2.bf16.msra.mxu0 0
        %3118 = vmatprep.subr.bf16.mxu0 0
        %3119 = vmatpush2.bf16.msra.mxu0 0
        %3120 = vmatprep.subr.bf16.mxu0 0
        %3121 = vmatpush2.bf16.msra.mxu0 0
        %3122 = vmatprep.mubr.bf16.mxu0 0
        %3123 = vmatmul.mubr.bf16.gmra.mxu0 %v3043
        %v3124 = vpop.f32.mrf.mxu0
        %v3125 = vadd.f32 0.0, %v3124
        %v3126 = vpop.f32.mrf.mxu0
        %v3127 = vpop.f32.mrf.mxu0
        %v3128 = vadd.f32 0.0, %v3127
        %v3129 = vpop.f32.mrf.mxu0
        %3130 = vmatprep.mubr.bf16.mxu0 0
        %3131 = vmatmul.mubr.bf16.gmra.mxu0 %v3046
        %v3132 = vpop.f32.mrf.mxu0
        %v3133 = vadd.f32 0.0, %v3132
        %v3134 = vpop.f32.mrf.mxu0
        %v3135 = vpop.f32.mrf.mxu0
        %v3136 = vadd.f32 0.0, %v3135
        %v3137 = vpop.f32.mrf.mxu0
        %3138 = vmatprep.mubr.bf16.mxu0 0
        %3139 = vmatmul.mubr.bf16.gmra.mxu0 %v3049
        %v3140 = vpop.f32.mrf.mxu0
        %v3141 = vadd.f32 0.0, %v3140
        %v3142 = vpop.f32.mrf.mxu0
        %v3143 = vpop.f32.mrf.mxu0
        %v3144 = vadd.f32 0.0, %v3143
        %v3145 = vpop.f32.mrf.mxu0
        %3146 = vmatprep.mubr.bf16.mxu0 0
        %3147 = vmatmul.mubr.bf16.gmra.mxu0 %v3052
        %v3148 = vpop.f32.mrf.mxu0
        %v3149 = vadd.f32 0.0, %v3148
        %v3150 = vpop.f32.mrf.mxu0
        %v3151 = vpop.f32.mrf.mxu0
        %v3152 = vadd.f32 0.0, %v3151
        %v3153 = vpop.f32.mrf.mxu0
        %3154 = vmatprep.mubr.bf16.mxu0 0
        %3155 = vmatmul.mubr.bf16.gmra.mxu0 %v3055
        %v3156 = vpop.f32.mrf.mxu0
        %v3157 = vadd.f32 0.0, %v3156
        %v3158 = vpop.f32.mrf.mxu0
        %v3159 = vpop.f32.mrf.mxu0
        %v3160 = vadd.f32 0.0, %v3159
        %v3161 = vpop.f32.mrf.mxu0
        %3162 = vmatprep.mubr.bf16.mxu0 0
        %3163 = vmatmul.mubr.bf16.gmra.mxu0 %v3058
        %v3164 = vpop.f32.mrf.mxu0
        %v3165 = vadd.f32 0.0, %v3164
        %v3166 = vpop.f32.mrf.mxu0
        %v3167 = vpop.f32.mrf.mxu0
        %v3168 = vadd.f32 0.0, %v3167
        %v3169 = vpop.f32.mrf.mxu0
        %3170 = vmatprep.mubr.bf16.mxu0 0
        %3171 = vmatmul.mubr.bf16.gmra.mxu0 %v3061
        %v3172 = vpop.f32.mrf.mxu0
        %v3173 = vadd.f32 0.0, %v3172
        %v3174 = vpop.f32.mrf.mxu0
        %v3175 = vpop.f32.mrf.mxu0
        %v3176 = vadd.f32 0.0, %v3175
        %v3177 = vpop.f32.mrf.mxu0
        %3178 = vmatprep.mubr.bf16.mxu0 0
        %3179 = vmatmul.mubr.bf16.gmra.mxu0 %v3064
        %v3180 = vpop.f32.mrf.mxu0
        %v3181 = vadd.f32 0.0, %v3180
        %v3182 = vpop.f32.mrf.mxu0
        %v3183 = vpop.f32.mrf.mxu0
        %v3184 = vadd.f32 0.0, %v3183
        %v3185 = vpop.f32.mrf.mxu0
        %3186 = vmatprep.mubr.bf16.mxu0 0
        %3187 = vmatmul.mubr.bf16.gmra.mxu0 %v3067
        %v3188 = vpop.f32.mrf.mxu0
        %v3189 = vadd.f32 0.0, %v3188
        %v3190 = vpop.f32.mrf.mxu0
        %v3191 = vpop.f32.mrf.mxu0
        %v3192 = vadd.f32 0.0, %v3191
        %v3193 = vpop.f32.mrf.mxu0
        %3194 = vmatprep.mubr.bf16.mxu0 0
        %3195 = vmatmul.mubr.bf16.gmra.mxu0 %v3070
        %v3196 = vpop.f32.mrf.mxu0
        %v3197 = vadd.f32 0.0, %v3196
        %v3198 = vpop.f32.mrf.mxu0
        %v3199 = vpop.f32.mrf.mxu0
        %v3200 = vadd.f32 0.0, %v3199
        %v3201 = vpop.f32.mrf.mxu0
        %3202 = vmatprep.mubr.bf16.mxu0 0
        %3203 = vmatmul.mubr.bf16.gmra.mxu0 %v3073
        %v3204 = vpop.f32.mrf.mxu0
        %v3205 = vadd.f32 0.0, %v3204
        %v3206 = vpop.f32.mrf.mxu0
        %v3207 = vpop.f32.mrf.mxu0
        %v3208 = vadd.f32 0.0, %v3207
        %v3209 = vpop.f32.mrf.mxu0
        %3210 = vmatprep.mubr.bf16.mxu0 0
        %3211 = vmatmul.mubr.bf16.gmra.mxu0 %v3076
        %v3212 = vpop.f32.mrf.mxu0
        %v3213 = vadd.f32 0.0, %v3212
        %v3214 = vpop.f32.mrf.mxu0
        %v3215 = vpop.f32.mrf.mxu0
        %v3216 = vadd.f32 0.0, %v3215
        %v3217 = vpop.f32.mrf.mxu0
        %3218 = vmatprep.mubr.bf16.mxu0 0
        %3219 = vmatmul.mubr.bf16.gmra.mxu0 %v3079
        %v3220 = vpop.f32.mrf.mxu0
        %v3221 = vadd.f32 0.0, %v3220
        %v3222 = vpop.f32.mrf.mxu0
        %v3223 = vpop.f32.mrf.mxu0
        %v3224 = vadd.f32 0.0, %v3223
        %v3225 = vpop.f32.mrf.mxu0
        %3226 = vmatprep.mubr.bf16.mxu0 0
        %3227 = vmatmul.mubr.bf16.gmra.mxu0 %v3082
        %v3228 = vpop.f32.mrf.mxu0
        %v3229 = vadd.f32 0.0, %v3228
        %v3230 = vpop.f32.mrf.mxu0
        %v3231 = vpop.f32.mrf.mxu0
        %v3232 = vadd.f32 0.0, %v3231
        %v3233 = vpop.f32.mrf.mxu0
        %3234 = vmatprep.mubr.bf16.mxu0 0
        %3235 = vmatmul.mubr.bf16.gmra.mxu0 %v3085
        %v3236 = vpop.f32.mrf.mxu0
        %v3237 = vadd.f32 0.0, %v3236
        %v3238 = vpop.f32.mrf.mxu0
        %v3239 = vpop.f32.mrf.mxu0
        %v3240 = vadd.f32 0.0, %v3239
        %v3241 = vpop.f32.mrf.mxu0
        %3242 = vmatprep.mubr.bf16.mxu0 0
        %3243 = vmatmul.mubr.bf16.gmra.mxu0 %v3088
        %v3244 = vpop.f32.mrf.mxu0
        %v3245 = vadd.f32 0.0, %v3244
        %v3246 = vpop.f32.mrf.mxu0
        %v3247 = vpop.f32.mrf.mxu0
        %v3248 = vadd.f32 0.0, %v3247
        %v3249 = vpop.f32.mrf.mxu0
        %3250 = vdwg.mxu0
        %v3251 = vadd.f32 %v2777, %v3125
        %v3252 = vadd.f32 %v2778, %v3128
        %v3253 = vadd.f32 %v2779, %v3133
        %v3254 = vadd.f32 %v2780, %v3136
        %v3255 = vadd.f32 %v2781, %v3141
        %v3256 = vadd.f32 %v2782, %v3144
        %v3257 = vadd.f32 %v2783, %v3149
        %v3258 = vadd.f32 %v2784, %v3152
        %v3259 = vadd.f32 %v2785, %v3157
        %v3260 = vadd.f32 %v2786, %v3160
        %v3261 = vadd.f32 %v2787, %v3165
        %v3262 = vadd.f32 %v2788, %v3168
        %v3263 = vadd.f32 %v2789, %v3173
        %v3264 = vadd.f32 %v2790, %v3176
        %v3265 = vadd.f32 %v2791, %v3181
        %v3266 = vadd.f32 %v2792, %v3184
        %v3267 = vadd.f32 %v2793, %v3189
        %v3268 = vadd.f32 %v2794, %v3192
        %v3269 = vadd.f32 %v2795, %v3197
        %v3270 = vadd.f32 %v2796, %v3200
        %v3271 = vadd.f32 %v2797, %v3205
        %v3272 = vadd.f32 %v2798, %v3208
        %v3273 = vadd.f32 %v2799, %v3213
        %v3274 = vadd.f32 %v2800, %v3216
        %v3275 = vadd.f32 %v2801, %v3221
        %v3276 = vadd.f32 %v2802, %v3224
        %v3277 = vadd.f32 %v2803, %v3229
        %v3278 = vadd.f32 %v2804, %v3232
        %v3279 = vadd.f32 %v2805, %v3237
        %v3280 = vadd.f32 %v2806, %v3240
        %v3281 = vadd.f32 %v2807, %v3245
        %v3282 = vadd.f32 %v2808, %v3248
        %s3283 = scalar_lea.vmem %s244, 24
        %v3284 = vld [vmem:[%s3283] sm:$0xf]
        %v3285 = vld [vmem:[%s3283 + $0x4] sm:$0xf]
        %v3286 = vld [vmem:[%s3283 + $0xc] sm:$0xf]
        %v3287 = vld [vmem:[%s3283 + $0x10] sm:$0xf]
        %v3288 = vld [vmem:[%s3283 + $0x18] sm:$0xf]
        %v3289 = vld [vmem:[%s3283 + $0x1c] sm:$0xf]
        %v3290 = vld [vmem:[%s3283 + $0x24] sm:$0xf]
        %v3291 = vld [vmem:[%s3283 + $0x28] sm:$0xf]
        %v3292 = vld [vmem:[%s3283 + $0x30] sm:$0xf]
        %v3293 = vld [vmem:[%s3283 + $0x34] sm:$0xf]
        %v3294 = vld [vmem:[%s3283 + $0x3c] sm:$0xf]
        %v3295 = vld [vmem:[%s3283 + $0x40] sm:$0xf]
        %v3296 = vld [vmem:[%s3283 + $0x48] sm:$0xf]
        %v3297 = vld [vmem:[%s3283 + $0x4c] sm:$0xf]
        %v3298 = vld [vmem:[%s3283 + $0x54] sm:$0xf]
        %v3299 = vld [vmem:[%s3283 + $0x58] sm:$0xf]
        %v3300 = vld [vmem:[%s3283 + $0x60] sm:$0xf]
        %v3301 = vld [vmem:[%s3283 + $0x64] sm:$0xf]
        %v3302 = vld [vmem:[%s3283 + $0x6c] sm:$0xf]
        %v3303 = vld [vmem:[%s3283 + $0x70] sm:$0xf]
        %v3304 = vld [vmem:[%s3283 + $0x78] sm:$0xf]
        %v3305 = vld [vmem:[%s3283 + $0x7c] sm:$0xf]
        %v3306 = vld [vmem:[%s3283 + $0x84] sm:$0xf]
        %v3307 = vld [vmem:[%s3283 + $0x88] sm:$0xf]
        %v3308 = vld [vmem:[%s3283 + $0x90] sm:$0xf]
        %v3309 = vld [vmem:[%s3283 + $0x94] sm:$0xf]
        %v3310 = vld [vmem:[%s3283 + $0x9c] sm:$0xf]
        %v3311 = vld [vmem:[%s3283 + $0xa0] sm:$0xf]
        %v3312 = vld [vmem:[%s3283 + $0xa8] sm:$0xf]
        %v3313 = vld [vmem:[%s3283 + $0xac] sm:$0xf]
        %v3314 = vld [vmem:[%s3283 + $0xb4] sm:$0xf]
        %v3315 = vld [vmem:[%s3283 + $0xb8] sm:$0xf]
        %s3316 = scalar_lea.vmem %s248, 48
        %v3317 = vld [vmem:[%s3316] sm:$0xf]
        %v3318 = vld [vmem:[%s3316 + $0x4] sm:$0xf]
        %v3351 = vunpack.c.l.b16 %v3284
        %v3352 = vunpack.c.l.b16 %v3285
        %v3353 = vunpack.c.l.b16 %v3286
        %v3354 = vunpack.c.l.b16 %v3287
        %v3355 = vunpack.c.l.b16 %v3288
        %v3356 = vunpack.c.l.b16 %v3289
        %v3357 = vunpack.c.l.b16 %v3290
        %v3358 = vunpack.c.l.b16 %v3291
        %v3359 = vunpack.c.l.b16 %v3292
        %v3360 = vunpack.c.l.b16 %v3293
        %v3361 = vunpack.c.l.b16 %v3294
        %v3362 = vunpack.c.l.b16 %v3295
        %v3363 = vunpack.c.l.b16 %v3296
        %v3364 = vunpack.c.l.b16 %v3297
        %v3365 = vunpack.c.l.b16 %v3298
        %v3366 = vunpack.c.l.b16 %v3299
        %v3367 = vunpack.c.l.b16 %v3300
        %v3368 = vunpack.c.l.b16 %v3301
        %v3369 = vunpack.c.l.b16 %v3302
        %v3370 = vunpack.c.l.b16 %v3303
        %v3371 = vunpack.c.l.b16 %v3304
        %v3372 = vunpack.c.l.b16 %v3305
        %v3373 = vunpack.c.l.b16 %v3306
        %v3374 = vunpack.c.l.b16 %v3307
        %v3375 = vunpack.c.l.b16 %v3308
        %v3376 = vunpack.c.l.b16 %v3309
        %v3377 = vunpack.c.l.b16 %v3310
        %v3378 = vunpack.c.l.b16 %v3311
        %v3379 = vunpack.c.l.b16 %v3312
        %v3380 = vunpack.c.l.b16 %v3313
        %v3381 = vunpack.c.l.b16 %v3314
        %v3382 = vunpack.c.l.b16 %v3315
        %v3383 = vpack.c.b16 %v3352, %v3351
        %v3384 = vpack.c.b16 %v3354, %v3353
        %v3385 = vpack.c.b16 %v3356, %v3355
        %v3386 = vpack.c.b16 %v3358, %v3357
        %v3387 = vpack.c.b16 %v3360, %v3359
        %v3388 = vpack.c.b16 %v3362, %v3361
        %v3389 = vpack.c.b16 %v3364, %v3363
        %v3390 = vpack.c.b16 %v3366, %v3365
        %v3391 = vpack.c.b16 %v3368, %v3367
        %v3392 = vpack.c.b16 %v3370, %v3369
        %v3393 = vpack.c.b16 %v3372, %v3371
        %v3394 = vpack.c.b16 %v3374, %v3373
        %v3395 = vpack.c.b16 %v3376, %v3375
        %v3396 = vpack.c.b16 %v3378, %v3377
        %v3397 = vpack.c.b16 %v3380, %v3379
        %v3398 = vpack.c.b16 %v3382, %v3381
        %v3401 = vunpack.c.l.b16 %v3317
        %v3402 = vunpack.c.l.b16 %v3318
        %v3403 = vpack.c.b16 %v3402, %v3401
        %v3406 = vsel %vm750, %v3383, 0
        %v3409 = vsel %vm750, %v3384, 0
        %v3412 = vsel %vm750, %v3385, 0
        %v3415 = vsel %vm750, %v3386, 0
        %v3418 = vsel %vm750, %v3387, 0
        %v3421 = vsel %vm750, %v3388, 0
        %v3424 = vsel %vm750, %v3389, 0
        %v3427 = vsel %vm750, %v3390, 0
        %v3430 = vsel %vm750, %v3391, 0
        %v3433 = vsel %vm750, %v3392, 0
        %v3436 = vsel %vm750, %v3393, 0
        %v3439 = vsel %vm750, %v3394, 0
        %v3442 = vsel %vm750, %v3395, 0
        %v3445 = vsel %vm750, %v3396, 0
        %v3448 = vsel %vm750, %v3397, 0
        %v3451 = vsel %vm750, %v3398, 0
        %3453 = vmatprep.subr.bf16.mxu0 0
        %3454 = vmatpush1.bf16.msra.mxu0 0
        %3455 = vmatprep.subr.bf16.mxu0 0
        %3456 = vmatpush1.bf16.msra.mxu0 0
        %3457 = vmatprep.subr.bf16.mxu0 0
        %3458 = vmatpush1.bf16.msra.mxu0 0
        %3459 = vmatprep.subr.bf16.mxu0 0
        %3460 = vmatpush1.bf16.msra.mxu0 0
        %3461 = vmatprep.subr.bf16.mxu0 0
        %3462 = vmatpush1.bf16.msra.mxu0 0
        %3463 = vmatprep.subr.bf16.mxu0 0
        %3464 = vmatpush1.bf16.msra.mxu0 0
        %3465 = vmatprep.subr.bf16.mxu0 0
        %3466 = vmatpush1.bf16.msra.mxu0 0
        %3467 = vmatprep.subr.bf16.mxu0 0
        %3468 = vmatpush1.bf16.msra.mxu0 %v3403
        %3469 = vmatprep.subr.bf16.mxu0 0
        %3470 = vmatpush2.bf16.msra.mxu0 0
        %3471 = vmatprep.subr.bf16.mxu0 0
        %3472 = vmatpush2.bf16.msra.mxu0 0
        %3473 = vmatprep.subr.bf16.mxu0 0
        %3474 = vmatpush2.bf16.msra.mxu0 0
        %3475 = vmatprep.subr.bf16.mxu0 0
        %3476 = vmatpush2.bf16.msra.mxu0 0
        %3477 = vmatprep.subr.bf16.mxu0 0
        %3478 = vmatpush2.bf16.msra.mxu0 0
        %3479 = vmatprep.subr.bf16.mxu0 0
        %3480 = vmatpush2.bf16.msra.mxu0 0
        %3481 = vmatprep.subr.bf16.mxu0 0
        %3482 = vmatpush2.bf16.msra.mxu0 0
        %3483 = vmatprep.subr.bf16.mxu0 0
        %3484 = vmatpush2.bf16.msra.mxu0 0
        %3485 = vmatprep.mubr.bf16.mxu0 0
        %3486 = vmatmul.mubr.bf16.gmra.mxu0 %v3406
        %v3487 = vpop.f32.mrf.mxu0
        %v3488 = vadd.f32 0.0, %v3487
        %v3489 = vpop.f32.mrf.mxu0
        %v3490 = vpop.f32.mrf.mxu0
        %v3491 = vadd.f32 0.0, %v3490
        %v3492 = vpop.f32.mrf.mxu0
        %3493 = vmatprep.mubr.bf16.mxu0 0
        %3494 = vmatmul.mubr.bf16.gmra.mxu0 %v3409
        %v3495 = vpop.f32.mrf.mxu0
        %v3496 = vadd.f32 0.0, %v3495
        %v3497 = vpop.f32.mrf.mxu0
        %v3498 = vpop.f32.mrf.mxu0
        %v3499 = vadd.f32 0.0, %v3498
        %v3500 = vpop.f32.mrf.mxu0
        %3501 = vmatprep.mubr.bf16.mxu0 0
        %3502 = vmatmul.mubr.bf16.gmra.mxu0 %v3412
        %v3503 = vpop.f32.mrf.mxu0
        %v3504 = vadd.f32 0.0, %v3503
        %v3505 = vpop.f32.mrf.mxu0
        %v3506 = vpop.f32.mrf.mxu0
        %v3507 = vadd.f32 0.0, %v3506
        %v3508 = vpop.f32.mrf.mxu0
        %3509 = vmatprep.mubr.bf16.mxu0 0
        %3510 = vmatmul.mubr.bf16.gmra.mxu0 %v3415
        %v3511 = vpop.f32.mrf.mxu0
        %v3512 = vadd.f32 0.0, %v3511
        %v3513 = vpop.f32.mrf.mxu0
        %v3514 = vpop.f32.mrf.mxu0
        %v3515 = vadd.f32 0.0, %v3514
        %v3516 = vpop.f32.mrf.mxu0
        %3517 = vmatprep.mubr.bf16.mxu0 0
        %3518 = vmatmul.mubr.bf16.gmra.mxu0 %v3418
        %v3519 = vpop.f32.mrf.mxu0
        %v3520 = vadd.f32 0.0, %v3519
        %v3521 = vpop.f32.mrf.mxu0
        %v3522 = vpop.f32.mrf.mxu0
        %v3523 = vadd.f32 0.0, %v3522
        %v3524 = vpop.f32.mrf.mxu0
        %3525 = vmatprep.mubr.bf16.mxu0 0
        %3526 = vmatmul.mubr.bf16.gmra.mxu0 %v3421
        %v3527 = vpop.f32.mrf.mxu0
        %v3528 = vadd.f32 0.0, %v3527
        %v3529 = vpop.f32.mrf.mxu0
        %v3530 = vpop.f32.mrf.mxu0
        %v3531 = vadd.f32 0.0, %v3530
        %v3532 = vpop.f32.mrf.mxu0
        %3533 = vmatprep.mubr.bf16.mxu0 0
        %3534 = vmatmul.mubr.bf16.gmra.mxu0 %v3424
        %v3535 = vpop.f32.mrf.mxu0
        %v3536 = vadd.f32 0.0, %v3535
        %v3537 = vpop.f32.mrf.mxu0
        %v3538 = vpop.f32.mrf.mxu0
        %v3539 = vadd.f32 0.0, %v3538
        %v3540 = vpop.f32.mrf.mxu0
        %3541 = vmatprep.mubr.bf16.mxu0 0
        %3542 = vmatmul.mubr.bf16.gmra.mxu0 %v3427
        %v3543 = vpop.f32.mrf.mxu0
        %v3544 = vadd.f32 0.0, %v3543
        %v3545 = vpop.f32.mrf.mxu0
        %v3546 = vpop.f32.mrf.mxu0
        %v3547 = vadd.f32 0.0, %v3546
        %v3548 = vpop.f32.mrf.mxu0
        %3549 = vmatprep.mubr.bf16.mxu0 0
        %3550 = vmatmul.mubr.bf16.gmra.mxu0 %v3430
        %v3551 = vpop.f32.mrf.mxu0
        %v3552 = vadd.f32 0.0, %v3551
        %v3553 = vpop.f32.mrf.mxu0
        %v3554 = vpop.f32.mrf.mxu0
        %v3555 = vadd.f32 0.0, %v3554
        %v3556 = vpop.f32.mrf.mxu0
        %3557 = vmatprep.mubr.bf16.mxu0 0
        %3558 = vmatmul.mubr.bf16.gmra.mxu0 %v3433
        %v3559 = vpop.f32.mrf.mxu0
        %v3560 = vadd.f32 0.0, %v3559
        %v3561 = vpop.f32.mrf.mxu0
        %v3562 = vpop.f32.mrf.mxu0
        %v3563 = vadd.f32 0.0, %v3562
        %v3564 = vpop.f32.mrf.mxu0
        %3565 = vmatprep.mubr.bf16.mxu0 0
        %3566 = vmatmul.mubr.bf16.gmra.mxu0 %v3436
        %v3567 = vpop.f32.mrf.mxu0
        %v3568 = vadd.f32 0.0, %v3567
        %v3569 = vpop.f32.mrf.mxu0
        %v3570 = vpop.f32.mrf.mxu0
        %v3571 = vadd.f32 0.0, %v3570
        %v3572 = vpop.f32.mrf.mxu0
        %3573 = vmatprep.mubr.bf16.mxu0 0
        %3574 = vmatmul.mubr.bf16.gmra.mxu0 %v3439
        %v3575 = vpop.f32.mrf.mxu0
        %v3576 = vadd.f32 0.0, %v3575
        %v3577 = vpop.f32.mrf.mxu0
        %v3578 = vpop.f32.mrf.mxu0
        %v3579 = vadd.f32 0.0, %v3578
        %v3580 = vpop.f32.mrf.mxu0
        %3581 = vmatprep.mubr.bf16.mxu0 0
        %3582 = vmatmul.mubr.bf16.gmra.mxu0 %v3442
        %v3583 = vpop.f32.mrf.mxu0
        %v3584 = vadd.f32 0.0, %v3583
        %v3585 = vpop.f32.mrf.mxu0
        %v3586 = vpop.f32.mrf.mxu0
        %v3587 = vadd.f32 0.0, %v3586
        %v3588 = vpop.f32.mrf.mxu0
        %3589 = vmatprep.mubr.bf16.mxu0 0
        %3590 = vmatmul.mubr.bf16.gmra.mxu0 %v3445
        %v3591 = vpop.f32.mrf.mxu0
        %v3592 = vadd.f32 0.0, %v3591
        %v3593 = vpop.f32.mrf.mxu0
        %v3594 = vpop.f32.mrf.mxu0
        %v3595 = vadd.f32 0.0, %v3594
        %v3596 = vpop.f32.mrf.mxu0
        %3597 = vmatprep.mubr.bf16.mxu0 0
        %3598 = vmatmul.mubr.bf16.gmra.mxu0 %v3448
        %v3599 = vpop.f32.mrf.mxu0
        %v3600 = vadd.f32 0.0, %v3599
        %v3601 = vpop.f32.mrf.mxu0
        %v3602 = vpop.f32.mrf.mxu0
        %v3603 = vadd.f32 0.0, %v3602
        %v3604 = vpop.f32.mrf.mxu0
        %3605 = vmatprep.mubr.bf16.mxu0 0
        %3606 = vmatmul.mubr.bf16.gmra.mxu0 %v3451
        %v3607 = vpop.f32.mrf.mxu0
        %v3608 = vadd.f32 0.0, %v3607
        %v3609 = vpop.f32.mrf.mxu0
        %v3610 = vpop.f32.mrf.mxu0
        %v3611 = vadd.f32 0.0, %v3610
        %v3612 = vpop.f32.mrf.mxu0
        %3613 = vdwg.mxu0
        %v3614 = vadd.f32 %v3251, %v3488
        %v3615 = vadd.f32 %v3252, %v3491
        %v3616 = vadd.f32 %v3253, %v3496
        %v3617 = vadd.f32 %v3254, %v3499
        %v3618 = vadd.f32 %v3255, %v3504
        %v3619 = vadd.f32 %v3256, %v3507
        %v3620 = vadd.f32 %v3257, %v3512
        %v3621 = vadd.f32 %v3258, %v3515
        %v3622 = vadd.f32 %v3259, %v3520
        %v3623 = vadd.f32 %v3260, %v3523
        %v3624 = vadd.f32 %v3261, %v3528
        %v3625 = vadd.f32 %v3262, %v3531
        %v3626 = vadd.f32 %v3263, %v3536
        %v3627 = vadd.f32 %v3264, %v3539
        %v3628 = vadd.f32 %v3265, %v3544
        %v3629 = vadd.f32 %v3266, %v3547
        %v3630 = vadd.f32 %v3267, %v3552
        %v3631 = vadd.f32 %v3268, %v3555
        %v3632 = vadd.f32 %v3269, %v3560
        %v3633 = vadd.f32 %v3270, %v3563
        %v3634 = vadd.f32 %v3271, %v3568
        %v3635 = vadd.f32 %v3272, %v3571
        %v3636 = vadd.f32 %v3273, %v3576
        %v3637 = vadd.f32 %v3274, %v3579
        %v3638 = vadd.f32 %v3275, %v3584
        %v3639 = vadd.f32 %v3276, %v3587
        %v3640 = vadd.f32 %v3277, %v3592
        %v3641 = vadd.f32 %v3278, %v3595
        %v3642 = vadd.f32 %v3279, %v3600
        %v3643 = vadd.f32 %v3280, %v3603
        %v3644 = vadd.f32 %v3281, %v3608
        %v3645 = vadd.f32 %v3282, %v3611
        %v3646 = vld [vmem:[%s3283] sm:$0xf]
        %v3647 = vld [vmem:[%s3283 + $0x4] sm:$0xf]
        %v3648 = vld [vmem:[%s3283 + $0x8] sm:$0x1]
        %v3649 = vld [vmem:[%s3283 + $0xc] sm:$0xf]
        %v3650 = vld [vmem:[%s3283 + $0x10] sm:$0xf]
        %v3651 = vld [vmem:[%s3283 + $0x14] sm:$0x1]
        %v3652 = vld [vmem:[%s3283 + $0x18] sm:$0xf]
        %v3653 = vld [vmem:[%s3283 + $0x1c] sm:$0xf]
        %v3654 = vld [vmem:[%s3283 + $0x20] sm:$0x1]
        %v3655 = vld [vmem:[%s3283 + $0x24] sm:$0xf]
        %v3656 = vld [vmem:[%s3283 + $0x28] sm:$0xf]
        %v3657 = vld [vmem:[%s3283 + $0x2c] sm:$0x1]
        %v3658 = vld [vmem:[%s3283 + $0x30] sm:$0xf]
        %v3659 = vld [vmem:[%s3283 + $0x34] sm:$0xf]
        %v3660 = vld [vmem:[%s3283 + $0x38] sm:$0x1]
        %v3661 = vld [vmem:[%s3283 + $0x3c] sm:$0xf]
        %v3662 = vld [vmem:[%s3283 + $0x40] sm:$0xf]
        %v3663 = vld [vmem:[%s3283 + $0x44] sm:$0x1]
        %v3664 = vld [vmem:[%s3283 + $0x48] sm:$0xf]
        %v3665 = vld [vmem:[%s3283 + $0x4c] sm:$0xf]
        %v3666 = vld [vmem:[%s3283 + $0x50] sm:$0x1]
        %v3667 = vld [vmem:[%s3283 + $0x54] sm:$0xf]
        %v3668 = vld [vmem:[%s3283 + $0x58] sm:$0xf]
        %v3669 = vld [vmem:[%s3283 + $0x5c] sm:$0x1]
        %v3670 = vld [vmem:[%s3283 + $0x60] sm:$0xf]
        %v3671 = vld [vmem:[%s3283 + $0x64] sm:$0xf]
        %v3672 = vld [vmem:[%s3283 + $0x68] sm:$0x1]
        %v3673 = vld [vmem:[%s3283 + $0x6c] sm:$0xf]
        %v3674 = vld [vmem:[%s3283 + $0x70] sm:$0xf]
        %v3675 = vld [vmem:[%s3283 + $0x74] sm:$0x1]
        %v3676 = vld [vmem:[%s3283 + $0x78] sm:$0xf]
        %v3677 = vld [vmem:[%s3283 + $0x7c] sm:$0xf]
        %v3678 = vld [vmem:[%s3283 + $0x80] sm:$0x1]
        %v3679 = vld [vmem:[%s3283 + $0x84] sm:$0xf]
        %v3680 = vld [vmem:[%s3283 + $0x88] sm:$0xf]
        %v3681 = vld [vmem:[%s3283 + $0x8c] sm:$0x1]
        %v3682 = vld [vmem:[%s3283 + $0x90] sm:$0xf]
        %v3683 = vld [vmem:[%s3283 + $0x94] sm:$0xf]
        %v3684 = vld [vmem:[%s3283 + $0x98] sm:$0x1]
        %v3685 = vld [vmem:[%s3283 + $0x9c] sm:$0xf]
        %v3686 = vld [vmem:[%s3283 + $0xa0] sm:$0xf]
        %v3687 = vld [vmem:[%s3283 + $0xa4] sm:$0x1]
        %v3688 = vld [vmem:[%s3283 + $0xa8] sm:$0xf]
        %v3689 = vld [vmem:[%s3283 + $0xac] sm:$0xf]
        %v3690 = vld [vmem:[%s3283 + $0xb0] sm:$0x1]
        %v3691 = vld [vmem:[%s3283 + $0xb4] sm:$0xf]
        %v3692 = vld [vmem:[%s3283 + $0xb8] sm:$0xf]
        %v3693 = vld [vmem:[%s3283 + $0xbc] sm:$0x1]
        %v3695 = vshrl.u32 %v3646, 16
        %v3697 = vrot.slane %v3695, 4
        %v3698 = vshll.u32 %v3646, 16
        %v3700 = vrot.slane %v3698, 5
        %v3701 = vor.u32 %v3697, %v3700
        %v3702 = vrot.slane %v3701, 4
        %v3704 = vshll.u32 %v3647, 16
        %v3706 = vrot.slane %v3704, 5
        %v3707 = vsel %vm308, %v3702, %v3706
        %v3708 = vshrl.u32 %v3647, 16
        %v3710 = vrot.slane %v3708, 4
        %v3711 = vor.u32 %v3710, %v3706
        %v3712 = vrot.slane %v3711, 4
        %v3714 = vshll.u32 %v3648, 16
        %v3716 = vrot.slane %v3714, 5
        %v3717 = vsel %vm308, %v3712, %v3716
        %v3719 = vshrl.u32 %v3649, 16
        %v3721 = vrot.slane %v3719, 4
        %v3722 = vshll.u32 %v3649, 16
        %v3724 = vrot.slane %v3722, 5
        %v3725 = vor.u32 %v3721, %v3724
        %v3726 = vrot.slane %v3725, 4
        %v3728 = vshll.u32 %v3650, 16
        %v3730 = vrot.slane %v3728, 5
        %v3731 = vsel %vm308, %v3726, %v3730
        %v3732 = vshrl.u32 %v3650, 16
        %v3734 = vrot.slane %v3732, 4
        %v3735 = vor.u32 %v3734, %v3730
        %v3736 = vrot.slane %v3735, 4
        %v3738 = vshll.u32 %v3651, 16
        %v3740 = vrot.slane %v3738, 5
        %v3741 = vsel %vm308, %v3736, %v3740
        %v3743 = vshrl.u32 %v3652, 16
        %v3745 = vrot.slane %v3743, 4
        %v3746 = vshll.u32 %v3652, 16
        %v3748 = vrot.slane %v3746, 5
        %v3749 = vor.u32 %v3745, %v3748
        %v3750 = vrot.slane %v3749, 4
        %v3752 = vshll.u32 %v3653, 16
        %v3754 = vrot.slane %v3752, 5
        %v3755 = vsel %vm308, %v3750, %v3754
        %v3756 = vshrl.u32 %v3653, 16
        %v3758 = vrot.slane %v3756, 4
        %v3759 = vor.u32 %v3758, %v3754
        %v3760 = vrot.slane %v3759, 4
        %v3762 = vshll.u32 %v3654, 16
        %v3764 = vrot.slane %v3762, 5
        %v3765 = vsel %vm308, %v3760, %v3764
        %v3767 = vshrl.u32 %v3655, 16
        %v3769 = vrot.slane %v3767, 4
        %v3770 = vshll.u32 %v3655, 16
        %v3772 = vrot.slane %v3770, 5
        %v3773 = vor.u32 %v3769, %v3772
        %v3774 = vrot.slane %v3773, 4
        %v3776 = vshll.u32 %v3656, 16
        %v3778 = vrot.slane %v3776, 5
        %v3779 = vsel %vm308, %v3774, %v3778
        %v3780 = vshrl.u32 %v3656, 16
        %v3782 = vrot.slane %v3780, 4
        %v3783 = vor.u32 %v3782, %v3778
        %v3784 = vrot.slane %v3783, 4
        %v3786 = vshll.u32 %v3657, 16
        %v3788 = vrot.slane %v3786, 5
        %v3789 = vsel %vm308, %v3784, %v3788
        %v3791 = vshrl.u32 %v3658, 16
        %v3793 = vrot.slane %v3791, 4
        %v3794 = vshll.u32 %v3658, 16
        %v3796 = vrot.slane %v3794, 5
        %v3797 = vor.u32 %v3793, %v3796
        %v3798 = vrot.slane %v3797, 4
        %v3800 = vshll.u32 %v3659, 16
        %v3802 = vrot.slane %v3800, 5
        %v3803 = vsel %vm308, %v3798, %v3802
        %v3804 = vshrl.u32 %v3659, 16
        %v3806 = vrot.slane %v3804, 4
        %v3807 = vor.u32 %v3806, %v3802
        %v3808 = vrot.slane %v3807, 4
        %v3810 = vshll.u32 %v3660, 16
        %v3812 = vrot.slane %v3810, 5
        %v3813 = vsel %vm308, %v3808, %v3812
        %v3815 = vshrl.u32 %v3661, 16
        %v3817 = vrot.slane %v3815, 4
        %v3818 = vshll.u32 %v3661, 16
        %v3820 = vrot.slane %v3818, 5
        %v3821 = vor.u32 %v3817, %v3820
        %v3822 = vrot.slane %v3821, 4
        %v3824 = vshll.u32 %v3662, 16
        %v3826 = vrot.slane %v3824, 5
        %v3827 = vsel %vm308, %v3822, %v3826
        %v3828 = vshrl.u32 %v3662, 16
        %v3830 = vrot.slane %v3828, 4
        %v3831 = vor.u32 %v3830, %v3826
        %v3832 = vrot.slane %v3831, 4
        %v3834 = vshll.u32 %v3663, 16
        %v3836 = vrot.slane %v3834, 5
        %v3837 = vsel %vm308, %v3832, %v3836
        %v3839 = vshrl.u32 %v3664, 16
        %v3841 = vrot.slane %v3839, 4
        %v3842 = vshll.u32 %v3664, 16
        %v3844 = vrot.slane %v3842, 5
        %v3845 = vor.u32 %v3841, %v3844
        %v3846 = vrot.slane %v3845, 4
        %v3848 = vshll.u32 %v3665, 16
        %v3850 = vrot.slane %v3848, 5
        %v3851 = vsel %vm308, %v3846, %v3850
        %v3852 = vshrl.u32 %v3665, 16
        %v3854 = vrot.slane %v3852, 4
        %v3855 = vor.u32 %v3854, %v3850
        %v3856 = vrot.slane %v3855, 4
        %v3858 = vshll.u32 %v3666, 16
        %v3860 = vrot.slane %v3858, 5
        %v3861 = vsel %vm308, %v3856, %v3860
        %v3863 = vshrl.u32 %v3667, 16
        %v3865 = vrot.slane %v3863, 4
        %v3866 = vshll.u32 %v3667, 16
        %v3868 = vrot.slane %v3866, 5
        %v3869 = vor.u32 %v3865, %v3868
        %v3870 = vrot.slane %v3869, 4
        %v3872 = vshll.u32 %v3668, 16
        %v3874 = vrot.slane %v3872, 5
        %v3875 = vsel %vm308, %v3870, %v3874
        %v3876 = vshrl.u32 %v3668, 16
        %v3878 = vrot.slane %v3876, 4
        %v3879 = vor.u32 %v3878, %v3874
        %v3880 = vrot.slane %v3879, 4
        %v3882 = vshll.u32 %v3669, 16
        %v3884 = vrot.slane %v3882, 5
        %v3885 = vsel %vm308, %v3880, %v3884
        %v3887 = vshrl.u32 %v3670, 16
        %v3889 = vrot.slane %v3887, 4
        %v3890 = vshll.u32 %v3670, 16
        %v3892 = vrot.slane %v3890, 5
        %v3893 = vor.u32 %v3889, %v3892
        %v3894 = vrot.slane %v3893, 4
        %v3896 = vshll.u32 %v3671, 16
        %v3898 = vrot.slane %v3896, 5
        %v3899 = vsel %vm308, %v3894, %v3898
        %v3900 = vshrl.u32 %v3671, 16
        %v3902 = vrot.slane %v3900, 4
        %v3903 = vor.u32 %v3902, %v3898
        %v3904 = vrot.slane %v3903, 4
        %v3906 = vshll.u32 %v3672, 16
        %v3908 = vrot.slane %v3906, 5
        %v3909 = vsel %vm308, %v3904, %v3908
        %v3911 = vshrl.u32 %v3673, 16
        %v3913 = vrot.slane %v3911, 4
        %v3914 = vshll.u32 %v3673, 16
        %v3916 = vrot.slane %v3914, 5
        %v3917 = vor.u32 %v3913, %v3916
        %v3918 = vrot.slane %v3917, 4
        %v3920 = vshll.u32 %v3674, 16
        %v3922 = vrot.slane %v3920, 5
        %v3923 = vsel %vm308, %v3918, %v3922
        %v3924 = vshrl.u32 %v3674, 16
        %v3926 = vrot.slane %v3924, 4
        %v3927 = vor.u32 %v3926, %v3922
        %v3928 = vrot.slane %v3927, 4
        %v3930 = vshll.u32 %v3675, 16
        %v3932 = vrot.slane %v3930, 5
        %v3933 = vsel %vm308, %v3928, %v3932
        %v3935 = vshrl.u32 %v3676, 16
        %v3937 = vrot.slane %v3935, 4
        %v3938 = vshll.u32 %v3676, 16
        %v3940 = vrot.slane %v3938, 5
        %v3941 = vor.u32 %v3937, %v3940
        %v3942 = vrot.slane %v3941, 4
        %v3944 = vshll.u32 %v3677, 16
        %v3946 = vrot.slane %v3944, 5
        %v3947 = vsel %vm308, %v3942, %v3946
        %v3948 = vshrl.u32 %v3677, 16
        %v3950 = vrot.slane %v3948, 4
        %v3951 = vor.u32 %v3950, %v3946
        %v3952 = vrot.slane %v3951, 4
        %v3954 = vshll.u32 %v3678, 16
        %v3956 = vrot.slane %v3954, 5
        %v3957 = vsel %vm308, %v3952, %v3956
        %v3959 = vshrl.u32 %v3679, 16
        %v3961 = vrot.slane %v3959, 4
        %v3962 = vshll.u32 %v3679, 16
        %v3964 = vrot.slane %v3962, 5
        %v3965 = vor.u32 %v3961, %v3964
        %v3966 = vrot.slane %v3965, 4
        %v3968 = vshll.u32 %v3680, 16
        %v3970 = vrot.slane %v3968, 5
        %v3971 = vsel %vm308, %v3966, %v3970
        %v3972 = vshrl.u32 %v3680, 16
        %v3974 = vrot.slane %v3972, 4
        %v3975 = vor.u32 %v3974, %v3970
        %v3976 = vrot.slane %v3975, 4
        %v3978 = vshll.u32 %v3681, 16
        %v3980 = vrot.slane %v3978, 5
        %v3981 = vsel %vm308, %v3976, %v3980
        %v3983 = vshrl.u32 %v3682, 16
        %v3985 = vrot.slane %v3983, 4
        %v3986 = vshll.u32 %v3682, 16
        %v3988 = vrot.slane %v3986, 5
        %v3989 = vor.u32 %v3985, %v3988
        %v3990 = vrot.slane %v3989, 4
        %v3992 = vshll.u32 %v3683, 16
        %v3994 = vrot.slane %v3992, 5
        %v3995 = vsel %vm308, %v3990, %v3994
        %v3996 = vshrl.u32 %v3683, 16
        %v3998 = vrot.slane %v3996, 4
        %v3999 = vor.u32 %v3998, %v3994
        %v4000 = vrot.slane %v3999, 4
        %v4002 = vshll.u32 %v3684, 16
        %v4004 = vrot.slane %v4002, 5
        %v4005 = vsel %vm308, %v4000, %v4004
        %v4007 = vshrl.u32 %v3685, 16
        %v4009 = vrot.slane %v4007, 4
        %v4010 = vshll.u32 %v3685, 16
        %v4012 = vrot.slane %v4010, 5
        %v4013 = vor.u32 %v4009, %v4012
        %v4014 = vrot.slane %v4013, 4
        %v4016 = vshll.u32 %v3686, 16
        %v4018 = vrot.slane %v4016, 5
        %v4019 = vsel %vm308, %v4014, %v4018
        %v4020 = vshrl.u32 %v3686, 16
        %v4022 = vrot.slane %v4020, 4
        %v4023 = vor.u32 %v4022, %v4018
        %v4024 = vrot.slane %v4023, 4
        %v4026 = vshll.u32 %v3687, 16
        %v4028 = vrot.slane %v4026, 5
        %v4029 = vsel %vm308, %v4024, %v4028
        %v4031 = vshrl.u32 %v3688, 16
        %v4033 = vrot.slane %v4031, 4
        %v4034 = vshll.u32 %v3688, 16
        %v4036 = vrot.slane %v4034, 5
        %v4037 = vor.u32 %v4033, %v4036
        %v4038 = vrot.slane %v4037, 4
        %v4040 = vshll.u32 %v3689, 16
        %v4042 = vrot.slane %v4040, 5
        %v4043 = vsel %vm308, %v4038, %v4042
        %v4044 = vshrl.u32 %v3689, 16
        %v4046 = vrot.slane %v4044, 4
        %v4047 = vor.u32 %v4046, %v4042
        %v4048 = vrot.slane %v4047, 4
        %v4050 = vshll.u32 %v3690, 16
        %v4052 = vrot.slane %v4050, 5
        %v4053 = vsel %vm308, %v4048, %v4052
        %v4055 = vshrl.u32 %v3691, 16
        %v4057 = vrot.slane %v4055, 4
        %v4058 = vshll.u32 %v3691, 16
        %v4060 = vrot.slane %v4058, 5
        %v4061 = vor.u32 %v4057, %v4060
        %v4062 = vrot.slane %v4061, 4
        %v4064 = vshll.u32 %v3692, 16
        %v4066 = vrot.slane %v4064, 5
        %v4067 = vsel %vm308, %v4062, %v4066
        %v4068 = vshrl.u32 %v3692, 16
        %v4070 = vrot.slane %v4068, 4
        %v4071 = vor.u32 %v4070, %v4066
        %v4072 = vrot.slane %v4071, 4
        %v4074 = vshll.u32 %v3693, 16
        %v4076 = vrot.slane %v4074, 5
        %v4077 = vsel %vm308, %v4072, %v4076
        %s4078 = scalar_lea.vmem %s248, 56
        %v4079 = vld [vmem:[%s4078] sm:$0xf]
        %v4080 = vld [vmem:[%s4078 + $0x4] sm:$0xf]
        %v4081 = vunpack.c.l.b16 %v3707
        %v4082 = vunpack.c.l.b16 %v3717
        %v4083 = vunpack.c.l.b16 %v3731
        %v4084 = vunpack.c.l.b16 %v3741
        %v4085 = vunpack.c.l.b16 %v3755
        %v4086 = vunpack.c.l.b16 %v3765
        %v4087 = vunpack.c.l.b16 %v3779
        %v4088 = vunpack.c.l.b16 %v3789
        %v4089 = vunpack.c.l.b16 %v3803
        %v4090 = vunpack.c.l.b16 %v3813
        %v4091 = vunpack.c.l.b16 %v3827
        %v4092 = vunpack.c.l.b16 %v3837
        %v4093 = vunpack.c.l.b16 %v3851
        %v4094 = vunpack.c.l.b16 %v3861
        %v4095 = vunpack.c.l.b16 %v3875
        %v4096 = vunpack.c.l.b16 %v3885
        %v4097 = vunpack.c.l.b16 %v3899
        %v4098 = vunpack.c.l.b16 %v3909
        %v4099 = vunpack.c.l.b16 %v3923
        %v4100 = vunpack.c.l.b16 %v3933
        %v4101 = vunpack.c.l.b16 %v3947
        %v4102 = vunpack.c.l.b16 %v3957
        %v4103 = vunpack.c.l.b16 %v3971
        %v4104 = vunpack.c.l.b16 %v3981
        %v4105 = vunpack.c.l.b16 %v3995
        %v4106 = vunpack.c.l.b16 %v4005
        %v4107 = vunpack.c.l.b16 %v4019
        %v4108 = vunpack.c.l.b16 %v4029
        %v4109 = vunpack.c.l.b16 %v4043
        %v4110 = vunpack.c.l.b16 %v4053
        %v4111 = vunpack.c.l.b16 %v4067
        %v4112 = vunpack.c.l.b16 %v4077
        %v4113 = vpack.c.b16 %v4082, %v4081
        %v4114 = vpack.c.b16 %v4084, %v4083
        %v4115 = vpack.c.b16 %v4086, %v4085
        %v4116 = vpack.c.b16 %v4088, %v4087
        %v4117 = vpack.c.b16 %v4090, %v4089
        %v4118 = vpack.c.b16 %v4092, %v4091
        %v4119 = vpack.c.b16 %v4094, %v4093
        %v4120 = vpack.c.b16 %v4096, %v4095
        %v4121 = vpack.c.b16 %v4098, %v4097
        %v4122 = vpack.c.b16 %v4100, %v4099
        %v4123 = vpack.c.b16 %v4102, %v4101
        %v4124 = vpack.c.b16 %v4104, %v4103
        %v4125 = vpack.c.b16 %v4106, %v4105
        %v4126 = vpack.c.b16 %v4108, %v4107
        %v4127 = vpack.c.b16 %v4110, %v4109
        %v4128 = vpack.c.b16 %v4112, %v4111
        %v4131 = vunpack.c.l.b16 %v4079
        %v4132 = vunpack.c.l.b16 %v4080
        %v4133 = vpack.c.b16 %v4132, %v4131
        %v4136 = vsel %vm750, %v4113, 0
        %v4139 = vsel %vm750, %v4114, 0
        %v4142 = vsel %vm750, %v4115, 0
        %v4145 = vsel %vm750, %v4116, 0
        %v4148 = vsel %vm750, %v4117, 0
        %v4151 = vsel %vm750, %v4118, 0
        %v4154 = vsel %vm750, %v4119, 0
        %v4157 = vsel %vm750, %v4120, 0
        %v4160 = vsel %vm750, %v4121, 0
        %v4163 = vsel %vm750, %v4122, 0
        %v4166 = vsel %vm750, %v4123, 0
        %v4169 = vsel %vm750, %v4124, 0
        %v4172 = vsel %vm750, %v4125, 0
        %v4175 = vsel %vm750, %v4126, 0
        %v4178 = vsel %vm750, %v4127, 0
        %v4181 = vsel %vm750, %v4128, 0
        %4183 = vmatprep.subr.bf16.mxu0 0
        %4184 = vmatpush1.bf16.msra.mxu0 0
        %4185 = vmatprep.subr.bf16.mxu0 0
        %4186 = vmatpush1.bf16.msra.mxu0 0
        %4187 = vmatprep.subr.bf16.mxu0 0
        %4188 = vmatpush1.bf16.msra.mxu0 0
        %4189 = vmatprep.subr.bf16.mxu0 0
        %4190 = vmatpush1.bf16.msra.mxu0 0
        %4191 = vmatprep.subr.bf16.mxu0 0
        %4192 = vmatpush1.bf16.msra.mxu0 0
        %4193 = vmatprep.subr.bf16.mxu0 0
        %4194 = vmatpush1.bf16.msra.mxu0 0
        %4195 = vmatprep.subr.bf16.mxu0 0
        %4196 = vmatpush1.bf16.msra.mxu0 0
        %4197 = vmatprep.subr.bf16.mxu0 0
        %4198 = vmatpush1.bf16.msra.mxu0 %v4133
        %4199 = vmatprep.subr.bf16.mxu0 0
        %4200 = vmatpush2.bf16.msra.mxu0 0
        %4201 = vmatprep.subr.bf16.mxu0 0
        %4202 = vmatpush2.bf16.msra.mxu0 0
        %4203 = vmatprep.subr.bf16.mxu0 0
        %4204 = vmatpush2.bf16.msra.mxu0 0
        %4205 = vmatprep.subr.bf16.mxu0 0
        %4206 = vmatpush2.bf16.msra.mxu0 0
        %4207 = vmatprep.subr.bf16.mxu0 0
        %4208 = vmatpush2.bf16.msra.mxu0 0
        %4209 = vmatprep.subr.bf16.mxu0 0
        %4210 = vmatpush2.bf16.msra.mxu0 0
        %4211 = vmatprep.subr.bf16.mxu0 0
        %4212 = vmatpush2.bf16.msra.mxu0 0
        %4213 = vmatprep.subr.bf16.mxu0 0
        %4214 = vmatpush2.bf16.msra.mxu0 0
        %4215 = vmatprep.mubr.bf16.mxu0 0
        %4216 = vmatmul.mubr.bf16.gmra.mxu0 %v4136
        %v4217 = vpop.f32.mrf.mxu0
        %v4218 = vadd.f32 0.0, %v4217
        %v4219 = vpop.f32.mrf.mxu0
        %v4220 = vpop.f32.mrf.mxu0
        %v4221 = vadd.f32 0.0, %v4220
        %v4222 = vpop.f32.mrf.mxu0
        %4223 = vmatprep.mubr.bf16.mxu0 0
        %4224 = vmatmul.mubr.bf16.gmra.mxu0 %v4139
        %v4225 = vpop.f32.mrf.mxu0
        %v4226 = vadd.f32 0.0, %v4225
        %v4227 = vpop.f32.mrf.mxu0
        %v4228 = vpop.f32.mrf.mxu0
        %v4229 = vadd.f32 0.0, %v4228
        %v4230 = vpop.f32.mrf.mxu0
        %4231 = vmatprep.mubr.bf16.mxu0 0
        %4232 = vmatmul.mubr.bf16.gmra.mxu0 %v4142
        %v4233 = vpop.f32.mrf.mxu0
        %v4234 = vadd.f32 0.0, %v4233
        %v4235 = vpop.f32.mrf.mxu0
        %v4236 = vpop.f32.mrf.mxu0
        %v4237 = vadd.f32 0.0, %v4236
        %v4238 = vpop.f32.mrf.mxu0
        %4239 = vmatprep.mubr.bf16.mxu0 0
        %4240 = vmatmul.mubr.bf16.gmra.mxu0 %v4145
        %v4241 = vpop.f32.mrf.mxu0
        %v4242 = vadd.f32 0.0, %v4241
        %v4243 = vpop.f32.mrf.mxu0
        %v4244 = vpop.f32.mrf.mxu0
        %v4245 = vadd.f32 0.0, %v4244
        %v4246 = vpop.f32.mrf.mxu0
        %4247 = vmatprep.mubr.bf16.mxu0 0
        %4248 = vmatmul.mubr.bf16.gmra.mxu0 %v4148
        %v4249 = vpop.f32.mrf.mxu0
        %v4250 = vadd.f32 0.0, %v4249
        %v4251 = vpop.f32.mrf.mxu0
        %v4252 = vpop.f32.mrf.mxu0
        %v4253 = vadd.f32 0.0, %v4252
        %v4254 = vpop.f32.mrf.mxu0
        %4255 = vmatprep.mubr.bf16.mxu0 0
        %4256 = vmatmul.mubr.bf16.gmra.mxu0 %v4151
        %v4257 = vpop.f32.mrf.mxu0
        %v4258 = vadd.f32 0.0, %v4257
        %v4259 = vpop.f32.mrf.mxu0
        %v4260 = vpop.f32.mrf.mxu0
        %v4261 = vadd.f32 0.0, %v4260
        %v4262 = vpop.f32.mrf.mxu0
        %4263 = vmatprep.mubr.bf16.mxu0 0
        %4264 = vmatmul.mubr.bf16.gmra.mxu0 %v4154
        %v4265 = vpop.f32.mrf.mxu0
        %v4266 = vadd.f32 0.0, %v4265
        %v4267 = vpop.f32.mrf.mxu0
        %v4268 = vpop.f32.mrf.mxu0
        %v4269 = vadd.f32 0.0, %v4268
        %v4270 = vpop.f32.mrf.mxu0
        %4271 = vmatprep.mubr.bf16.mxu0 0
        %4272 = vmatmul.mubr.bf16.gmra.mxu0 %v4157
        %v4273 = vpop.f32.mrf.mxu0
        %v4274 = vadd.f32 0.0, %v4273
        %v4275 = vpop.f32.mrf.mxu0
        %v4276 = vpop.f32.mrf.mxu0
        %v4277 = vadd.f32 0.0, %v4276
        %v4278 = vpop.f32.mrf.mxu0
        %4279 = vmatprep.mubr.bf16.mxu0 0
        %4280 = vmatmul.mubr.bf16.gmra.mxu0 %v4160
        %v4281 = vpop.f32.mrf.mxu0
        %v4282 = vadd.f32 0.0, %v4281
        %v4283 = vpop.f32.mrf.mxu0
        %v4284 = vpop.f32.mrf.mxu0
        %v4285 = vadd.f32 0.0, %v4284
        %v4286 = vpop.f32.mrf.mxu0
        %4287 = vmatprep.mubr.bf16.mxu0 0
        %4288 = vmatmul.mubr.bf16.gmra.mxu0 %v4163
        %v4289 = vpop.f32.mrf.mxu0
        %v4290 = vadd.f32 0.0, %v4289
        %v4291 = vpop.f32.mrf.mxu0
        %v4292 = vpop.f32.mrf.mxu0
        %v4293 = vadd.f32 0.0, %v4292
        %v4294 = vpop.f32.mrf.mxu0
        %4295 = vmatprep.mubr.bf16.mxu0 0
        %4296 = vmatmul.mubr.bf16.gmra.mxu0 %v4166
        %v4297 = vpop.f32.mrf.mxu0
        %v4298 = vadd.f32 0.0, %v4297
        %v4299 = vpop.f32.mrf.mxu0
        %v4300 = vpop.f32.mrf.mxu0
        %v4301 = vadd.f32 0.0, %v4300
        %v4302 = vpop.f32.mrf.mxu0
        %4303 = vmatprep.mubr.bf16.mxu0 0
        %4304 = vmatmul.mubr.bf16.gmra.mxu0 %v4169
        %v4305 = vpop.f32.mrf.mxu0
        %v4306 = vadd.f32 0.0, %v4305
        %v4307 = vpop.f32.mrf.mxu0
        %v4308 = vpop.f32.mrf.mxu0
        %v4309 = vadd.f32 0.0, %v4308
        %v4310 = vpop.f32.mrf.mxu0
        %4311 = vmatprep.mubr.bf16.mxu0 0
        %4312 = vmatmul.mubr.bf16.gmra.mxu0 %v4172
        %v4313 = vpop.f32.mrf.mxu0
        %v4314 = vadd.f32 0.0, %v4313
        %v4315 = vpop.f32.mrf.mxu0
        %v4316 = vpop.f32.mrf.mxu0
        %v4317 = vadd.f32 0.0, %v4316
        %v4318 = vpop.f32.mrf.mxu0
        %4319 = vmatprep.mubr.bf16.mxu0 0
        %4320 = vmatmul.mubr.bf16.gmra.mxu0 %v4175
        %v4321 = vpop.f32.mrf.mxu0
        %v4322 = vadd.f32 0.0, %v4321
        %v4323 = vpop.f32.mrf.mxu0
        %v4324 = vpop.f32.mrf.mxu0
        %v4325 = vadd.f32 0.0, %v4324
        %v4326 = vpop.f32.mrf.mxu0
        %4327 = vmatprep.mubr.bf16.mxu0 0
        %4328 = vmatmul.mubr.bf16.gmra.mxu0 %v4178
        %v4329 = vpop.f32.mrf.mxu0
        %v4330 = vadd.f32 0.0, %v4329
        %v4331 = vpop.f32.mrf.mxu0
        %v4332 = vpop.f32.mrf.mxu0
        %v4333 = vadd.f32 0.0, %v4332
        %v4334 = vpop.f32.mrf.mxu0
        %4335 = vmatprep.mubr.bf16.mxu0 0
        %4336 = vmatmul.mubr.bf16.gmra.mxu0 %v4181
        %v4337 = vpop.f32.mrf.mxu0
        %v4338 = vadd.f32 0.0, %v4337
        %v4339 = vpop.f32.mrf.mxu0
        %v4340 = vpop.f32.mrf.mxu0
        %v4341 = vadd.f32 0.0, %v4340
        %v4342 = vpop.f32.mrf.mxu0
        %4343 = vdwg.mxu0
        %v4344 = vadd.f32 %v3614, %v4218
        %v4345 = vadd.f32 %v3615, %v4221
        %v4346 = vadd.f32 %v3616, %v4226
        %v4347 = vadd.f32 %v3617, %v4229
        %v4348 = vadd.f32 %v3618, %v4234
        %v4349 = vadd.f32 %v3619, %v4237
        %v4350 = vadd.f32 %v3620, %v4242
        %v4351 = vadd.f32 %v3621, %v4245
        %v4352 = vadd.f32 %v3622, %v4250
        %v4353 = vadd.f32 %v3623, %v4253
        %v4354 = vadd.f32 %v3624, %v4258
        %v4355 = vadd.f32 %v3625, %v4261
        %v4356 = vadd.f32 %v3626, %v4266
        %v4357 = vadd.f32 %v3627, %v4269
        %v4358 = vadd.f32 %v3628, %v4274
        %v4359 = vadd.f32 %v3629, %v4277
        %v4360 = vadd.f32 %v3630, %v4282
        %v4361 = vadd.f32 %v3631, %v4285
        %v4362 = vadd.f32 %v3632, %v4290
        %v4363 = vadd.f32 %v3633, %v4293
        %v4364 = vadd.f32 %v3634, %v4298
        %v4365 = vadd.f32 %v3635, %v4301
        %v4366 = vadd.f32 %v3636, %v4306
        %v4367 = vadd.f32 %v3637, %v4309
        %v4368 = vadd.f32 %v3638, %v4314
        %v4369 = vadd.f32 %v3639, %v4317
        %v4370 = vadd.f32 %v3640, %v4322
        %v4371 = vadd.f32 %v3641, %v4325
        %v4372 = vadd.f32 %v3642, %v4330
        %v4373 = vadd.f32 %v3643, %v4333
        %v4374 = vadd.f32 %v3644, %v4338
        %v4375 = vadd.f32 %v3645, %v4341
        %v4376 = vld [vmem:[%s3283] sm:$0xe]
        %v4377 = vld [vmem:[%s3283 + $0xc] sm:$0xe]
        %v4378 = vld [vmem:[%s3283 + $0x18] sm:$0xe]
        %v4379 = vld [vmem:[%s3283 + $0x24] sm:$0xe]
        %v4380 = vld [vmem:[%s3283 + $0x30] sm:$0xe]
        %v4381 = vld [vmem:[%s3283 + $0x3c] sm:$0xe]
        %v4382 = vld [vmem:[%s3283 + $0x48] sm:$0xe]
        %v4383 = vld [vmem:[%s3283 + $0x54] sm:$0xe]
        %v4384 = vld [vmem:[%s3283 + $0x60] sm:$0xe]
        %v4385 = vld [vmem:[%s3283 + $0x6c] sm:$0xe]
        %v4386 = vld [vmem:[%s3283 + $0x78] sm:$0xe]
        %v4387 = vld [vmem:[%s3283 + $0x84] sm:$0xe]
        %v4388 = vld [vmem:[%s3283 + $0x90] sm:$0xe]
        %v4389 = vld [vmem:[%s3283 + $0x9c] sm:$0xe]
        %v4390 = vld [vmem:[%s3283 + $0xa8] sm:$0xe]
        %v4391 = vld [vmem:[%s3283 + $0xb4] sm:$0xe]
        %v4440 = vrot.slane %v4376, 5
        %v4441 = vrot.slane %v4440, 4
        %v4442 = vrot.slane %v3647, 5
        %v4443 = vsel %vm1305, %v4441, %v4442
        %v4444 = vrot.slane %v4442, 4
        %v4445 = vrot.slane %v3648, 5
        %v4446 = vsel %vm1305, %v4444, %v4445
        %v4447 = vrot.slane %v4377, 5
        %v4448 = vrot.slane %v4447, 4
        %v4449 = vrot.slane %v3650, 5
        %v4450 = vsel %vm1305, %v4448, %v4449
        %v4451 = vrot.slane %v4449, 4
        %v4452 = vrot.slane %v3651, 5
        %v4453 = vsel %vm1305, %v4451, %v4452
        %v4454 = vrot.slane %v4378, 5
        %v4455 = vrot.slane %v4454, 4
        %v4456 = vrot.slane %v3653, 5
        %v4457 = vsel %vm1305, %v4455, %v4456
        %v4458 = vrot.slane %v4456, 4
        %v4459 = vrot.slane %v3654, 5
        %v4460 = vsel %vm1305, %v4458, %v4459
        %v4461 = vrot.slane %v4379, 5
        %v4462 = vrot.slane %v4461, 4
        %v4463 = vrot.slane %v3656, 5
        %v4464 = vsel %vm1305, %v4462, %v4463
        %v4465 = vrot.slane %v4463, 4
        %v4466 = vrot.slane %v3657, 5
        %v4467 = vsel %vm1305, %v4465, %v4466
        %v4468 = vrot.slane %v4380, 5
        %v4469 = vrot.slane %v4468, 4
        %v4470 = vrot.slane %v3659, 5
        %v4471 = vsel %vm1305, %v4469, %v4470
        %v4472 = vrot.slane %v4470, 4
        %v4473 = vrot.slane %v3660, 5
        %v4474 = vsel %vm1305, %v4472, %v4473
        %v4475 = vrot.slane %v4381, 5
        %v4476 = vrot.slane %v4475, 4
        %v4477 = vrot.slane %v3662, 5
        %v4478 = vsel %vm1305, %v4476, %v4477
        %v4479 = vrot.slane %v4477, 4
        %v4480 = vrot.slane %v3663, 5
        %v4481 = vsel %vm1305, %v4479, %v4480
        %v4482 = vrot.slane %v4382, 5
        %v4483 = vrot.slane %v4482, 4
        %v4484 = vrot.slane %v3665, 5
        %v4485 = vsel %vm1305, %v4483, %v4484
        %v4486 = vrot.slane %v4484, 4
        %v4487 = vrot.slane %v3666, 5
        %v4488 = vsel %vm1305, %v4486, %v4487
        %v4489 = vrot.slane %v4383, 5
        %v4490 = vrot.slane %v4489, 4
        %v4491 = vrot.slane %v3668, 5
        %v4492 = vsel %vm1305, %v4490, %v4491
        %v4493 = vrot.slane %v4491, 4
        %v4494 = vrot.slane %v3669, 5
        %v4495 = vsel %vm1305, %v4493, %v4494
        %v4496 = vrot.slane %v4384, 5
        %v4497 = vrot.slane %v4496, 4
        %v4498 = vrot.slane %v3671, 5
        %v4499 = vsel %vm1305, %v4497, %v4498
        %v4500 = vrot.slane %v4498, 4
        %v4501 = vrot.slane %v3672, 5
        %v4502 = vsel %vm1305, %v4500, %v4501
        %v4503 = vrot.slane %v4385, 5
        %v4504 = vrot.slane %v4503, 4
        %v4505 = vrot.slane %v3674, 5
        %v4506 = vsel %vm1305, %v4504, %v4505
        %v4507 = vrot.slane %v4505, 4
        %v4508 = vrot.slane %v3675, 5
        %v4509 = vsel %vm1305, %v4507, %v4508
        %v4510 = vrot.slane %v4386, 5
        %v4511 = vrot.slane %v4510, 4
        %v4512 = vrot.slane %v3677, 5
        %v4513 = vsel %vm1305, %v4511, %v4512
        %v4514 = vrot.slane %v4512, 4
        %v4515 = vrot.slane %v3678, 5
        %v4516 = vsel %vm1305, %v4514, %v4515
        %v4517 = vrot.slane %v4387, 5
        %v4518 = vrot.slane %v4517, 4
        %v4519 = vrot.slane %v3680, 5
        %v4520 = vsel %vm1305, %v4518, %v4519
        %v4521 = vrot.slane %v4519, 4
        %v4522 = vrot.slane %v3681, 5
        %v4523 = vsel %vm1305, %v4521, %v4522
        %v4524 = vrot.slane %v4388, 5
        %v4525 = vrot.slane %v4524, 4
        %v4526 = vrot.slane %v3683, 5
        %v4527 = vsel %vm1305, %v4525, %v4526
        %v4528 = vrot.slane %v4526, 4
        %v4529 = vrot.slane %v3684, 5
        %v4530 = vsel %vm1305, %v4528, %v4529
        %v4531 = vrot.slane %v4389, 5
        %v4532 = vrot.slane %v4531, 4
        %v4533 = vrot.slane %v3686, 5
        %v4534 = vsel %vm1305, %v4532, %v4533
        %v4535 = vrot.slane %v4533, 4
        %v4536 = vrot.slane %v3687, 5
        %v4537 = vsel %vm1305, %v4535, %v4536
        %v4538 = vrot.slane %v4390, 5
        %v4539 = vrot.slane %v4538, 4
        %v4540 = vrot.slane %v3689, 5
        %v4541 = vsel %vm1305, %v4539, %v4540
        %v4542 = vrot.slane %v4540, 4
        %v4543 = vrot.slane %v3690, 5
        %v4544 = vsel %vm1305, %v4542, %v4543
        %v4545 = vrot.slane %v4391, 5
        %v4546 = vrot.slane %v4545, 4
        %v4547 = vrot.slane %v3692, 5
        %v4548 = vsel %vm1305, %v4546, %v4547
        %v4549 = vrot.slane %v4547, 4
        %v4550 = vrot.slane %v3693, 5
        %v4551 = vsel %vm1305, %v4549, %v4550
        %s4552 = scalar_lea.vmem %s248, 64
        %v4553 = vld [vmem:[%s4552] sm:$0xf]
        %v4554 = vld [vmem:[%s4552 + $0x4] sm:$0xf]
        %v4555 = vunpack.c.l.b16 %v4443
        %v4556 = vunpack.c.l.b16 %v4446
        %v4557 = vunpack.c.l.b16 %v4450
        %v4558 = vunpack.c.l.b16 %v4453
        %v4559 = vunpack.c.l.b16 %v4457
        %v4560 = vunpack.c.l.b16 %v4460
        %v4561 = vunpack.c.l.b16 %v4464
        %v4562 = vunpack.c.l.b16 %v4467
        %v4563 = vunpack.c.l.b16 %v4471
        %v4564 = vunpack.c.l.b16 %v4474
        %v4565 = vunpack.c.l.b16 %v4478
        %v4566 = vunpack.c.l.b16 %v4481
        %v4567 = vunpack.c.l.b16 %v4485
        %v4568 = vunpack.c.l.b16 %v4488
        %v4569 = vunpack.c.l.b16 %v4492
        %v4570 = vunpack.c.l.b16 %v4495
        %v4571 = vunpack.c.l.b16 %v4499
        %v4572 = vunpack.c.l.b16 %v4502
        %v4573 = vunpack.c.l.b16 %v4506
        %v4574 = vunpack.c.l.b16 %v4509
        %v4575 = vunpack.c.l.b16 %v4513
        %v4576 = vunpack.c.l.b16 %v4516
        %v4577 = vunpack.c.l.b16 %v4520
        %v4578 = vunpack.c.l.b16 %v4523
        %v4579 = vunpack.c.l.b16 %v4527
        %v4580 = vunpack.c.l.b16 %v4530
        %v4581 = vunpack.c.l.b16 %v4534
        %v4582 = vunpack.c.l.b16 %v4537
        %v4583 = vunpack.c.l.b16 %v4541
        %v4584 = vunpack.c.l.b16 %v4544
        %v4585 = vunpack.c.l.b16 %v4548
        %v4586 = vunpack.c.l.b16 %v4551
        %v4587 = vpack.c.b16 %v4556, %v4555
        %v4588 = vpack.c.b16 %v4558, %v4557
        %v4589 = vpack.c.b16 %v4560, %v4559
        %v4590 = vpack.c.b16 %v4562, %v4561
        %v4591 = vpack.c.b16 %v4564, %v4563
        %v4592 = vpack.c.b16 %v4566, %v4565
        %v4593 = vpack.c.b16 %v4568, %v4567
        %v4594 = vpack.c.b16 %v4570, %v4569
        %v4595 = vpack.c.b16 %v4572, %v4571
        %v4596 = vpack.c.b16 %v4574, %v4573
        %v4597 = vpack.c.b16 %v4576, %v4575
        %v4598 = vpack.c.b16 %v4578, %v4577
        %v4599 = vpack.c.b16 %v4580, %v4579
        %v4600 = vpack.c.b16 %v4582, %v4581
        %v4601 = vpack.c.b16 %v4584, %v4583
        %v4602 = vpack.c.b16 %v4586, %v4585
        %v4605 = vunpack.c.l.b16 %v4553
        %v4606 = vunpack.c.l.b16 %v4554
        %v4607 = vpack.c.b16 %v4606, %v4605
        %v4610 = vsel %vm750, %v4587, 0
        %v4613 = vsel %vm750, %v4588, 0
        %v4616 = vsel %vm750, %v4589, 0
        %v4619 = vsel %vm750, %v4590, 0
        %v4622 = vsel %vm750, %v4591, 0
        %v4625 = vsel %vm750, %v4592, 0
        %v4628 = vsel %vm750, %v4593, 0
        %v4631 = vsel %vm750, %v4594, 0
        %v4634 = vsel %vm750, %v4595, 0
        %v4637 = vsel %vm750, %v4596, 0
        %v4640 = vsel %vm750, %v4597, 0
        %v4643 = vsel %vm750, %v4598, 0
        %v4646 = vsel %vm750, %v4599, 0
        %v4649 = vsel %vm750, %v4600, 0
        %v4652 = vsel %vm750, %v4601, 0
        %v4655 = vsel %vm750, %v4602, 0
        %4657 = vmatprep.subr.bf16.mxu0 0
        %4658 = vmatpush1.bf16.msra.mxu0 0
        %4659 = vmatprep.subr.bf16.mxu0 0
        %4660 = vmatpush1.bf16.msra.mxu0 0
        %4661 = vmatprep.subr.bf16.mxu0 0
        %4662 = vmatpush1.bf16.msra.mxu0 0
        %4663 = vmatprep.subr.bf16.mxu0 0
        %4664 = vmatpush1.bf16.msra.mxu0 0
        %4665 = vmatprep.subr.bf16.mxu0 0
        %4666 = vmatpush1.bf16.msra.mxu0 0
        %4667 = vmatprep.subr.bf16.mxu0 0
        %4668 = vmatpush1.bf16.msra.mxu0 0
        %4669 = vmatprep.subr.bf16.mxu0 0
        %4670 = vmatpush1.bf16.msra.mxu0 0
        %4671 = vmatprep.subr.bf16.mxu0 0
        %4672 = vmatpush1.bf16.msra.mxu0 %v4607
        %4673 = vmatprep.subr.bf16.mxu0 0
        %4674 = vmatpush2.bf16.msra.mxu0 0
        %4675 = vmatprep.subr.bf16.mxu0 0
        %4676 = vmatpush2.bf16.msra.mxu0 0
        %4677 = vmatprep.subr.bf16.mxu0 0
        %4678 = vmatpush2.bf16.msra.mxu0 0
        %4679 = vmatprep.subr.bf16.mxu0 0
        %4680 = vmatpush2.bf16.msra.mxu0 0
        %4681 = vmatprep.subr.bf16.mxu0 0
        %4682 = vmatpush2.bf16.msra.mxu0 0
        %4683 = vmatprep.subr.bf16.mxu0 0
        %4684 = vmatpush2.bf16.msra.mxu0 0
        %4685 = vmatprep.subr.bf16.mxu0 0
        %4686 = vmatpush2.bf16.msra.mxu0 0
        %4687 = vmatprep.subr.bf16.mxu0 0
        %4688 = vmatpush2.bf16.msra.mxu0 0
        %4689 = vmatprep.mubr.bf16.mxu0 0
        %4690 = vmatmul.mubr.bf16.gmra.mxu0 %v4610
        %v4691 = vpop.f32.mrf.mxu0
        %v4692 = vadd.f32 0.0, %v4691
        %v4693 = vpop.f32.mrf.mxu0
        %v4694 = vpop.f32.mrf.mxu0
        %v4695 = vadd.f32 0.0, %v4694
        %v4696 = vpop.f32.mrf.mxu0
        %4697 = vmatprep.mubr.bf16.mxu0 0
        %4698 = vmatmul.mubr.bf16.gmra.mxu0 %v4613
        %v4699 = vpop.f32.mrf.mxu0
        %v4700 = vadd.f32 0.0, %v4699
        %v4701 = vpop.f32.mrf.mxu0
        %v4702 = vpop.f32.mrf.mxu0
        %v4703 = vadd.f32 0.0, %v4702
        %v4704 = vpop.f32.mrf.mxu0
        %4705 = vmatprep.mubr.bf16.mxu0 0
        %4706 = vmatmul.mubr.bf16.gmra.mxu0 %v4616
        %v4707 = vpop.f32.mrf.mxu0
        %v4708 = vadd.f32 0.0, %v4707
        %v4709 = vpop.f32.mrf.mxu0
        %v4710 = vpop.f32.mrf.mxu0
        %v4711 = vadd.f32 0.0, %v4710
        %v4712 = vpop.f32.mrf.mxu0
        %4713 = vmatprep.mubr.bf16.mxu0 0
        %4714 = vmatmul.mubr.bf16.gmra.mxu0 %v4619
        %v4715 = vpop.f32.mrf.mxu0
        %v4716 = vadd.f32 0.0, %v4715
        %v4717 = vpop.f32.mrf.mxu0
        %v4718 = vpop.f32.mrf.mxu0
        %v4719 = vadd.f32 0.0, %v4718
        %v4720 = vpop.f32.mrf.mxu0
        %4721 = vmatprep.mubr.bf16.mxu0 0
        %4722 = vmatmul.mubr.bf16.gmra.mxu0 %v4622
        %v4723 = vpop.f32.mrf.mxu0
        %v4724 = vadd.f32 0.0, %v4723
        %v4725 = vpop.f32.mrf.mxu0
        %v4726 = vpop.f32.mrf.mxu0
        %v4727 = vadd.f32 0.0, %v4726
        %v4728 = vpop.f32.mrf.mxu0
        %4729 = vmatprep.mubr.bf16.mxu0 0
        %4730 = vmatmul.mubr.bf16.gmra.mxu0 %v4625
        %v4731 = vpop.f32.mrf.mxu0
        %v4732 = vadd.f32 0.0, %v4731
        %v4733 = vpop.f32.mrf.mxu0
        %v4734 = vpop.f32.mrf.mxu0
        %v4735 = vadd.f32 0.0, %v4734
        %v4736 = vpop.f32.mrf.mxu0
        %4737 = vmatprep.mubr.bf16.mxu0 0
        %4738 = vmatmul.mubr.bf16.gmra.mxu0 %v4628
        %v4739 = vpop.f32.mrf.mxu0
        %v4740 = vadd.f32 0.0, %v4739
        %v4741 = vpop.f32.mrf.mxu0
        %v4742 = vpop.f32.mrf.mxu0
        %v4743 = vadd.f32 0.0, %v4742
        %v4744 = vpop.f32.mrf.mxu0
        %4745 = vmatprep.mubr.bf16.mxu0 0
        %4746 = vmatmul.mubr.bf16.gmra.mxu0 %v4631
        %v4747 = vpop.f32.mrf.mxu0
        %v4748 = vadd.f32 0.0, %v4747
        %v4749 = vpop.f32.mrf.mxu0
        %v4750 = vpop.f32.mrf.mxu0
        %v4751 = vadd.f32 0.0, %v4750
        %v4752 = vpop.f32.mrf.mxu0
        %4753 = vmatprep.mubr.bf16.mxu0 0
        %4754 = vmatmul.mubr.bf16.gmra.mxu0 %v4634
        %v4755 = vpop.f32.mrf.mxu0
        %v4756 = vadd.f32 0.0, %v4755
        %v4757 = vpop.f32.mrf.mxu0
        %v4758 = vpop.f32.mrf.mxu0
        %v4759 = vadd.f32 0.0, %v4758
        %v4760 = vpop.f32.mrf.mxu0
        %4761 = vmatprep.mubr.bf16.mxu0 0
        %4762 = vmatmul.mubr.bf16.gmra.mxu0 %v4637
        %v4763 = vpop.f32.mrf.mxu0
        %v4764 = vadd.f32 0.0, %v4763
        %v4765 = vpop.f32.mrf.mxu0
        %v4766 = vpop.f32.mrf.mxu0
        %v4767 = vadd.f32 0.0, %v4766
        %v4768 = vpop.f32.mrf.mxu0
        %4769 = vmatprep.mubr.bf16.mxu0 0
        %4770 = vmatmul.mubr.bf16.gmra.mxu0 %v4640
        %v4771 = vpop.f32.mrf.mxu0
        %v4772 = vadd.f32 0.0, %v4771
        %v4773 = vpop.f32.mrf.mxu0
        %v4774 = vpop.f32.mrf.mxu0
        %v4775 = vadd.f32 0.0, %v4774
        %v4776 = vpop.f32.mrf.mxu0
        %4777 = vmatprep.mubr.bf16.mxu0 0
        %4778 = vmatmul.mubr.bf16.gmra.mxu0 %v4643
        %v4779 = vpop.f32.mrf.mxu0
        %v4780 = vadd.f32 0.0, %v4779
        %v4781 = vpop.f32.mrf.mxu0
        %v4782 = vpop.f32.mrf.mxu0
        %v4783 = vadd.f32 0.0, %v4782
        %v4784 = vpop.f32.mrf.mxu0
        %4785 = vmatprep.mubr.bf16.mxu0 0
        %4786 = vmatmul.mubr.bf16.gmra.mxu0 %v4646
        %v4787 = vpop.f32.mrf.mxu0
        %v4788 = vadd.f32 0.0, %v4787
        %v4789 = vpop.f32.mrf.mxu0
        %v4790 = vpop.f32.mrf.mxu0
        %v4791 = vadd.f32 0.0, %v4790
        %v4792 = vpop.f32.mrf.mxu0
        %4793 = vmatprep.mubr.bf16.mxu0 0
        %4794 = vmatmul.mubr.bf16.gmra.mxu0 %v4649
        %v4795 = vpop.f32.mrf.mxu0
        %v4796 = vadd.f32 0.0, %v4795
        %v4797 = vpop.f32.mrf.mxu0
        %v4798 = vpop.f32.mrf.mxu0
        %v4799 = vadd.f32 0.0, %v4798
        %v4800 = vpop.f32.mrf.mxu0
        %4801 = vmatprep.mubr.bf16.mxu0 0
        %4802 = vmatmul.mubr.bf16.gmra.mxu0 %v4652
        %v4803 = vpop.f32.mrf.mxu0
        %v4804 = vadd.f32 0.0, %v4803
        %v4805 = vpop.f32.mrf.mxu0
        %v4806 = vpop.f32.mrf.mxu0
        %v4807 = vadd.f32 0.0, %v4806
        %v4808 = vpop.f32.mrf.mxu0
        %4809 = vmatprep.mubr.bf16.mxu0 0
        %4810 = vmatmul.mubr.bf16.gmra.mxu0 %v4655
        %v4811 = vpop.f32.mrf.mxu0
        %v4812 = vadd.f32 0.0, %v4811
        %v4813 = vpop.f32.mrf.mxu0
        %v4814 = vpop.f32.mrf.mxu0
        %v4815 = vadd.f32 0.0, %v4814
        %v4816 = vpop.f32.mrf.mxu0
        %4817 = vdwg.mxu0
        %v4818 = vadd.f32 %v4344, %v4692
        %v4819 = vadd.f32 %v4345, %v4695
        %v4820 = vadd.f32 %v4346, %v4700
        %v4821 = vadd.f32 %v4347, %v4703
        %v4822 = vadd.f32 %v4348, %v4708
        %v4823 = vadd.f32 %v4349, %v4711
        %v4824 = vadd.f32 %v4350, %v4716
        %v4825 = vadd.f32 %v4351, %v4719
        %v4826 = vadd.f32 %v4352, %v4724
        %v4827 = vadd.f32 %v4353, %v4727
        %v4828 = vadd.f32 %v4354, %v4732
        %v4829 = vadd.f32 %v4355, %v4735
        %v4830 = vadd.f32 %v4356, %v4740
        %v4831 = vadd.f32 %v4357, %v4743
        %v4832 = vadd.f32 %v4358, %v4748
        %v4833 = vadd.f32 %v4359, %v4751
        %v4834 = vadd.f32 %v4360, %v4756
        %v4835 = vadd.f32 %v4361, %v4759
        %v4836 = vadd.f32 %v4362, %v4764
        %v4837 = vadd.f32 %v4363, %v4767
        %v4838 = vadd.f32 %v4364, %v4772
        %v4839 = vadd.f32 %v4365, %v4775
        %v4840 = vadd.f32 %v4366, %v4780
        %v4841 = vadd.f32 %v4367, %v4783
        %v4842 = vadd.f32 %v4368, %v4788
        %v4843 = vadd.f32 %v4369, %v4791
        %v4844 = vadd.f32 %v4370, %v4796
        %v4845 = vadd.f32 %v4371, %v4799
        %v4846 = vadd.f32 %v4372, %v4804
        %v4847 = vadd.f32 %v4373, %v4807
        %v4848 = vadd.f32 %v4374, %v4812
        %v4849 = vadd.f32 %v4375, %v4815
        %v4850 = vld [vmem:[%s251] sm:$0x1]
        %v4852 = vlaneseq
        %v4853 = vshrl.u32 %v4852, 7
        %v4854 = vsub.s32 0, %v4853
        %v4855 = vrot.slane %v4850, %v4854
        %v4857 = vmul.f32 %v4818, %v4855
        %v4858 = vmul.f32 %v4819, %v4855
        %v4859 = vmul.f32 %v4820, %v4855
        %v4860 = vmul.f32 %v4821, %v4855
        %v4861 = vmul.f32 %v4822, %v4855
        %v4862 = vmul.f32 %v4823, %v4855
        %v4863 = vmul.f32 %v4824, %v4855
        %v4864 = vmul.f32 %v4825, %v4855
        %v4865 = vmul.f32 %v4826, %v4855
        %v4866 = vmul.f32 %v4827, %v4855
        %v4867 = vmul.f32 %v4828, %v4855
        %v4868 = vmul.f32 %v4829, %v4855
        %v4869 = vmul.f32 %v4830, %v4855
        %v4870 = vmul.f32 %v4831, %v4855
        %v4871 = vmul.f32 %v4832, %v4855
        %v4872 = vmul.f32 %v4833, %v4855
        %v4873 = vmul.f32 %v4834, %v4855
        %v4874 = vmul.f32 %v4835, %v4855
        %v4875 = vmul.f32 %v4836, %v4855
        %v4876 = vmul.f32 %v4837, %v4855
        %v4877 = vmul.f32 %v4838, %v4855
        %v4878 = vmul.f32 %v4839, %v4855
        %v4879 = vmul.f32 %v4840, %v4855
        %v4880 = vmul.f32 %v4841, %v4855
        %v4881 = vmul.f32 %v4842, %v4855
        %v4882 = vmul.f32 %v4843, %v4855
        %v4883 = vmul.f32 %v4844, %v4855
        %v4884 = vmul.f32 %v4845, %v4855
        %v4885 = vmul.f32 %v4846, %v4855
        %v4886 = vmul.f32 %v4847, %v4855
        %v4887 = vmul.f32 %v4848, %v4855
        %v4888 = vmul.f32 %v4849, %v4855
        %v4889 = vld [vmem:[%s254] sm:$0x1]
        %v4891 = vlaneseq
        %v4892 = vshrl.u32 %v4891, 7
        %v4893 = vsub.s32 0, %v4892
        %v4894 = vrot.slane %v4889, %v4893
        %v4896 = vadd.f32 %v4857, %v4894
        %v4897 = vadd.f32 %v4858, %v4894
        %v4898 = vadd.f32 %v4859, %v4894
        %v4899 = vadd.f32 %v4860, %v4894
        %v4900 = vadd.f32 %v4861, %v4894
        %v4901 = vadd.f32 %v4862, %v4894
        %v4902 = vadd.f32 %v4863, %v4894
        %v4903 = vadd.f32 %v4864, %v4894
        %v4904 = vadd.f32 %v4865, %v4894
        %v4905 = vadd.f32 %v4866, %v4894
        %v4906 = vadd.f32 %v4867, %v4894
        %v4907 = vadd.f32 %v4868, %v4894
        %v4908 = vadd.f32 %v4869, %v4894
        %v4909 = vadd.f32 %v4870, %v4894
        %v4910 = vadd.f32 %v4871, %v4894
        %v4911 = vadd.f32 %v4872, %v4894
        %v4912 = vadd.f32 %v4873, %v4894
        %v4913 = vadd.f32 %v4874, %v4894
        %v4914 = vadd.f32 %v4875, %v4894
        %v4915 = vadd.f32 %v4876, %v4894
        %v4916 = vadd.f32 %v4877, %v4894
        %v4917 = vadd.f32 %v4878, %v4894
        %v4918 = vadd.f32 %v4879, %v4894
        %v4919 = vadd.f32 %v4880, %v4894
        %v4920 = vadd.f32 %v4881, %v4894
        %v4921 = vadd.f32 %v4882, %v4894
        %v4922 = vadd.f32 %v4883, %v4894
        %v4923 = vadd.f32 %v4884, %v4894
        %v4924 = vadd.f32 %v4885, %v4894
        %v4925 = vadd.f32 %v4886, %v4894
        %v4926 = vadd.f32 %v4887, %v4894
        %v4927 = vadd.f32 %v4888, %v4894
        %v4928 = vmax.f32 %v4896, 0.0
        %v4929 = vmax.f32 %v4897, 0.0
        %v4930 = vmax.f32 %v4898, 0.0
        %v4931 = vmax.f32 %v4899, 0.0
        %v4932 = vmax.f32 %v4900, 0.0
        %v4933 = vmax.f32 %v4901, 0.0
        %v4934 = vmax.f32 %v4902, 0.0
        %v4935 = vmax.f32 %v4903, 0.0
        %v4936 = vmax.f32 %v4904, 0.0
        %v4937 = vmax.f32 %v4905, 0.0
        %v4938 = vmax.f32 %v4906, 0.0
        %v4939 = vmax.f32 %v4907, 0.0
        %v4940 = vmax.f32 %v4908, 0.0
        %v4941 = vmax.f32 %v4909, 0.0
        %v4942 = vmax.f32 %v4910, 0.0
        %v4943 = vmax.f32 %v4911, 0.0
        %v4944 = vmax.f32 %v4912, 0.0
        %v4945 = vmax.f32 %v4913, 0.0
        %v4946 = vmax.f32 %v4914, 0.0
        %v4947 = vmax.f32 %v4915, 0.0
        %v4948 = vmax.f32 %v4916, 0.0
        %v4949 = vmax.f32 %v4917, 0.0
        %v4950 = vmax.f32 %v4918, 0.0
        %v4951 = vmax.f32 %v4919, 0.0
        %v4952 = vmax.f32 %v4920, 0.0
        %v4953 = vmax.f32 %v4921, 0.0
        %v4954 = vmax.f32 %v4922, 0.0
        %v4955 = vmax.f32 %v4923, 0.0
        %v4956 = vmax.f32 %v4924, 0.0
        %v4957 = vmax.f32 %v4925, 0.0
        %v4958 = vmax.f32 %v4926, 0.0
        %v4959 = vmax.f32 %v4927, 0.0
        %4960 = vst [vmem:[%s239] sm:$0xff] %v4928
        %4961 = vst [vmem:[%s239 + $0x8] sm:$0xff] %v4929
        %4962 = vst [vmem:[%s239 + $0x10] sm:$0xff] %v4930
        %4963 = vst [vmem:[%s239 + $0x18] sm:$0xff] %v4931
        %4964 = vst [vmem:[%s239 + $0x20] sm:$0xff] %v4932
        %4965 = vst [vmem:[%s239 + $0x28] sm:$0xff] %v4933
        %4966 = vst [vmem:[%s239 + $0x30] sm:$0xff] %v4934
        %4967 = vst [vmem:[%s239 + $0x38] sm:$0xff] %v4935
        %4968 = vst [vmem:[%s239 + $0x40] sm:$0xff] %v4936
        %4969 = vst [vmem:[%s239 + $0x48] sm:$0xff] %v4937
        %4970 = vst [vmem:[%s239 + $0x50] sm:$0xff] %v4938
        %4971 = vst [vmem:[%s239 + $0x58] sm:$0xff] %v4939
        %4972 = vst [vmem:[%s239 + $0x60] sm:$0xff] %v4940
        %4973 = vst [vmem:[%s239 + $0x68] sm:$0xff] %v4941
        %4974 = vst [vmem:[%s239 + $0x70] sm:$0xff] %v4942
        %4975 = vst [vmem:[%s239 + $0x78] sm:$0xff] %v4943
        %4976 = vst [vmem:[%s239 + $0x80] sm:$0xff] %v4944
        %4977 = vst [vmem:[%s239 + $0x88] sm:$0xff] %v4945
        %4978 = vst [vmem:[%s239 + $0x90] sm:$0xff] %v4946
        %4979 = vst [vmem:[%s239 + $0x98] sm:$0xff] %v4947
        %4980 = vst [vmem:[%s239 + $0xa0] sm:$0xff] %v4948
        %4981 = vst [vmem:[%s239 + $0xa8] sm:$0xff] %v4949
        %4982 = vst [vmem:[%s239 + $0xb0] sm:$0xff] %v4950
        %4983 = vst [vmem:[%s239 + $0xb8] sm:$0xff] %v4951
        %4984 = vst [vmem:[%s239 + $0xc0] sm:$0xff] %v4952
        %4985 = vst [vmem:[%s239 + $0xc8] sm:$0xff] %v4953
        %4986 = vst [vmem:[%s239 + $0xd0] sm:$0xff] %v4954
        %4987 = vst [vmem:[%s239 + $0xd8] sm:$0xff] %v4955
        %4988 = vst [vmem:[%s239 + $0xe0] sm:$0xff] %v4956
        %4989 = vst [vmem:[%s239 + $0xe8] sm:$0xff] %v4957
        %4990 = vst [vmem:[%s239 + $0xf0] sm:$0xff] %v4958
        %4991 = vst [vmem:[%s239 + $0xf8] sm:$0xff] %v4959
        %s4992 = sand.u32 %s144, 1
        %s4993 = scalar_lea.sflag [#allocation3], %s4992
        %s4994 = sand.u32 %s144, 1
        %s4995 = smul.addr %s4994, 256
        %s4996 = scalar_lea.vmem [#allocation2], %s4995
        // Predicated region
        $region37: #{convbnact_forward.1} parent=35 // pred_check
          %p4997 = pneg %p154
        $region38: #{convbnact_forward.1} parent=35 // pred_check_branch
          %4999 = sbr.rel (%p4997) target = $region40
        $region39: #{convbnact_forward.1} parent=35 // pred_region
          %s5001 = ssub.s32 4096, 4096
          %5002 = vsyncadd %s4993, %s5001
          %s5003 = smul.addr %s22, 32
          %s5004 = sadd.s32 %s23, %s5003
          %s5005 = smul.addr %s5004, 128
          %s5006 = scalar_lea.hbm %s4, %s5005
          %s5007 = sshll.u32 %s4996, 4
          %s5008 = int_to_ptr.vmem [resolvable:$true] %s5007
          %5013 = dma.vmem_to_hbm [thread:$0]  %s5008, 4096, %s5006, %s4993, 128, 128, 8
        $region40: #{convbnact_forward.1} parent=35 // pred_fallthru
          _
      $region36: #{convbnact_forward.1} parent=5 // pred_fallthru
        _
      %p5014 = scmp.le.s32.totalorder 2, %s13
      // Predicated region
      $region41: #{convbnact_forward.1} parent=5 // pred_check
        %p5015 = pneg %p5014
      $region42: #{convbnact_forward.1} parent=5 // pred_check_branch
        %5017 = sbr.rel (%p5015) target = $region44
      $region43: #{convbnact_forward.1} parent=5 // pred_region
        %s5018 = ssub.s32 %s13, 2
        // Predicated region
        $region45: #{convbnact_forward.1} parent=43 // pred_check
          %p5019 = pneg %p160
        $region46: #{convbnact_forward.1} parent=43 // pred_check_branch
          %5021 = sbr.rel (%p5019) target = $region48
        $region47: #{convbnact_forward.1} parent=43 // pred_region
          %s5022 = sand.u32 %s145, 1
          %s5023 = scalar_lea.sflag [#allocation3], %s5022
          %s5024 = sand.u32 %s145, 1
          %s5025 = smul.addr %s5024, 256
          %s5026 = scalar_lea.vmem [#allocation2], %s5025
          %5027 = dma.done %s5023, 4096
        $region48: #{convbnact_forward.1} parent=43 // pred_fallthru
          _
      $region44: #{convbnact_forward.1} parent=5 // pred_fallthru
        _
    $region6: #{convbnact_forward.1} parent=1 // loop_footer
      %s17 = sadd.s32 1, %s13
    $region7: #{convbnact_forward.1} parent=1 // loop_footer_branch
      %12 = sbr.rel target = $region3
    $region8: #{convbnact_forward.1} parent=1 // loop_exit
      _
    %5028 = vsyncpa [#allocation3], 1
    %s5029 = scalar_lea.sflag [#allocation3], 1
    %5030 = vsyncpa %s5029, 1

</llo_original>
